<compile_context>
chip_gen: v7x
topology: tpu7x:2x2x1
jax: 0.10.0
libtpu: 0.0.40
codegen_flags: <defaults>
</compile_context>

<pallas_src>
import math
import functools

import jax
import jax.numpy as jnp
from jax.experimental import pallas as pl
from jax.experimental.pallas import tpu as pltpu


# ----------------------------- tiling helpers -----------------------------

def _pick_tile(dim, target, align):
    """Largest `align`-multiple divisor of dim that is <= target, else full dim.
    NOTE: falls back to the full dim when no aligned divisor exists."""
    if dim <= target:
        return dim
    start = target - (target % align)
    for t in range(start, 0, -align):
        if dim % t == 0:
            return t
    return dim


# ----------------------------- generic tiled matmul (input projection) -----------------------------

def _matmul_kernel(x_ref, w_ref, o_ref, acc_ref):
    @pl.when(pl.program_id(2) == 0)
    def _():
        acc_ref[...] = jnp.zeros_like(acc_ref)
    acc_ref[...] += jnp.dot(
        x_ref[...].astype(jnp.bfloat16),
        w_ref[...].astype(jnp.bfloat16),
        preferred_element_type=jnp.float32,
    )
    @pl.when(pl.program_id(2) == pl.num_programs(2) - 1)
    def _():
        o_ref[...] = acc_ref[...].astype(o_ref.dtype)


def matmul_pallas(x, w, *, tm=256, tn=512, tk=512):
    """x: (M, K), w: (K, N) bf16 -> (M, N) f32.  bf16 MXU operands, f32 accumulate."""
    M, K = x.shape
    N = w.shape[1]
    TM = _pick_tile(M, tm, 16)     # 16-aligned sublane tiles for bf16 packing (v5e)
    TN = _pick_tile(N, tn, 128)
    TK = _pick_tile(K, tk, 128)
    return pl.pallas_call(
        _matmul_kernel,
        out_shape=jax.ShapeDtypeStruct((M, N), jnp.float32),
        grid=(M // TM, N // TN, K // TK),
        in_specs=[
            pl.BlockSpec((TM, TK), lambda i, j, k: (i, k)),
            pl.BlockSpec((TK, TN), lambda i, j, k: (k, j)),
        ],
        out_specs=pl.BlockSpec((TM, TN), lambda i, j, k: (i, j)),
        scratch_shapes=[pltpu.VMEM((TM, TN), jnp.float32)],
        compiler_params=pltpu.CompilerParams(
            dimension_semantics=("parallel", "parallel", "arbitrary")),
    )(x, w)


# ----------------------------- RoPE on full (TS, D) slabs -----------------------------

def _apply_rope_slab(x, cos, sin_a, sin_b, *, num_heads, head_dim):
    """GPT-NeoX rotate-half RoPE applied to a full (TS, D) slab (heads contiguous).

    out = x*cos + roll_left(x, Dh/2)*sin_a + roll_right(x, Dh/2)*sin_b
    where sin_a = -sin on first-half lanes of each head (0 elsewhere),
          sin_b = +sin on second-half lanes of each head (0 elsewhere),
    so cross-head wrap lanes are multiplied by 0 -> exact per-head rotation.
    """
    D = num_heads * head_dim
    half = head_dim // 2
    if D % 128 == 0:
        left = pltpu.roll(x, D - half, axis=-1)    # left[i]  = x[i + half]
        right = pltpu.roll(x, half, axis=-1)       # right[i] = x[i - half]
        return x * cos + left * sin_a + right * sin_b
    # Fallback for tiny / non-lane-aligned D (demo sizes): per-head slice + concat.
    sin = sin_b - sin_a
    parts = []
    for h in range(num_heads):
        xh = x[:, h * head_dim:(h + 1) * head_dim]
        parts.append(jnp.concatenate([-xh[:, half:], xh[:, :half]], axis=-1))
    rot = jnp.concatenate(parts, axis=-1)
    return x * cos + rot * sin


def rope_tables_full(seqlen, num_heads, head_dim, theta=10000.0):
    """Full-width (S, D) RoPE tables with sign/half masks folded into the sin tables."""
    assert head_dim % 2 == 0
    inv = 1.0 / (theta ** (jnp.arange(0, head_dim, 2, dtype=jnp.float32) / head_dim))
    ang = jnp.outer(jnp.arange(seqlen, dtype=jnp.float32), inv)          # (S, Dh//2)
    cos_h = jnp.concatenate([jnp.cos(ang), jnp.cos(ang)], axis=-1)       # (S, Dh)
    sin_h = jnp.concatenate([jnp.sin(ang), jnp.sin(ang)], axis=-1)
    first = (jnp.arange(head_dim) < (head_dim // 2))[None, :]            # (1, Dh)
    sin_a = jnp.where(first, -sin_h, 0.0)
    sin_b = jnp.where(first, 0.0, sin_h)
    tile = lambda a: jnp.tile(a, (1, num_heads))                         # (S, D)
    return tile(cos_h), tile(sin_a), tile(sin_b)


# ----------------------------- fused FiLM + QKV projection + RoPE -----------------------------
# Weight blocks have constant index -> wq/wk/wv are DMA'd once for the whole grid.

def _film_qkv_rope_kernel(x_ref, scale_ref, shift_ref, wq_ref, wk_ref, wv_ref,
                          cos_ref, sina_ref, sinb_ref,
                          q_ref, k_ref, v_ref, *, num_heads, head_dim):
    x = x_ref[...].astype(jnp.float32)                               # (TS, D)
    mean = jnp.mean(x, axis=-1, keepdims=True)
    var = jnp.mean(jnp.square(x - mean), axis=-1, keepdims=True)
    h = (x - mean) * jax.lax.rsqrt(var + 1e-5)                       # LN, no affine
    h = h * scale_ref[...] + shift_ref[...]                          # FiLM
    xf = h.astype(jnp.bfloat16)

    cos = cos_ref[...]
    sin_a = sina_ref[...]
    sin_b = sinb_ref[...]
    scale = 1.0 / math.sqrt(head_dim)

    q = jnp.dot(xf, wq_ref[...], preferred_element_type=jnp.float32) * scale
    q = _apply_rope_slab(q, cos, sin_a, sin_b, num_heads=num_heads, head_dim=head_dim)
    q_ref[...] = q.astype(q_ref.dtype)

    k = jnp.dot(xf, wk_ref[...], preferred_element_type=jnp.float32)
    k = _apply_rope_slab(k, cos, sin_a, sin_b, num_heads=num_heads, head_dim=head_dim)
    k_ref[...] = k.astype(k_ref.dtype)

    v = jnp.dot(xf, wv_ref[...], preferred_element_type=jnp.float32)
    v_ref[...] = v.astype(v_ref.dtype)


def film_qkv_rope_pallas(x, scale, shift, wq, wk, wv, cos, sin_a, sin_b, *,
                         num_heads, head_dim, ts=256):
    """q/k/v = RoPE(FiLM(LN(x)) @ W).  x: (B,S,D) f32 -> three (B,S,D) bf16."""
    B, S, D = x.shape
    TS = _pick_tile(S, ts, 16)
    kern = functools.partial(_film_qkv_rope_kernel,
                             num_heads=num_heads, head_dim=head_dim)
    out = jax.ShapeDtypeStruct((B, S, D), jnp.bfloat16)
    return pl.pallas_call(
        kern,
        out_shape=(out, out, out),
        grid=(B, S // TS),
        in_specs=[
            pl.BlockSpec((None, TS, D), lambda b, s: (b, s, 0)),
            pl.BlockSpec((None, 1, D), lambda b, s: (b, 0, 0)),
            pl.BlockSpec((None, 1, D), lambda b, s: (b, 0, 0)),
            pl.BlockSpec((D, D), lambda b, s: (0, 0)),     # resident: constant index
            pl.BlockSpec((D, D), lambda b, s: (0, 0)),
            pl.BlockSpec((D, D), lambda b, s: (0, 0)),
            pl.BlockSpec((TS, D), lambda b, s: (s, 0)),
            pl.BlockSpec((TS, D), lambda b, s: (s, 0)),
            pl.BlockSpec((TS, D), lambda b, s: (s, 0)),
        ],
        out_specs=(
            pl.BlockSpec((None, TS, D), lambda b, s: (b, s, 0)),
            pl.BlockSpec((None, TS, D), lambda b, s: (b, s, 0)),
            pl.BlockSpec((None, TS, D), lambda b, s: (b, s, 0)),
        ),
        compiler_params=pltpu.CompilerParams(
            dimension_semantics=("parallel", "parallel"),
            vmem_limit_bytes=48 * 1024 * 1024),
    )(x, scale, shift, wq, wk, wv, cos, sin_a, sin_b)


# ----------------------------- flash attention (q/kv tiled, online softmax) -----------------------------

def _flash_attn_kernel(q_ref, k_ref, v_ref, o_ref, m_ref, l_ref, acc_ref):
    ki = pl.program_id(2)

    @pl.when(ki == 0)
    def _():
        m_ref[...] = jnp.full_like(m_ref, -jnp.inf)
        l_ref[...] = jnp.zeros_like(l_ref)
        acc_ref[...] = jnp.zeros_like(acc_ref)

    # q already carries 1/sqrt(Dh) and RoPE; contract last dims, no in-kernel .T
    s = jax.lax.dot_general(q_ref[...], k_ref[...],
                            (((1,), (1,)), ((), ())),
                            preferred_element_type=jnp.float32)      # (TQ, TK)
    m_prev = m_ref[...]
    m_new = jnp.maximum(m_prev, jnp.max(s, axis=-1, keepdims=True))
    alpha = jnp.exp(m_prev - m_new)
    p = jnp.exp(s - m_new)
    l_ref[...] = alpha * l_ref[...] + jnp.sum(p, axis=-1, keepdims=True)
    acc_ref[...] = alpha * acc_ref[...] + jnp.dot(
        p.astype(jnp.bfloat16), v_ref[...], preferred_element_type=jnp.float32)
    m_ref[...] = m_new

    @pl.when(ki == pl.num_programs(2) - 1)
    def _():
        o_ref[...] = (acc_ref[...] * pl.reciprocal(l_ref[...], approx=False)
                      ).astype(o_ref.dtype)


def flash_attention_pallas(q, k, v, *, tq=256, tk=256):
    """q/k/v: (B*H, S, Dh) bf16 (q pre-scaled, RoPE applied) -> ctx (B*H, S, Dh) bf16."""
    BH, S, Dh = q.shape
    TQ = _pick_tile(S, tq, 16)
    TK = _pick_tile(S, tk, 16)
    return pl.pallas_call(
        _flash_attn_kernel,
        out_shape=jax.ShapeDtypeStruct((BH, S, Dh), jnp.bfloat16),
        grid=(BH, S // TQ, S // TK),
        in_specs=[
            pl.BlockSpec((None, TQ, Dh), lambda b, qi, ki: (b, qi, 0)),
            pl.BlockSpec((None, TK, Dh), lambda b, qi, ki: (b, ki, 0)),
            pl.BlockSpec((None, TK, Dh), lambda b, qi, ki: (b, ki, 0)),
        ],
        out_specs=pl.BlockSpec((None, TQ, Dh), lambda b, qi, ki: (b, qi, 0)),
        scratch_shapes=[pltpu.VMEM((TQ, 1), jnp.float32),
                        pltpu.VMEM((TQ, 1), jnp.float32),
                        pltpu.VMEM((TQ, Dh), jnp.float32)],
        compiler_params=pltpu.CompilerParams(
            dimension_semantics=("parallel", "parallel", "arbitrary")),
    )(q, k, v)


# ----------------------------- output projection + residual (weight resident) -----------------------------

def _wo_residual_kernel(ctx_ref, res_ref, w_ref, o_ref):
    o_ref[...] = res_ref[...] + jnp.dot(
        ctx_ref[...], w_ref[...], preferred_element_type=jnp.float32)


def wo_residual_pallas(ctx, resid, wo, *, tm=256):
    """resid + ctx @ wo.  ctx: (M,D) bf16, resid: (M,D) f32, wo: (D,D) bf16 -> (M,D) f32."""
    M, D = ctx.shape
    TM = _pick_tile(M, tm, 16)
    return pl.pallas_call(
        _wo_residual_kernel,
        out_shape=jax.ShapeDtypeStruct((M, D), jnp.float32),
        grid=(M // TM,),
        in_specs=[
            pl.BlockSpec((TM, D), lambda i: (i, 0)),
            pl.BlockSpec((TM, D), lambda i: (i, 0)),
            pl.BlockSpec((D, D), lambda i: (0, 0)),        # resident: constant index
        ],
        out_specs=pl.BlockSpec((TM, D), lambda i: (i, 0)),
        compiler_params=pltpu.CompilerParams(dimension_semantics=("parallel",)),
    )(ctx, resid, wo)


# ----------------------------- fused FiLM + SwiGLU FFN + residual (H tiled) -----------------------------

def _film_ffn_kernel(x_ref, scale_ref, shift_ref, w1_ref, w3_ref, w2_ref, o_ref,
                     xf_ref, acc_ref):
    hh = pl.program_id(2)

    @pl.when(hh == 0)
    def _():
        x = x_ref[...].astype(jnp.float32)                           # (TS, D)
        mean = jnp.mean(x, axis=-1, keepdims=True)
        var = jnp.mean(jnp.square(x - mean), axis=-1, keepdims=True)
        h = (x - mean) * jax.lax.rsqrt(var + 1e-5)
        h = h * scale_ref[...] + shift_ref[...]
        xf_ref[...] = h.astype(xf_ref.dtype)
        acc_ref[...] = jnp.zeros_like(acc_ref)

    xf = xf_ref[...]                                                 # (TS, D) bf16
    a = jnp.dot(xf, w1_ref[...], preferred_element_type=jnp.float32)
    b = jnp.dot(xf, w3_ref[...], preferred_element_type=jnp.float32)
    g = (a * jax.nn.sigmoid(a)) * b                                  # silu(w1 x) * (w3 x)
    acc_ref[...] += jnp.dot(g.astype(jnp.bfloat16), w2_ref[...],
                            preferred_element_type=jnp.float32)

    @pl.when(hh == pl.num_programs(2) - 1)
    def _():
        # residual fused: x block stays resident across the hh reduction axis
        o_ref[...] = x_ref[...] + acc_ref[...]


def film_ffn_pallas(x, scale, shift, w1, w3, w2, *, ts=512, th=512):
    """x + FFN(FiLM(LN(x))).  x: (B,S,D) f32, w1/w3: (D,H) bf16, w2: (H,D) bf16 -> (B,S,D) f32."""
    B, S, D = x.shape
    H = w1.shape[1]
    TS = _pick_tile(S, ts, 16)     # larger token tile -> fewer full passes over w1/w3/w2
    TH = _pick_tile(H, th, 128)
    # TODO(synk): pipeline_mode=pl.Buffered(3) on w1/w3/w2 could hide residual DMA latency
    # once MXU-bound; left at default double-buffering to stay inside the v7x VMEM budget.
    return pl.pallas_call(
        _film_ffn_kernel,
        out_shape=jax.ShapeDtypeStruct((B, S, D), jnp.float32),
        grid=(B, S // TS, H // TH),
        in_specs=[
            pl.BlockSpec((None, TS, D), lambda b, s, h: (b, s, 0)),
            pl.BlockSpec((None, 1, D), lambda b, s, h: (b, 0, 0)),
            pl.BlockSpec((None, 1, D), lambda b, s, h: (b, 0, 0)),
            pl.BlockSpec((D, TH), lambda b, s, h: (0, h)),
            pl.BlockSpec((D, TH), lambda b, s, h: (0, h)),
            pl.BlockSpec((TH, D), lambda b, s, h: (h, 0)),
        ],
        out_specs=pl.BlockSpec((None, TS, D), lambda b, s, h: (b, s, 0)),
        scratch_shapes=[pltpu.VMEM((TS, D), jnp.bfloat16),
                        pltpu.VMEM((TS, D), jnp.float32)],
        compiler_params=pltpu.CompilerParams(
            dimension_semantics=("parallel", "parallel", "arbitrary"),
            vmem_limit_bytes=48 * 1024 * 1024),
    )(x, scale, shift, w1, w3, w2)


# ----------------------------- Parameter init -----------------------------

def _trunc_linear(key, fan_in, fan_out, dtype=jnp.float32):
    # matches torch trunc_normal_(mean=0, std=1/sqrt(fan_in), a=-std, b=std); stored (in, out)
    std = 1.0 / math.sqrt(fan_in)
    w = std * jax.random.truncated_normal(key, -1.0, 1.0, (fan_in, fan_out), jnp.float32)
    return w.astype(dtype)


def init_params(key, *, num_classes, model_dim, embedding_dim, num_layers,
                num_heads, fourier_dim):
    del num_classes, num_heads       # autoencoder not used by ScoreLM.forward
    keys = iter(jax.random.split(key, 4 + 9 * num_layers))
    bf16 = jnp.bfloat16
    D = model_dim
    params = {
        "project": _trunc_linear(next(keys), embedding_dim, D, bf16),          # bias=False
        "pos_w": jax.random.normal(next(keys), (fourier_dim // 2,), jnp.float32),
        "time_w1": _trunc_linear(next(keys), fourier_dim + 1, 128),
        "time_b1": jnp.zeros((128,), jnp.float32),
        "time_w2": _trunc_linear(next(keys), 128, 128),
        "time_b2": jnp.zeros((128,), jnp.float32),
        "layers": [],
    }
    hidden = 4 * D
    for _ in range(num_layers):
        kq, kk, kv, ko, k1, k3, k2, kfa, kff = (next(keys) for _ in range(9))
        params["layers"].append({
            "wq": _trunc_linear(kq, D, D, bf16),
            "wk": _trunc_linear(kk, D, D, bf16),
            "wv": _trunc_linear(kv, D, D, bf16),
            "wo": _trunc_linear(ko, D, D, bf16),
            "w1": _trunc_linear(k1, D, hidden, bf16),
            "w3": _trunc_linear(k3, D, hidden, bf16),
            "w2": _trunc_linear(k2, hidden, D, bf16),
            "film_attn_w": _trunc_linear(kfa, 128, 2 * D),
            "film_attn_b": jnp.zeros((2 * D,), jnp.float32),
            "film_ffn_w": _trunc_linear(kff, 128, 2 * D),
            "film_ffn_b": jnp.zeros((2 * D,), jnp.float32),
        })
    return params


# ----------------------------- Forward pass -----------------------------

def score_lm_forward(params, x, t, *, num_heads):
    B, S, in_dim = x.shape
    D = params["project"].shape[1]
    head_dim = D // num_heads

    # --- time embedding / FiLM conditioning (tiny; plain JAX, dropout_prob=0) ---
    t2 = t.reshape(B, 1).astype(jnp.float32)
    freq = (t2 @ params["pos_w"].reshape(1, -1)) * (2.0 * math.pi)        # (B, F/2)
    pe = jnp.concatenate([t2, jnp.sin(freq), jnp.cos(freq)], axis=-1)     # (B, F+1)
    h1 = jax.nn.gelu(pe @ params["time_w1"] + params["time_b1"], approximate=False)
    film = jax.nn.gelu(h1 @ params["time_w2"] + params["time_b2"], approximate=False)  # (B,128)

    # --- input projection (Pallas tiled matmul, bf16 MXU, f32 out) ---
    h = matmul_pallas(x.reshape(B * S, in_dim).astype(jnp.bfloat16),
                      params["project"]).reshape(B, S, D)

    cos, sin_a, sin_b = rope_tables_full(S, num_heads, head_dim)          # (S, D) each

    def to_heads(a):   # (B,S,D) -> (B*H, S, Dh), lane-clean head blocks for the flash kernel
        return (a.reshape(B, S, num_heads, head_dim)
                 .transpose(0, 2, 1, 3)
                 .reshape(B * num_heads, S, head_dim))

    for layer in params["layers"]:
        # ---- attention block: FiLM -> QKV(+RoPE, resident weights) -> flash -> wo+residual ----
        ss = film @ layer["film_attn_w"] + layer["film_attn_b"]           # (B, 2D), plain JAX
        scale_a, shift_a = jnp.split(ss, 2, axis=-1)
        q, k, v = film_qkv_rope_pallas(
            h, scale_a.reshape(B, 1, D), shift_a.reshape(B, 1, D),
            layer["wq"], layer["wk"], layer["wv"], cos, sin_a, sin_b,
            num_heads=num_heads, head_dim=head_dim)                       # (B,S,D) bf16 x3
        ctx = flash_attention_pallas(to_heads(q), to_heads(k), to_heads(v))
        ctx = (ctx.reshape(B, num_heads, S, head_dim)
                  .transpose(0, 2, 1, 3)
                  .reshape(B * S, D))
        h = wo_residual_pallas(ctx, h.reshape(B * S, D), layer["wo"]).reshape(B, S, D)

        # ---- feed-forward block: FiLM + SwiGLU FFN + residual fused ----
        ss = film @ layer["film_ffn_w"] + layer["film_ffn_b"]
        scale_f, shift_f = jnp.split(ss, 2, axis=-1)
        h = film_ffn_pallas(h, scale_f.reshape(B, 1, D), shift_f.reshape(B, 1, D),
                            layer["w1"], layer["w3"], layer["w2"])
    return h


# ----------------------------- Demo -----------------------------

if __name__ == "__main__":
    NUM_CLASSES = 11        # unused by forward
    MODEL_DIM = 32
    EMBEDDING_DIM = 32
    NUM_LAYERS = 2
    NUM_HEADS = 4
    FOURIER_DIM = 16
    BATCH = 2
    SEQLEN = 8

    root = jax.random.PRNGKey(0)
    k_params, k_x, k_t = jax.random.split(root, 3)

    params = init_params(
        k_params,
        num_classes=NUM_CLASSES,
        model_dim=MODEL_DIM,
        embedding_dim=EMBEDDING_DIM,
        num_layers=NUM_LAYERS,
        num_heads=NUM_HEADS,
        fourier_dim=FOURIER_DIM,
    )

    x = jax.random.normal(k_x, (BATCH, SEQLEN, EMBEDDING_DIM), jnp.float32)
    t = jax.random.uniform(k_t, (BATCH,), jnp.float32)

    fwd = jax.jit(functools.partial(score_lm_forward, num_heads=NUM_HEADS))
    out = fwd(params, x, t)
    out = jax.block_until_ready(out)

    assert out.shape == (BATCH, SEQLEN, MODEL_DIM)
    assert bool(jnp.all(jnp.isfinite(out)))
    print("KERNEL_OK")
</pallas_src>

<mosaic_0001>
module attributes {stable_mosaic.version = 11 : i64} {
  func.func @_matmul_kernel(%arg0: i32, %arg1: i32, %arg2: i32, %arg3: memref<16x32xbf16, #tpu.memory_space<vmem>>, %arg4: memref<32x32xbf16, #tpu.memory_space<vmem>>, %arg5: memref<16x32xf32, #tpu.memory_space<vmem>>, %arg6: memref<16x32xf32, #tpu.memory_space<vmem>>) attributes {dimension_semantics = [#tpu.dimension_semantics<parallel>, #tpu.dimension_semantics<parallel>, #tpu.dimension_semantics<arbitrary>], iteration_bounds = array<i64: 1, 1, 1>, scalar_prefetch = 0 : i64, scratch_operands = 1 : i64, tpu.core_type = #tpu.core_type<tc>, window_params = [{transform_indices = @transform_0, window_bounds = array<i64: 16, 32>}, {transform_indices = @transform_1, window_bounds = array<i64: 32, 32>}, {transform_indices = @transform_2, window_bounds = array<i64: 16, 32>}]} {
    %c0_i32 = arith.constant 0 : i32
    %0 = arith.cmpi eq, %arg2, %c0_i32 : i32
    %1 = arith.extui %0 : i1 to i32
    %c0_i32_0 = arith.constant 0 : i32
    %2 = arith.cmpi ne, %1, %c0_i32_0 : i32
    scf.if %2 {
      %cst_10 = arith.constant 0.000000e+00 : f32
      %12 = vector.broadcast %cst_10 : f32 to vector<16x32xf32>
      %c0_11 = arith.constant 0 : index
      %c0_12 = arith.constant 0 : index
      %13 = vector.load %arg6[%c0_11, %c0_12] : memref<16x32xf32, #tpu.memory_space<vmem>>, vector<16x32xf32>
      tpu.vector_store %arg6[%c0_11, %c0_12], %12 {strides = array<i32>} : memref<16x32xf32, #tpu.memory_space<vmem>>, vector<16x32xf32>,
    } else {
    }
    %c0 = arith.constant 0 : index
    %c0_1 = arith.constant 0 : index
    %3 = vector.load %arg6[%c0, %c0_1] : memref<16x32xf32, #tpu.memory_space<vmem>>, vector<16x32xf32>
    %c0_2 = arith.constant 0 : index
    %c0_3 = arith.constant 0 : index
    %4 = vector.load %arg3[%c0_2, %c0_3] : memref<16x32xbf16, #tpu.memory_space<vmem>>, vector<16x32xbf16>
    %c0_4 = arith.constant 0 : index
    %c0_5 = arith.constant 0 : index
    %5 = vector.load %arg4[%c0_4, %c0_5] : memref<32x32xbf16, #tpu.memory_space<vmem>>, vector<32x32xbf16>
    %cst = arith.constant dense<0.000000e+00> : vector<16x32xf32>
    %6 = tpu.matmul %4, %5, %cst {dimension_numbers = #tpu.dot_dimension_numbers<[1], [0], [0], [1], [0, 0, 1, 1], [], []>} : vector<16x32xbf16>, vector<32x32xbf16>, vector<16x32xf32> -> vector<16x32xf32>
    %7 = arith.addf %3, %6 : vector<16x32xf32>
    %c0_6 = arith.constant 0 : index
    %c0_7 = arith.constant 0 : index
    %8 = vector.load %arg6[%c0_6, %c0_7] : memref<16x32xf32, #tpu.memory_space<vmem>>, vector<16x32xf32>
    tpu.vector_store %arg6[%c0_6, %c0_7], %7 {strides = array<i32>} : memref<16x32xf32, #tpu.memory_space<vmem>>, vector<16x32xf32>,
    %c0_i32_8 = arith.constant 0 : i32
    %9 = arith.cmpi eq, %arg2, %c0_i32_8 : i32
    %10 = arith.extui %9 : i1 to i32
    %c0_i32_9 = arith.constant 0 : i32
    %11 = arith.cmpi ne, %10, %c0_i32_9 : i32
    scf.if %11 {
      %c0_10 = arith.constant 0 : index
      %c0_11 = arith.constant 0 : index
      %12 = vector.load %arg6[%c0_10, %c0_11] : memref<16x32xf32, #tpu.memory_space<vmem>>, vector<16x32xf32>
      %c0_12 = arith.constant 0 : index
      %c0_13 = arith.constant 0 : index
      %13 = vector.load %arg5[%c0_12, %c0_13] : memref<16x32xf32, #tpu.memory_space<vmem>>, vector<16x32xf32>
      tpu.vector_store %arg5[%c0_12, %c0_13], %12 {strides = array<i32>} : memref<16x32xf32, #tpu.memory_space<vmem>>, vector<16x32xf32>,
    } else {
    }
    return
  }
  func.func @transform_0(%arg0: i32, %arg1: i32, %arg2: i32) -> (i32, i32) {
    %c0_i32 = arith.constant 0 : i32
    return %arg0, %arg2 : i32, i32
  }
  func.func @transform_1(%arg0: i32, %arg1: i32, %arg2: i32) -> (i32, i32) {
    %c0_i32 = arith.constant 0 : i32
    return %arg2, %arg1 : i32, i32
  }
  func.func @transform_2(%arg0: i32, %arg1: i32, %arg2: i32) -> (i32, i32) {
    %c0_i32 = arith.constant 0 : i32
    return %arg0, %arg1 : i32, i32
  }
}

module attributes {stable_mosaic.version = 11 : i64} {
  func.func @_film_qkv_rope_kernel(%arg0: i32, %arg1: i32, %arg2: memref<1x8x32xf32, #tpu.memory_space<vmem>>, %arg3: memref<1x1x32xf32, #tpu.memory_space<vmem>>, %arg4: memref<1x1x32xf32, #tpu.memory_space<vmem>>, %arg5: memref<32x32xbf16, #tpu.memory_space<vmem>>, %arg6: memref<32x32xbf16, #tpu.memory_space<vmem>>, %arg7: memref<32x32xbf16, #tpu.memory_space<vmem>>, %arg8: memref<8x32xf32, #tpu.memory_space<vmem>>, %arg9: memref<8x32xf32, #tpu.memory_space<vmem>>, %arg10: memref<8x32xf32, #tpu.memory_space<vmem>>, %arg11: memref<1x8x32xbf16, #tpu.memory_space<vmem>>, %arg12: memref<1x8x32xbf16, #tpu.memory_space<vmem>>, %arg13: memref<1x8x32xbf16, #tpu.memory_space<vmem>>) attributes {dimension_semantics = [#tpu.dimension_semantics<parallel>, #tpu.dimension_semantics<parallel>], iteration_bounds = array<i64: 2, 1>, scalar_prefetch = 0 : i64, scratch_operands = 0 : i64, tpu.core_type = #tpu.core_type<tc>, window_params = [{transform_indices = @transform_0, window_bounds = array<i64: 1, 8, 32>}, {transform_indices = @transform_1, window_bounds = array<i64: 1, 1, 32>}, {transform_indices = @transform_2, window_bounds = array<i64: 1, 1, 32>}, {pipeline_mode = #tpu.pipeline_mode<synchronous>, transform_indices = @transform_3, window_bounds = array<i64: 32, 32>}, {pipeline_mode = #tpu.pipeline_mode<synchronous>, transform_indices = @transform_4, window_bounds = array<i64: 32, 32>}, {pipeline_mode = #tpu.pipeline_mode<synchronous>, transform_indices = @transform_5, window_bounds = array<i64: 32, 32>}, {transform_indices = @transform_6, window_bounds = array<i64: 8, 32>}, {transform_indices = @transform_7, window_bounds = array<i64: 8, 32>}, {transform_indices = @transform_8, window_bounds = array<i64: 8, 32>}, {transform_indices = @transform_9, window_bounds = array<i64: 1, 8, 32>}, {transform_indices = @transform_10, window_bounds = array<i64: 1, 8, 32>}, {transform_indices = @transform_11, window_bounds = array<i64: 1, 8, 32>}]} {
    %c0 = arith.constant 0 : index
    %c0_0 = arith.constant 0 : index
    %c0_1 = arith.constant 0 : index
    %0 = vector.load %arg2[%c0, %c0_0, %c0_1] : memref<1x8x32xf32, #tpu.memory_space<vmem>>, vector<1x8x32xf32>
    %1 = vector.shape_cast %0 : vector<1x8x32xf32> to vector<8x32xf32>
    %cst = arith.constant dense<0.000000e+00> : vector<8xf32>
    %2 = vector.multi_reduction <add>, %1, %cst [1] : vector<8x32xf32> to vector<8xf32>
    %3 = vector.shape_cast %2 : vector<8xf32> to vector<8x1xf32>
    %cst_2 = arith.constant 3.200000e+01 : f32
    %4 = vector.broadcast %cst_2 : f32 to vector<8x1xf32>
    %5 = arith.divf %3, %4 : vector<8x1xf32>
    %6 = vector.broadcast %5 : vector<8x1xf32> to vector<8x32xf32>
    %7 = arith.subf %1, %6 : vector<8x32xf32>
    %8 = arith.mulf %7, %7 : vector<8x32xf32>
    %cst_3 = arith.constant dense<0.000000e+00> : vector<8xf32>
    %9 = vector.multi_reduction <add>, %8, %cst_3 [1] : vector<8x32xf32> to vector<8xf32>
    %10 = vector.shape_cast %9 : vector<8xf32> to vector<8x1xf32>
    %cst_4 = arith.constant 3.200000e+01 : f32
    %11 = vector.broadcast %cst_4 : f32 to vector<8x1xf32>
    %12 = arith.divf %10, %11 : vector<8x1xf32>
    %13 = vector.broadcast %5 : vector<8x1xf32> to vector<8x32xf32>
    %14 = arith.subf %1, %13 : vector<8x32xf32>
    %cst_5 = arith.constant 9.99999974E-6 : f32
    %15 = vector.broadcast %cst_5 : f32 to vector<8x1xf32>
    %16 = arith.addf %12, %15 : vector<8x1xf32>
    %17 = math.rsqrt %16 : vector<8x1xf32>
    %18 = vector.broadcast %17 : vector<8x1xf32> to vector<8x32xf32>
    %19 = arith.mulf %14, %18 : vector<8x32xf32>
    %c0_6 = arith.constant 0 : index
    %c0_7 = arith.constant 0 : index
    %c0_8 = arith.constant 0 : index
    %20 = vector.load %arg3[%c0_6, %c0_7, %c0_8] : memref<1x1x32xf32, #tpu.memory_space<vmem>>, vector<1x1x32xf32>
    %21 = vector.shape_cast %20 : vector<1x1x32xf32> to vector<1x32xf32>
    %22 = vector.broadcast %21 : vector<1x32xf32> to vector<8x32xf32>
    %23 = arith.mulf %19, %22 : vector<8x32xf32>
    %c0_9 = arith.constant 0 : index
    %c0_10 = arith.constant 0 : index
    %c0_11 = arith.constant 0 : index
    %24 = vector.load %arg4[%c0_9, %c0_10, %c0_11] : memref<1x1x32xf32, #tpu.memory_space<vmem>>, vector<1x1x32xf32>
    %25 = vector.shape_cast %24 : vector<1x1x32xf32> to vector<1x32xf32>
    %26 = vector.broadcast %25 : vector<1x32xf32> to vector<8x32xf32>
    %27 = arith.addf %23, %26 : vector<8x32xf32>
    %28 = arith.truncf %27 : vector<8x32xf32> to vector<8x32xbf16>
    %c0_12 = arith.constant 0 : index
    %c0_13 = arith.constant 0 : index
    %29 = vector.load %arg8[%c0_12, %c0_13] : memref<8x32xf32, #tpu.memory_space<vmem>>, vector<8x32xf32>
    %c0_14 = arith.constant 0 : index
    %c0_15 = arith.constant 0 : index
    %30 = vector.load %arg9[%c0_14, %c0_15] : memref<8x32xf32, #tpu.memory_space<vmem>>, vector<8x32xf32>
    %c0_16 = arith.constant 0 : index
    %c0_17 = arith.constant 0 : index
    %31 = vector.load %arg10[%c0_16, %c0_17] : memref<8x32xf32, #tpu.memory_space<vmem>>, vector<8x32xf32>
    %c0_18 = arith.constant 0 : index
    %c0_19 = arith.constant 0 : index
    %32 = vector.load %arg5[%c0_18, %c0_19] : memref<32x32xbf16, #tpu.memory_space<vmem>>, vector<32x32xbf16>
    %cst_20 = arith.constant dense<0.000000e+00> : vector<8x32xf32>
    %33 = tpu.matmul %28, %32, %cst_20 {dimension_numbers = #tpu.dot_dimension_numbers<[1], [0], [0], [1], [0, 0, 1, 1], [], []>} : vector<8x32xbf16>, vector<32x32xbf16>, vector<8x32xf32> -> vector<8x32xf32>
    %cst_21 = arith.constant 0.353553385 : f32
    %34 = vector.broadcast %cst_21 : f32 to vector<8x32xf32>
    %35 = arith.mulf %33, %34 : vector<8x32xf32>
    %36 = arith.subf %31, %30 : vector<8x32xf32>
    %37 = vector.extract_strided_slice %35 {offsets = [0, 0], sizes = [8, 8], strides = [1, 1]} : vector<8x32xf32> to vector<8x8xf32>
    %38 = vector.extract_strided_slice %37 {offsets = [0, 4], sizes = [8, 4], strides = [1, 1]} : vector<8x8xf32> to vector<8x4xf32>
    %cst_22 = arith.constant 0.000000e+00 : f32
    %39 = vector.broadcast %cst_22 : f32 to vector<8x4xf32>
    %40 = arith.subf %39, %38 : vector<8x4xf32>
    %41 = vector.extract_strided_slice %37 {offsets = [0, 0], sizes = [8, 4], strides = [1, 1]} : vector<8x8xf32> to vector<8x4xf32>
    %42 = tpu.concatenate %40, %41 in 1 : vector<8x4xf32>, vector<8x4xf32> -> vector<8x8xf32>
    %43 = vector.extract_strided_slice %35 {offsets = [0, 8], sizes = [8, 8], strides = [1, 1]} : vector<8x32xf32> to vector<8x8xf32>
    %44 = vector.extract_strided_slice %43 {offsets = [0, 4], sizes = [8, 4], strides = [1, 1]} : vector<8x8xf32> to vector<8x4xf32>
    %cst_23 = arith.constant 0.000000e+00 : f32
    %45 = vector.broadcast %cst_23 : f32 to vector<8x4xf32>
    %46 = arith.subf %45, %44 : vector<8x4xf32>
    %47 = vector.extract_strided_slice %43 {offsets = [0, 0], sizes = [8, 4], strides = [1, 1]} : vector<8x8xf32> to vector<8x4xf32>
    %48 = tpu.concatenate %46, %47 in 1 : vector<8x4xf32>, vector<8x4xf32> -> vector<8x8xf32>
    %49 = vector.extract_strided_slice %35 {offsets = [0, 16], sizes = [8, 8], strides = [1, 1]} : vector<8x32xf32> to vector<8x8xf32>
    %50 = vector.extract_strided_slice %49 {offsets = [0, 4], sizes = [8, 4], strides = [1, 1]} : vector<8x8xf32> to vector<8x4xf32>
    %cst_24 = arith.constant 0.000000e+00 : f32
    %51 = vector.broadcast %cst_24 : f32 to vector<8x4xf32>
    %52 = arith.subf %51, %50 : vector<8x4xf32>
    %53 = vector.extract_strided_slice %49 {offsets = [0, 0], sizes = [8, 4], strides = [1, 1]} : vector<8x8xf32> to vector<8x4xf32>
    %54 = tpu.concatenate %52, %53 in 1 : vector<8x4xf32>, vector<8x4xf32> -> vector<8x8xf32>
    %55 = vector.extract_strided_slice %35 {offsets = [0, 24], sizes = [8, 8], strides = [1, 1]} : vector<8x32xf32> to vector<8x8xf32>
    %56 = vector.extract_strided_slice %55 {offsets = [0, 4], sizes = [8, 4], strides = [1, 1]} : vector<8x8xf32> to vector<8x4xf32>
    %cst_25 = arith.constant 0.000000e+00 : f32
    %57 = vector.broadcast %cst_25 : f32 to vector<8x4xf32>
    %58 = arith.subf %57, %56 : vector<8x4xf32>
    %59 = vector.extract_strided_slice %55 {offsets = [0, 0], sizes = [8, 4], strides = [1, 1]} : vector<8x8xf32> to vector<8x4xf32>
    %60 = tpu.concatenate %58, %59 in 1 : vector<8x4xf32>, vector<8x4xf32> -> vector<8x8xf32>
    %61 = tpu.concatenate %42, %48, %54, %60 in 1 : vector<8x8xf32>, vector<8x8xf32>, vector<8x8xf32>, vector<8x8xf32> -> vector<8x32xf32>
    %62 = arith.mulf %35, %29 : vector<8x32xf32>
    %63 = arith.mulf %61, %36 : vector<8x32xf32>
    %64 = arith.addf %62, %63 : vector<8x32xf32>
    %65 = arith.truncf %64 : vector<8x32xf32> to vector<8x32xbf16>
    %c0_26 = arith.constant 0 : index
    %c0_27 = arith.constant 0 : index
    %c0_28 = arith.constant 0 : index
    %66 = vector.load %arg11[%c0_26, %c0_27, %c0_28] : memref<1x8x32xbf16, #tpu.memory_space<vmem>>, vector<1x8x32xbf16>
    %67 = vector.shape_cast %66 : vector<1x8x32xbf16> to vector<8x32xbf16>
    %68 = vector.shape_cast %65 : vector<8x32xbf16> to vector<1x8x32xbf16>
    tpu.vector_store %arg11[%c0_26, %c0_27, %c0_28], %68 {strides = array<i32>} : memref<1x8x32xbf16, #tpu.memory_space<vmem>>, vector<1x8x32xbf16>,
    %c0_29 = arith.constant 0 : index
    %c0_30 = arith.constant 0 : index
    %69 = vector.load %arg6[%c0_29, %c0_30] : memref<32x32xbf16, #tpu.memory_space<vmem>>, vector<32x32xbf16>
    %cst_31 = arith.constant dense<0.000000e+00> : vector<8x32xf32>
    %70 = tpu.matmul %28, %69, %cst_31 {dimension_numbers = #tpu.dot_dimension_numbers<[1], [0], [0], [1], [0, 0, 1, 1], [], []>} : vector<8x32xbf16>, vector<32x32xbf16>, vector<8x32xf32> -> vector<8x32xf32>
    %71 = arith.subf %31, %30 : vector<8x32xf32>
    %72 = vector.extract_strided_slice %70 {offsets = [0, 0], sizes = [8, 8], strides = [1, 1]} : vector<8x32xf32> to vector<8x8xf32>
    %73 = vector.extract_strided_slice %72 {offsets = [0, 4], sizes = [8, 4], strides = [1, 1]} : vector<8x8xf32> to vector<8x4xf32>
    %cst_32 = arith.constant 0.000000e+00 : f32
    %74 = vector.broadcast %cst_32 : f32 to vector<8x4xf32>
    %75 = arith.subf %74, %73 : vector<8x4xf32>
    %76 = vector.extract_strided_slice %72 {offsets = [0, 0], sizes = [8, 4], strides = [1, 1]} : vector<8x8xf32> to vector<8x4xf32>
    %77 = tpu.concatenate %75, %76 in 1 : vector<8x4xf32>, vector<8x4xf32> -> vector<8x8xf32>
    %78 = vector.extract_strided_slice %70 {offsets = [0, 8], sizes = [8, 8], strides = [1, 1]} : vector<8x32xf32> to vector<8x8xf32>
    %79 = vector.extract_strided_slice %78 {offsets = [0, 4], sizes = [8, 4], strides = [1, 1]} : vector<8x8xf32> to vector<8x4xf32>
    %cst_33 = arith.constant 0.000000e+00 : f32
    %80 = vector.broadcast %cst_33 : f32 to vector<8x4xf32>
    %81 = arith.subf %80, %79 : vector<8x4xf32>
    %82 = vector.extract_strided_slice %78 {offsets = [0, 0], sizes = [8, 4], strides = [1, 1]} : vector<8x8xf32> to vector<8x4xf32>
    %83 = tpu.concatenate %81, %82 in 1 : vector<8x4xf32>, vector<8x4xf32> -> vector<8x8xf32>
    %84 = vector.extract_strided_slice %70 {offsets = [0, 16], sizes = [8, 8], strides = [1, 1]} : vector<8x32xf32> to vector<8x8xf32>
    %85 = vector.extract_strided_slice %84 {offsets = [0, 4], sizes = [8, 4], strides = [1, 1]} : vector<8x8xf32> to vector<8x4xf32>
    %cst_34 = arith.constant 0.000000e+00 : f32
    %86 = vector.broadcast %cst_34 : f32 to vector<8x4xf32>
    %87 = arith.subf %86, %85 : vector<8x4xf32>
    %88 = vector.extract_strided_slice %84 {offsets = [0, 0], sizes = [8, 4], strides = [1, 1]} : vector<8x8xf32> to vector<8x4xf32>
    %89 = tpu.concatenate %87, %88 in 1 : vector<8x4xf32>, vector<8x4xf32> -> vector<8x8xf32>
    %90 = vector.extract_strided_slice %70 {offsets = [0, 24], sizes = [8, 8], strides = [1, 1]} : vector<8x32xf32> to vector<8x8xf32>
    %91 = vector.extract_strided_slice %90 {offsets = [0, 4], sizes = [8, 4], strides = [1, 1]} : vector<8x8xf32> to vector<8x4xf32>
    %cst_35 = arith.constant 0.000000e+00 : f32
    %92 = vector.broadcast %cst_35 : f32 to vector<8x4xf32>
    %93 = arith.subf %92, %91 : vector<8x4xf32>
    %94 = vector.extract_strided_slice %90 {offsets = [0, 0], sizes = [8, 4], strides = [1, 1]} : vector<8x8xf32> to vector<8x4xf32>
    %95 = tpu.concatenate %93, %94 in 1 : vector<8x4xf32>, vector<8x4xf32> -> vector<8x8xf32>
    %96 = tpu.concatenate %77, %83, %89, %95 in 1 : vector<8x8xf32>, vector<8x8xf32>, vector<8x8xf32>, vector<8x8xf32> -> vector<8x32xf32>
    %97 = arith.mulf %70, %29 : vector<8x32xf32>
    %98 = arith.mulf %96, %71 : vector<8x32xf32>
    %99 = arith.addf %97, %98 : vector<8x32xf32>
    %100 = arith.truncf %99 : vector<8x32xf32> to vector<8x32xbf16>
    %c0_36 = arith.constant 0 : index
    %c0_37 = arith.constant 0 : index
    %c0_38 = arith.constant 0 : index
    %101 = vector.load %arg12[%c0_36, %c0_37, %c0_38] : memref<1x8x32xbf16, #tpu.memory_space<vmem>>, vector<1x8x32xbf16>
    %102 = vector.shape_cast %101 : vector<1x8x32xbf16> to vector<8x32xbf16>
    %103 = vector.shape_cast %100 : vector<8x32xbf16> to vector<1x8x32xbf16>
    tpu.vector_store %arg12[%c0_36, %c0_37, %c0_38], %103 {strides = array<i32>} : memref<1x8x32xbf16, #tpu.memory_space<vmem>>, vector<1x8x32xbf16>,
    %c0_39 = arith.constant 0 : index
    %c0_40 = arith.constant 0 : index
    %104 = vector.load %arg7[%c0_39, %c0_40] : memref<32x32xbf16, #tpu.memory_space<vmem>>, vector<32x32xbf16>
    %cst_41 = arith.constant dense<0.000000e+00> : vector<8x32xf32>
    %105 = tpu.matmul %28, %104, %cst_41 {dimension_numbers = #tpu.dot_dimension_numbers<[1], [0], [0], [1], [0, 0, 1, 1], [], []>} : vector<8x32xbf16>, vector<32x32xbf16>, vector<8x32xf32> -> vector<8x32xf32>
    %106 = arith.truncf %105 : vector<8x32xf32> to vector<8x32xbf16>
    %c0_42 = arith.constant 0 : index
    %c0_43 = arith.constant 0 : index
    %c0_44 = arith.constant 0 : index
    %107 = vector.load %arg13[%c0_42, %c0_43, %c0_44] : memref<1x8x32xbf16, #tpu.memory_space<vmem>>, vector<1x8x32xbf16>
    %108 = vector.shape_cast %107 : vector<1x8x32xbf16> to vector<8x32xbf16>
    %109 = vector.shape_cast %106 : vector<8x32xbf16> to vector<1x8x32xbf16>
    tpu.vector_store %arg13[%c0_42, %c0_43, %c0_44], %109 {strides = array<i32>} : memref<1x8x32xbf16, #tpu.memory_space<vmem>>, vector<1x8x32xbf16>,
    return
  }
  func.func @transform_0(%arg0: i32, %arg1: i32) -> (i32, i32, i32) {
    %c0_i32 = arith.constant 0 : i32
    %c0_i32_0 = arith.constant 0 : i32
    return %arg0, %arg1, %c0_i32 : i32, i32, i32
  }
  func.func @transform_1(%arg0: i32, %arg1: i32) -> (i32, i32, i32) {
    %c0_i32 = arith.constant 0 : i32
    %c0_i32_0 = arith.constant 0 : i32
    %c0_i32_1 = arith.constant 0 : i32
    return %arg0, %c0_i32, %c0_i32_0 : i32, i32, i32
  }
  func.func @transform_2(%arg0: i32, %arg1: i32) -> (i32, i32, i32) {
    %c0_i32 = arith.constant 0 : i32
    %c0_i32_0 = arith.constant 0 : i32
    %c0_i32_1 = arith.constant 0 : i32
    return %arg0, %c0_i32, %c0_i32_0 : i32, i32, i32
  }
  func.func @transform_3(%arg0: i32, %arg1: i32) -> (i32, i32) {
    %c0_i32 = arith.constant 0 : i32
    %c0_i32_0 = arith.constant 0 : i32
    %c0_i32_1 = arith.constant 0 : i32
    return %c0_i32, %c0_i32_0 : i32, i32
  }
  func.func @transform_4(%arg0: i32, %arg1: i32) -> (i32, i32) {
    %c0_i32 = arith.constant 0 : i32
    %c0_i32_0 = arith.constant 0 : i32
    %c0_i32_1 = arith.constant 0 : i32
    return %c0_i32, %c0_i32_0 : i32, i32
  }
  func.func @transform_5(%arg0: i32, %arg1: i32) -> (i32, i32) {
    %c0_i32 = arith.constant 0 : i32
    %c0_i32_0 = arith.constant 0 : i32
    %c0_i32_1 = arith.constant 0 : i32
    return %c0_i32, %c0_i32_0 : i32, i32
  }
  func.func @transform_6(%arg0: i32, %arg1: i32) -> (i32, i32) {
    %c0_i32 = arith.constant 0 : i32
    %c0_i32_0 = arith.constant 0 : i32
    return %arg1, %c0_i32 : i32, i32
  }
  func.func @transform_7(%arg0: i32, %arg1: i32) -> (i32, i32) {
    %c0_i32 = arith.constant 0 : i32
    %c0_i32_0 = arith.constant 0 : i32
    return %arg1, %c0_i32 : i32, i32
  }
  func.func @transform_8(%arg0: i32, %arg1: i32) -> (i32, i32) {
    %c0_i32 = arith.constant 0 : i32
    %c0_i32_0 = arith.constant 0 : i32
    return %arg1, %c0_i32 : i32, i32
  }
  func.func @transform_9(%arg0: i32, %arg1: i32) -> (i32, i32, i32) {
    %c0_i32 = arith.constant 0 : i32
    %c0_i32_0 = arith.constant 0 : i32
    return %arg0, %arg1, %c0_i32 : i32, i32, i32
  }
  func.func @transform_10(%arg0: i32, %arg1: i32) -> (i32, i32, i32) {
    %c0_i32 = arith.constant 0 : i32
    %c0_i32_0 = arith.constant 0 : i32
    return %arg0, %arg1, %c0_i32 : i32, i32, i32
  }
  func.func @transform_11(%arg0: i32, %arg1: i32) -> (i32, i32, i32) {
    %c0_i32 = arith.constant 0 : i32
    %c0_i32_0 = arith.constant 0 : i32
    return %arg0, %arg1, %c0_i32 : i32, i32, i32
  }
}

module attributes {stable_mosaic.version = 11 : i64} {
  func.func @_flash_attn_kernel(%arg0: i32, %arg1: i32, %arg2: i32, %arg3: memref<1x8x8xbf16, #tpu.memory_space<vmem>>, %arg4: memref<1x8x8xbf16, #tpu.memory_space<vmem>>, %arg5: memref<1x8x8xbf16, #tpu.memory_space<vmem>>, %arg6: memref<1x8x8xbf16, #tpu.memory_space<vmem>>, %arg7: memref<8x1xf32, #tpu.memory_space<vmem>>, %arg8: memref<8x1xf32, #tpu.memory_space<vmem>>, %arg9: memref<8x8xf32, #tpu.memory_space<vmem>>) attributes {dimension_semantics = [#tpu.dimension_semantics<parallel>, #tpu.dimension_semantics<parallel>, #tpu.dimension_semantics<arbitrary>], iteration_bounds = array<i64: 8, 1, 1>, scalar_prefetch = 0 : i64, scratch_operands = 3 : i64, tpu.core_type = #tpu.core_type<tc>, window_params = [{transform_indices = @transform_0, window_bounds = array<i64: 1, 8, 8>}, {transform_indices = @transform_1, window_bounds = array<i64: 1, 8, 8>}, {transform_indices = @transform_2, window_bounds = array<i64: 1, 8, 8>}, {transform_indices = @transform_3, window_bounds = array<i64: 1, 8, 8>}]} {
    %c0_i32 = arith.constant 0 : i32
    %0 = arith.cmpi eq, %arg2, %c0_i32 : i32
    %1 = arith.extui %0 : i1 to i32
    %c0_i32_0 = arith.constant 0 : i32
    %2 = arith.cmpi ne, %1, %c0_i32_0 : i32
    scf.if %2 {
      %cst_26 = arith.constant 0xFF800000 : f32
      %36 = vector.broadcast %cst_26 : f32 to vector<8x1xf32>
      %c0_27 = arith.constant 0 : index
      %c0_28 = arith.constant 0 : index
      %37 = vector.load %arg7[%c0_27, %c0_28] : memref<8x1xf32, #tpu.memory_space<vmem>>, vector<8x1xf32>
      tpu.vector_store %arg7[%c0_27, %c0_28], %36 {strides = array<i32>} : memref<8x1xf32, #tpu.memory_space<vmem>>, vector<8x1xf32>,
      %cst_29 = arith.constant 0.000000e+00 : f32
      %38 = vector.broadcast %cst_29 : f32 to vector<8x1xf32>
      %c0_30 = arith.constant 0 : index
      %c0_31 = arith.constant 0 : index
      %39 = vector.load %arg8[%c0_30, %c0_31] : memref<8x1xf32, #tpu.memory_space<vmem>>, vector<8x1xf32>
      tpu.vector_store %arg8[%c0_30, %c0_31], %38 {strides = array<i32>} : memref<8x1xf32, #tpu.memory_space<vmem>>, vector<8x1xf32>,
      %cst_32 = arith.constant 0.000000e+00 : f32
      %40 = vector.broadcast %cst_32 : f32 to vector<8x8xf32>
      %c0_33 = arith.constant 0 : index
      %c0_34 = arith.constant 0 : index
      %41 = vector.load %arg9[%c0_33, %c0_34] : memref<8x8xf32, #tpu.memory_space<vmem>>, vector<8x8xf32>
      tpu.vector_store %arg9[%c0_33, %c0_34], %40 {strides = array<i32>} : memref<8x8xf32, #tpu.memory_space<vmem>>, vector<8x8xf32>,
    } else {
    }
    %c0 = arith.constant 0 : index
    %c0_1 = arith.constant 0 : index
    %c0_2 = arith.constant 0 : index
    %3 = vector.load %arg3[%c0, %c0_1, %c0_2] : memref<1x8x8xbf16, #tpu.memory_space<vmem>>, vector<1x8x8xbf16>
    %4 = vector.shape_cast %3 : vector<1x8x8xbf16> to vector<8x8xbf16>
    %c0_3 = arith.constant 0 : index
    %c0_4 = arith.constant 0 : index
    %c0_5 = arith.constant 0 : index
    %5 = vector.load %arg4[%c0_3, %c0_4, %c0_5] : memref<1x8x8xbf16, #tpu.memory_space<vmem>>, vector<1x8x8xbf16>
    %6 = vector.shape_cast %5 : vector<1x8x8xbf16> to vector<8x8xbf16>
    %cst = arith.constant dense<0.000000e+00> : vector<8x8xf32>
    %7 = tpu.matmul %4, %6, %cst {dimension_numbers = #tpu.dot_dimension_numbers<[1], [1], [0], [0], [0, 0, 1, 0], [], []>} : vector<8x8xbf16>, vector<8x8xbf16>, vector<8x8xf32> -> vector<8x8xf32>
    %c0_6 = arith.constant 0 : index
    %c0_7 = arith.constant 0 : index
    %8 = vector.load %arg7[%c0_6, %c0_7] : memref<8x1xf32, #tpu.memory_space<vmem>>, vector<8x1xf32>
    %cst_8 = arith.constant dense<0xFF800000> : vector<8xf32>
    %9 = vector.multi_reduction <maximumf>, %7, %cst_8 [1] : vector<8x8xf32> to vector<8xf32>
    %10 = vector.shape_cast %9 : vector<8xf32> to vector<8x1xf32>
    %11 = arith.maximumf %8, %10 : vector<8x1xf32>
    %12 = arith.subf %8, %11 : vector<8x1xf32>
    %13 = math.exp %12 : vector<8x1xf32>
    %14 = vector.broadcast %11 : vector<8x1xf32> to vector<8x8xf32>
    %15 = arith.subf %7, %14 : vector<8x8xf32>
    %16 = math.exp %15 : vector<8x8xf32>
    %c0_9 = arith.constant 0 : index
    %c0_10 = arith.constant 0 : index
    %17 = vector.load %arg8[%c0_9, %c0_10] : memref<8x1xf32, #tpu.memory_space<vmem>>, vector<8x1xf32>
    %18 = arith.mulf %13, %17 : vector<8x1xf32>
    %cst_11 = arith.constant dense<0.000000e+00> : vector<8xf32>
    %19 = vector.multi_reduction <add>, %16, %cst_11 [1] : vector<8x8xf32> to vector<8xf32>
    %20 = vector.shape_cast %19 : vector<8xf32> to vector<8x1xf32>
    %21 = arith.addf %18, %20 : vector<8x1xf32>
    %c0_12 = arith.constant 0 : index
    %c0_13 = arith.constant 0 : index
    %22 = vector.load %arg8[%c0_12, %c0_13] : memref<8x1xf32, #tpu.memory_space<vmem>>, vector<8x1xf32>
    tpu.vector_store %arg8[%c0_12, %c0_13], %21 {strides = array<i32>} : memref<8x1xf32, #tpu.memory_space<vmem>>, vector<8x1xf32>,
    %c0_14 = arith.constant 0 : index
    %c0_15 = arith.constant 0 : index
    %23 = vector.load %arg9[%c0_14, %c0_15] : memref<8x8xf32, #tpu.memory_space<vmem>>, vector<8x8xf32>
    %24 = vector.broadcast %13 : vector<8x1xf32> to vector<8x8xf32>
    %25 = arith.mulf %24, %23 : vector<8x8xf32>
    %26 = arith.truncf %16 : vector<8x8xf32> to vector<8x8xbf16>
    %c0_16 = arith.constant 0 : index
    %c0_17 = arith.constant 0 : index
    %c0_18 = arith.constant 0 : index
    %27 = vector.load %arg5[%c0_16, %c0_17, %c0_18] : memref<1x8x8xbf16, #tpu.memory_space<vmem>>, vector<1x8x8xbf16>
    %28 = vector.shape_cast %27 : vector<1x8x8xbf16> to vector<8x8xbf16>
    %cst_19 = arith.constant dense<0.000000e+00> : vector<8x8xf32>
    %29 = tpu.matmul %26, %28, %cst_19 {dimension_numbers = #tpu.dot_dimension_numbers<[1], [0], [0], [1], [0, 0, 1, 1], [], []>} : vector<8x8xbf16>, vector<8x8xbf16>, vector<8x8xf32> -> vector<8x8xf32>
    %30 = arith.addf %25, %29 : vector<8x8xf32>
    %c0_20 = arith.constant 0 : index
    %c0_21 = arith.constant 0 : index
    %31 = vector.load %arg9[%c0_20, %c0_21] : memref<8x8xf32, #tpu.memory_space<vmem>>, vector<8x8xf32>
    tpu.vector_store %arg9[%c0_20, %c0_21], %30 {strides = array<i32>} : memref<8x8xf32, #tpu.memory_space<vmem>>, vector<8x8xf32>,
    %c0_22 = arith.constant 0 : index
    %c0_23 = arith.constant 0 : index
    %32 = vector.load %arg7[%c0_22, %c0_23] : memref<8x1xf32, #tpu.memory_space<vmem>>, vector<8x1xf32>
    tpu.vector_store %arg7[%c0_22, %c0_23], %11 {strides = array<i32>} : memref<8x1xf32, #tpu.memory_space<vmem>>, vector<8x1xf32>,
    %c0_i32_24 = arith.constant 0 : i32
    %33 = arith.cmpi eq, %arg2, %c0_i32_24 : i32
    %34 = arith.extui %33 : i1 to i32
    %c0_i32_25 = arith.constant 0 : i32
    %35 = arith.cmpi ne, %34, %c0_i32_25 : i32
    scf.if %35 {
      %c0_26 = arith.constant 0 : index
      %c0_27 = arith.constant 0 : index
      %36 = vector.load %arg9[%c0_26, %c0_27] : memref<8x8xf32, #tpu.memory_space<vmem>>, vector<8x8xf32>
      %c0_28 = arith.constant 0 : index
      %c0_29 = arith.constant 0 : index
      %37 = vector.load %arg8[%c0_28, %c0_29] : memref<8x1xf32, #tpu.memory_space<vmem>>, vector<8x1xf32>
      %38 = tpu.reciprocal %37 : vector<8x1xf32> -> vector<8x1xf32>
      %39 = vector.broadcast %38 : vector<8x1xf32> to vector<8x8xf32>
      %40 = arith.mulf %36, %39 : vector<8x8xf32>
      %41 = arith.truncf %40 : vector<8x8xf32> to vector<8x8xbf16>
      %c0_30 = arith.constant 0 : index
      %c0_31 = arith.constant 0 : index
      %c0_32 = arith.constant 0 : index
      %42 = vector.load %arg6[%c0_30, %c0_31, %c0_32] : memref<1x8x8xbf16, #tpu.memory_space<vmem>>, vector<1x8x8xbf16>
      %43 = vector.shape_cast %42 : vector<1x8x8xbf16> to vector<8x8xbf16>
      %44 = vector.shape_cast %41 : vector<8x8xbf16> to vector<1x8x8xbf16>
      tpu.vector_store %arg6[%c0_30, %c0_31, %c0_32], %44 {strides = array<i32>} : memref<1x8x8xbf16, #tpu.memory_space<vmem>>, vector<1x8x8xbf16>,
    } else {
    }
    return
  }
  func.func @transform_0(%arg0: i32, %arg1: i32, %arg2: i32) -> (i32, i32, i32) {
    %c0_i32 = arith.constant 0 : i32
    %c0_i32_0 = arith.constant 0 : i32
    return %arg0, %arg1, %c0_i32 : i32, i32, i32
  }
  func.func @transform_1(%arg0: i32, %arg1: i32, %arg2: i32) -> (i32, i32, i32) {
    %c0_i32 = arith.constant 0 : i32
    %c0_i32_0 = arith.constant 0 : i32
    return %arg0, %arg2, %c0_i32 : i32, i32, i32
  }
  func.func @transform_2(%arg0: i32, %arg1: i32, %arg2: i32) -> (i32, i32, i32) {
    %c0_i32 = arith.constant 0 : i32
    %c0_i32_0 = arith.constant 0 : i32
    return %arg0, %arg2, %c0_i32 : i32, i32, i32
  }
  func.func @transform_3(%arg0: i32, %arg1: i32, %arg2: i32) -> (i32, i32, i32) {
    %c0_i32 = arith.constant 0 : i32
    %c0_i32_0 = arith.constant 0 : i32
    return %arg0, %arg1, %c0_i32 : i32, i32, i32
  }
}

module attributes {stable_mosaic.version = 11 : i64} {
  func.func @_wo_residual_kernel(%arg0: i32, %arg1: memref<16x32xbf16, #tpu.memory_space<vmem>>, %arg2: memref<16x32xf32, #tpu.memory_space<vmem>>, %arg3: memref<32x32xbf16, #tpu.memory_space<vmem>>, %arg4: memref<16x32xf32, #tpu.memory_space<vmem>>) attributes {dimension_semantics = [#tpu.dimension_semantics<parallel>], iteration_bounds = array<i64: 1>, scalar_prefetch = 0 : i64, scratch_operands = 0 : i64, tpu.core_type = #tpu.core_type<tc>, window_params = [{transform_indices = @transform_0, window_bounds = array<i64: 16, 32>}, {transform_indices = @transform_1, window_bounds = array<i64: 16, 32>}, {pipeline_mode = #tpu.pipeline_mode<synchronous>, transform_indices = @transform_2, window_bounds = array<i64: 32, 32>}, {transform_indices = @transform_3, window_bounds = array<i64: 16, 32>}]} {
    %c0 = arith.constant 0 : index
    %c0_0 = arith.constant 0 : index
    %0 = vector.load %arg2[%c0, %c0_0] : memref<16x32xf32, #tpu.memory_space<vmem>>, vector<16x32xf32>
    %c0_1 = arith.constant 0 : index
    %c0_2 = arith.constant 0 : index
    %1 = vector.load %arg1[%c0_1, %c0_2] : memref<16x32xbf16, #tpu.memory_space<vmem>>, vector<16x32xbf16>
    %c0_3 = arith.constant 0 : index
    %c0_4 = arith.constant 0 : index
    %2 = vector.load %arg3[%c0_3, %c0_4] : memref<32x32xbf16, #tpu.memory_space<vmem>>, vector<32x32xbf16>
    %cst = arith.constant dense<0.000000e+00> : vector<16x32xf32>
    %3 = tpu.matmul %1, %2, %cst {dimension_numbers = #tpu.dot_dimension_numbers<[1], [0], [0], [1], [0, 0, 1, 1], [], []>} : vector<16x32xbf16>, vector<32x32xbf16>, vector<16x32xf32> -> vector<16x32xf32>
    %4 = arith.addf %0, %3 : vector<16x32xf32>
    %c0_5 = arith.constant 0 : index
    %c0_6 = arith.constant 0 : index
    %5 = vector.load %arg4[%c0_5, %c0_6] : memref<16x32xf32, #tpu.memory_space<vmem>>, vector<16x32xf32>
    tpu.vector_store %arg4[%c0_5, %c0_6], %4 {strides = array<i32>} : memref<16x32xf32, #tpu.memory_space<vmem>>, vector<16x32xf32>,
    return
  }
  func.func @transform_0(%arg0: i32) -> (i32, i32) {
    %c0_i32 = arith.constant 0 : i32
    %c0_i32_0 = arith.constant 0 : i32
    return %arg0, %c0_i32 : i32, i32
  }
  func.func @transform_1(%arg0: i32) -> (i32, i32) {
    %c0_i32 = arith.constant 0 : i32
    %c0_i32_0 = arith.constant 0 : i32
    return %arg0, %c0_i32 : i32, i32
  }
  func.func @transform_2(%arg0: i32) -> (i32, i32) {
    %c0_i32 = arith.constant 0 : i32
    %c0_i32_0 = arith.constant 0 : i32
    %c0_i32_1 = arith.constant 0 : i32
    return %c0_i32, %c0_i32_0 : i32, i32
  }
  func.func @transform_3(%arg0: i32) -> (i32, i32) {
    %c0_i32 = arith.constant 0 : i32
    %c0_i32_0 = arith.constant 0 : i32
    return %arg0, %c0_i32 : i32, i32
  }
}

module attributes {stable_mosaic.version = 11 : i64} {
  func.func @_film_ffn_kernel(%arg0: i32, %arg1: i32, %arg2: i32, %arg3: memref<1x8x32xf32, #tpu.memory_space<vmem>>, %arg4: memref<1x1x32xf32, #tpu.memory_space<vmem>>, %arg5: memref<1x1x32xf32, #tpu.memory_space<vmem>>, %arg6: memref<32x128xbf16, #tpu.memory_space<vmem>>, %arg7: memref<32x128xbf16, #tpu.memory_space<vmem>>, %arg8: memref<128x32xbf16, #tpu.memory_space<vmem>>, %arg9: memref<1x8x32xf32, #tpu.memory_space<vmem>>, %arg10: memref<8x32xbf16, #tpu.memory_space<vmem>>, %arg11: memref<8x32xf32, #tpu.memory_space<vmem>>) attributes {dimension_semantics = [#tpu.dimension_semantics<parallel>, #tpu.dimension_semantics<parallel>, #tpu.dimension_semantics<arbitrary>], iteration_bounds = array<i64: 2, 1, 1>, scalar_prefetch = 0 : i64, scratch_operands = 2 : i64, tpu.core_type = #tpu.core_type<tc>, window_params = [{transform_indices = @transform_0, window_bounds = array<i64: 1, 8, 32>}, {transform_indices = @transform_1, window_bounds = array<i64: 1, 1, 32>}, {transform_indices = @transform_2, window_bounds = array<i64: 1, 1, 32>}, {transform_indices = @transform_3, window_bounds = array<i64: 32, 128>}, {transform_indices = @transform_4, window_bounds = array<i64: 32, 128>}, {transform_indices = @transform_5, window_bounds = array<i64: 128, 32>}, {transform_indices = @transform_6, window_bounds = array<i64: 1, 8, 32>}]} {
    %c0_i32 = arith.constant 0 : i32
    %0 = arith.cmpi eq, %arg2, %c0_i32 : i32
    %1 = arith.extui %0 : i1 to i32
    %c0_i32_0 = arith.constant 0 : i32
    %2 = arith.cmpi ne, %1, %c0_i32_0 : i32
    scf.if %2 {
      %c0_17 = arith.constant 0 : index
      %c0_18 = arith.constant 0 : index
      %c0_19 = arith.constant 0 : index
      %24 = vector.load %arg3[%c0_17, %c0_18, %c0_19] : memref<1x8x32xf32, #tpu.memory_space<vmem>>, vector<1x8x32xf32>
      %25 = vector.shape_cast %24 : vector<1x8x32xf32> to vector<8x32xf32>
      %cst_20 = arith.constant dense<0.000000e+00> : vector<8xf32>
      %26 = vector.multi_reduction <add>, %25, %cst_20 [1] : vector<8x32xf32> to vector<8xf32>
      %27 = vector.shape_cast %26 : vector<8xf32> to vector<8x1xf32>
      %cst_21 = arith.constant 3.200000e+01 : f32
      %28 = vector.broadcast %cst_21 : f32 to vector<8x1xf32>
      %29 = arith.divf %27, %28 : vector<8x1xf32>
      %30 = vector.broadcast %29 : vector<8x1xf32> to vector<8x32xf32>
      %31 = arith.subf %25, %30 : vector<8x32xf32>
      %32 = arith.mulf %31, %31 : vector<8x32xf32>
      %cst_22 = arith.constant dense<0.000000e+00> : vector<8xf32>
      %33 = vector.multi_reduction <add>, %32, %cst_22 [1] : vector<8x32xf32> to vector<8xf32>
      %34 = vector.shape_cast %33 : vector<8xf32> to vector<8x1xf32>
      %cst_23 = arith.constant 3.200000e+01 : f32
      %35 = vector.broadcast %cst_23 : f32 to vector<8x1xf32>
      %36 = arith.divf %34, %35 : vector<8x1xf32>
      %37 = vector.broadcast %29 : vector<8x1xf32> to vector<8x32xf32>
      %38 = arith.subf %25, %37 : vector<8x32xf32>
      %cst_24 = arith.constant 9.99999974E-6 : f32
      %39 = vector.broadcast %cst_24 : f32 to vector<8x1xf32>
      %40 = arith.addf %36, %39 : vector<8x1xf32>
      %41 = math.rsqrt %40 : vector<8x1xf32>
      %42 = vector.broadcast %41 : vector<8x1xf32> to vector<8x32xf32>
      %43 = arith.mulf %38, %42 : vector<8x32xf32>
      %c0_25 = arith.constant 0 : index
      %c0_26 = arith.constant 0 : index
      %c0_27 = arith.constant 0 : index
      %44 = vector.load %arg4[%c0_25, %c0_26, %c0_27] : memref<1x1x32xf32, #tpu.memory_space<vmem>>, vector<1x1x32xf32>
      %45 = vector.shape_cast %44 : vector<1x1x32xf32> to vector<1x32xf32>
      %46 = vector.broadcast %45 : vector<1x32xf32> to vector<8x32xf32>
      %47 = arith.mulf %43, %46 : vector<8x32xf32>
      %c0_28 = arith.constant 0 : index
      %c0_29 = arith.constant 0 : index
      %c0_30 = arith.constant 0 : index
      %48 = vector.load %arg5[%c0_28, %c0_29, %c0_30] : memref<1x1x32xf32, #tpu.memory_space<vmem>>, vector<1x1x32xf32>
      %49 = vector.shape_cast %48 : vector<1x1x32xf32> to vector<1x32xf32>
      %50 = vector.broadcast %49 : vector<1x32xf32> to vector<8x32xf32>
      %51 = arith.addf %47, %50 : vector<8x32xf32>
      %52 = arith.truncf %51 : vector<8x32xf32> to vector<8x32xbf16>
      %c0_31 = arith.constant 0 : index
      %c0_32 = arith.constant 0 : index
      %53 = vector.load %arg10[%c0_31, %c0_32] : memref<8x32xbf16, #tpu.memory_space<vmem>>, vector<8x32xbf16>
      tpu.vector_store %arg10[%c0_31, %c0_32], %52 {strides = array<i32>} : memref<8x32xbf16, #tpu.memory_space<vmem>>, vector<8x32xbf16>,
      %cst_33 = arith.constant 0.000000e+00 : f32
      %54 = vector.broadcast %cst_33 : f32 to vector<8x32xf32>
      %c0_34 = arith.constant 0 : index
      %c0_35 = arith.constant 0 : index
      %55 = vector.load %arg11[%c0_34, %c0_35] : memref<8x32xf32, #tpu.memory_space<vmem>>, vector<8x32xf32>
      tpu.vector_store %arg11[%c0_34, %c0_35], %54 {strides = array<i32>} : memref<8x32xf32, #tpu.memory_space<vmem>>, vector<8x32xf32>,
    } else {
    }
    %c0 = arith.constant 0 : index
    %c0_1 = arith.constant 0 : index
    %3 = vector.load %arg10[%c0, %c0_1] : memref<8x32xbf16, #tpu.memory_space<vmem>>, vector<8x32xbf16>
    %c0_2 = arith.constant 0 : index
    %c0_3 = arith.constant 0 : index
    %4 = vector.load %arg6[%c0_2, %c0_3] : memref<32x128xbf16, #tpu.memory_space<vmem>>, vector<32x128xbf16>
    %cst = arith.constant dense<0.000000e+00> : vector<8x128xf32>
    %5 = tpu.matmul %3, %4, %cst {dimension_numbers = #tpu.dot_dimension_numbers<[1], [0], [0], [1], [0, 0, 1, 1], [], []>} : vector<8x32xbf16>, vector<32x128xbf16>, vector<8x128xf32> -> vector<8x128xf32>
    %c0_4 = arith.constant 0 : index
    %c0_5 = arith.constant 0 : index
    %6 = vector.load %arg7[%c0_4, %c0_5] : memref<32x128xbf16, #tpu.memory_space<vmem>>, vector<32x128xbf16>
    %cst_6 = arith.constant dense<0.000000e+00> : vector<8x128xf32>
    %7 = tpu.matmul %3, %6, %cst_6 {dimension_numbers = #tpu.dot_dimension_numbers<[1], [0], [0], [1], [0, 0, 1, 1], [], []>} : vector<8x32xbf16>, vector<32x128xbf16>, vector<8x128xf32> -> vector<8x128xf32>
    %8 = arith.negf %5 : vector<8x128xf32>
    %9 = math.exp %8 : vector<8x128xf32>
    %cst_7 = arith.constant 1.000000e+00 : f32
    %10 = vector.broadcast %cst_7 : f32 to vector<8x128xf32>
    %11 = arith.addf %10, %9 : vector<8x128xf32>
    %12 = arith.divf %10, %11 : vector<8x128xf32>
    %13 = arith.mulf %5, %12 : vector<8x128xf32>
    %14 = arith.mulf %13, %7 : vector<8x128xf32>
    %c0_8 = arith.constant 0 : index
    %c0_9 = arith.constant 0 : index
    %15 = vector.load %arg11[%c0_8, %c0_9] : memref<8x32xf32, #tpu.memory_space<vmem>>, vector<8x32xf32>
    %16 = arith.truncf %14 : vector<8x128xf32> to vector<8x128xbf16>
    %c0_10 = arith.constant 0 : index
    %c0_11 = arith.constant 0 : index
    %17 = vector.load %arg8[%c0_10, %c0_11] : memref<128x32xbf16, #tpu.memory_space<vmem>>, vector<128x32xbf16>
    %cst_12 = arith.constant dense<0.000000e+00> : vector<8x32xf32>
    %18 = tpu.matmul %16, %17, %cst_12 {dimension_numbers = #tpu.dot_dimension_numbers<[1], [0], [0], [1], [0, 0, 1, 1], [], []>} : vector<8x128xbf16>, vector<128x32xbf16>, vector<8x32xf32> -> vector<8x32xf32>
    %19 = arith.addf %15, %18 : vector<8x32xf32>
    %c0_13 = arith.constant 0 : index
    %c0_14 = arith.constant 0 : index
    %20 = vector.load %arg11[%c0_13, %c0_14] : memref<8x32xf32, #tpu.memory_space<vmem>>, vector<8x32xf32>
    tpu.vector_store %arg11[%c0_13, %c0_14], %19 {strides = array<i32>} : memref<8x32xf32, #tpu.memory_space<vmem>>, vector<8x32xf32>,
    %c0_i32_15 = arith.constant 0 : i32
    %21 = arith.cmpi eq, %arg2, %c0_i32_15 : i32
    %22 = arith.extui %21 : i1 to i32
    %c0_i32_16 = arith.constant 0 : i32
    %23 = arith.cmpi ne, %22, %c0_i32_16 : i32
    scf.if %23 {
      %c0_17 = arith.constant 0 : index
      %c0_18 = arith.constant 0 : index
      %c0_19 = arith.constant 0 : index
      %24 = vector.load %arg3[%c0_17, %c0_18, %c0_19] : memref<1x8x32xf32, #tpu.memory_space<vmem>>, vector<1x8x32xf32>
      %25 = vector.shape_cast %24 : vector<1x8x32xf32> to vector<8x32xf32>
      %c0_20 = arith.constant 0 : index
      %c0_21 = arith.constant 0 : index
      %26 = vector.load %arg11[%c0_20, %c0_21] : memref<8x32xf32, #tpu.memory_space<vmem>>, vector<8x32xf32>
      %27 = arith.addf %25, %26 : vector<8x32xf32>
      %c0_22 = arith.constant 0 : index
      %c0_23 = arith.constant 0 : index
      %c0_24 = arith.constant 0 : index
      %28 = vector.load %arg9[%c0_22, %c0_23, %c0_24] : memref<1x8x32xf32, #tpu.memory_space<vmem>>, vector<1x8x32xf32>
      %29 = vector.shape_cast %28 : vector<1x8x32xf32> to vector<8x32xf32>
      %30 = vector.shape_cast %27 : vector<8x32xf32> to vector<1x8x32xf32>
      tpu.vector_store %arg9[%c0_22, %c0_23, %c0_24], %30 {strides = array<i32>} : memref<1x8x32xf32, #tpu.memory_space<vmem>>, vector<1x8x32xf32>,
    } else {
    }
    return
  }
  func.func @transform_0(%arg0: i32, %arg1: i32, %arg2: i32) -> (i32, i32, i32) {
    %c0_i32 = arith.constant 0 : i32
    %c0_i32_0 = arith.constant 0 : i32
    return %arg0, %arg1, %c0_i32 : i32, i32, i32
  }
  func.func @transform_1(%arg0: i32, %arg1: i32, %arg2: i32) -> (i32, i32, i32) {
    %c0_i32 = arith.constant 0 : i32
    %c0_i32_0 = arith.constant 0 : i32
    %c0_i32_1 = arith.constant 0 : i32
    return %arg0, %c0_i32, %c0_i32_0 : i32, i32, i32
  }
  func.func @transform_2(%arg0: i32, %arg1: i32, %arg2: i32) -> (i32, i32, i32) {
    %c0_i32 = arith.constant 0 : i32
    %c0_i32_0 = arith.constant 0 : i32
    %c0_i32_1 = arith.constant 0 : i32
    return %arg0, %c0_i32, %c0_i32_0 : i32, i32, i32
  }
  func.func @transform_3(%arg0: i32, %arg1: i32, %arg2: i32) -> (i32, i32) {
    %c0_i32 = arith.constant 0 : i32
    %c0_i32_0 = arith.constant 0 : i32
    return %c0_i32, %arg2 : i32, i32
  }
  func.func @transform_4(%arg0: i32, %arg1: i32, %arg2: i32) -> (i32, i32) {
    %c0_i32 = arith.constant 0 : i32
    %c0_i32_0 = arith.constant 0 : i32
    return %c0_i32, %arg2 : i32, i32
  }
  func.func @transform_5(%arg0: i32, %arg1: i32, %arg2: i32) -> (i32, i32) {
    %c0_i32 = arith.constant 0 : i32
    %c0_i32_0 = arith.constant 0 : i32
    return %arg2, %c0_i32 : i32, i32
  }
  func.func @transform_6(%arg0: i32, %arg1: i32, %arg2: i32) -> (i32, i32, i32) {
    %c0_i32 = arith.constant 0 : i32
    %c0_i32_0 = arith.constant 0 : i32
    return %arg0, %arg1, %c0_i32 : i32, i32, i32
  }
}

module attributes {stable_mosaic.version = 11 : i64} {
  func.func @_film_ffn_kernel(%arg0: i32, %arg1: i32, %arg2: i32, %arg3: memref<1x8x32xf32, #tpu.memory_space<vmem>>, %arg4: memref<1x1x32xf32, #tpu.memory_space<vmem>>, %arg5: memref<1x1x32xf32, #tpu.memory_space<vmem>>, %arg6: memref<32x128xbf16, #tpu.memory_space<vmem>>, %arg7: memref<32x128xbf16, #tpu.memory_space<vmem>>, %arg8: memref<128x32xbf16, #tpu.memory_space<vmem>>, %arg9: memref<1x8x32xf32, #tpu.memory_space<vmem>>, %arg10: memref<8x32xbf16, #tpu.memory_space<vmem>>, %arg11: memref<8x32xf32, #tpu.memory_space<vmem>>) attributes {dimension_semantics = [#tpu.dimension_semantics<parallel>, #tpu.dimension_semantics<parallel>, #tpu.dimension_semantics<arbitrary>], iteration_bounds = array<i64: 2, 1, 1>, scalar_prefetch = 0 : i64, scratch_operands = 2 : i64, tpu.core_type = #tpu.core_type<tc>, window_params = [{transform_indices = @transform_0, window_bounds = array<i64: 1, 8, 32>}, {transform_indices = @transform_1, window_bounds = array<i64: 1, 1, 32>}, {transform_indices = @transform_2, window_bounds = array<i64: 1, 1, 32>}, {transform_indices = @transform_3, window_bounds = array<i64: 32, 128>}, {transform_indices = @transform_4, window_bounds = array<i64: 32, 128>}, {transform_indices = @transform_5, window_bounds = array<i64: 128, 32>}, {transform_indices = @transform_6, window_bounds = array<i64: 1, 8, 32>}]} {
    %c0_i32 = arith.constant 0 : i32
    %0 = arith.cmpi eq, %arg2, %c0_i32 : i32
    %1 = arith.extui %0 : i1 to i32
    %c0_i32_0 = arith.constant 0 : i32
    %2 = arith.cmpi ne, %1, %c0_i32_0 : i32
    scf.if %2 {
      %c0_17 = arith.constant 0 : index
      %c0_18 = arith.constant 0 : index
      %c0_19 = arith.constant 0 : index
      %24 = vector.load %arg3[%c0_17, %c0_18, %c0_19] : memref<1x8x32xf32, #tpu.memory_space<vmem>>, vector<1x8x32xf32>
      %25 = vector.shape_cast %24 : vector<1x8x32xf32> to vector<8x32xf32>
      %cst_20 = arith.constant dense<0.000000e+00> : vector<8xf32>
      %26 = vector.multi_reduction <add>, %25, %cst_20 [1] : vector<8x32xf32> to vector<8xf32>
      %27 = vector.shape_cast %26 : vector<8xf32> to vector<8x1xf32>
      %cst_21 = arith.constant 3.200000e+01 : f32
      %28 = vector.broadcast %cst_21 : f32 to vector<8x1xf32>
      %29 = arith.divf %27, %28 : vector<8x1xf32>
      %30 = vector.broadcast %29 : vector<8x1xf32> to vector<8x32xf32>
      %31 = arith.subf %25, %30 : vector<8x32xf32>
      %32 = arith.mulf %31, %31 : vector<8x32xf32>
      %cst_22 = arith.constant dense<0.000000e+00> : vector<8xf32>
      %33 = vector.multi_reduction <add>, %32, %cst_22 [1] : vector<8x32xf32> to vector<8xf32>
      %34 = vector.shape_cast %33 : vector<8xf32> to vector<8x1xf32>
      %cst_23 = arith.constant 3.200000e+01 : f32
      %35 = vector.broadcast %cst_23 : f32 to vector<8x1xf32>
      %36 = arith.divf %34, %35 : vector<8x1xf32>
      %37 = vector.broadcast %29 : vector<8x1xf32> to vector<8x32xf32>
      %38 = arith.subf %25, %37 : vector<8x32xf32>
      %cst_24 = arith.constant 9.99999974E-6 : f32
      %39 = vector.broadcast %cst_24 : f32 to vector<8x1xf32>
      %40 = arith.addf %36, %39 : vector<8x1xf32>
      %41 = math.rsqrt %40 : vector<8x1xf32>
      %42 = vector.broadcast %41 : vector<8x1xf32> to vector<8x32xf32>
      %43 = arith.mulf %38, %42 : vector<8x32xf32>
      %c0_25 = arith.constant 0 : index
      %c0_26 = arith.constant 0 : index
      %c0_27 = arith.constant 0 : index
      %44 = vector.load %arg4[%c0_25, %c0_26, %c0_27] : memref<1x1x32xf32, #tpu.memory_space<vmem>>, vector<1x1x32xf32>
      %45 = vector.shape_cast %44 : vector<1x1x32xf32> to vector<1x32xf32>
      %46 = vector.broadcast %45 : vector<1x32xf32> to vector<8x32xf32>
      %47 = arith.mulf %43, %46 : vector<8x32xf32>
      %c0_28 = arith.constant 0 : index
      %c0_29 = arith.constant 0 : index
      %c0_30 = arith.constant 0 : index
      %48 = vector.load %arg5[%c0_28, %c0_29, %c0_30] : memref<1x1x32xf32, #tpu.memory_space<vmem>>, vector<1x1x32xf32>
      %49 = vector.shape_cast %48 : vector<1x1x32xf32> to vector<1x32xf32>
      %50 = vector.broadcast %49 : vector<1x32xf32> to vector<8x32xf32>
      %51 = arith.addf %47, %50 : vector<8x32xf32>
      %52 = arith.truncf %51 : vector<8x32xf32> to vector<8x32xbf16>
      %c0_31 = arith.constant 0 : index
      %c0_32 = arith.constant 0 : index
      %53 = vector.load %arg10[%c0_31, %c0_32] : memref<8x32xbf16, #tpu.memory_space<vmem>>, vector<8x32xbf16>
      tpu.vector_store %arg10[%c0_31, %c0_32], %52 {strides = array<i32>} : memref<8x32xbf16, #tpu.memory_space<vmem>>, vector<8x32xbf16>,
      %cst_33 = arith.constant 0.000000e+00 : f32
      %54 = vector.broadcast %cst_33 : f32 to vector<8x32xf32>
      %c0_34 = arith.constant 0 : index
      %c0_35 = arith.constant 0 : index
      %55 = vector.load %arg11[%c0_34, %c0_35] : memref<8x32xf32, #tpu.memory_space<vmem>>, vector<8x32xf32>
      tpu.vector_store %arg11[%c0_34, %c0_35], %54 {strides = array<i32>} : memref<8x32xf32, #tpu.memory_space<vmem>>, vector<8x32xf32>,
    } else {
    }
    %c0 = arith.constant 0 : index
    %c0_1 = arith.constant 0 : index
    %3 = vector.load %arg10[%c0, %c0_1] : memref<8x32xbf16, #tpu.memory_space<vmem>>, vector<8x32xbf16>
    %c0_2 = arith.constant 0 : index
    %c0_3 = arith.constant 0 : index
    %4 = vector.load %arg6[%c0_2, %c0_3] : memref<32x128xbf16, #tpu.memory_space<vmem>>, vector<32x128xbf16>
    %cst = arith.constant dense<0.000000e+00> : vector<8x128xf32>
    %5 = tpu.matmul %3, %4, %cst {dimension_numbers = #tpu.dot_dimension_numbers<[1], [0], [0], [1], [0, 0, 1, 1], [], []>} : vector<8x32xbf16>, vector<32x128xbf16>, vector<8x128xf32> -> vector<8x128xf32>
    %c0_4 = arith.constant 0 : index
    %c0_5 = arith.constant 0 : index
    %6 = vector.load %arg7[%c0_4, %c0_5] : memref<32x128xbf16, #tpu.memory_space<vmem>>, vector<32x128xbf16>
    %cst_6 = arith.constant dense<0.000000e+00> : vector<8x128xf32>
    %7 = tpu.matmul %3, %6, %cst_6 {dimension_numbers = #tpu.dot_dimension_numbers<[1], [0], [0], [1], [0, 0, 1, 1], [], []>} : vector<8x32xbf16>, vector<32x128xbf16>, vector<8x128xf32> -> vector<8x128xf32>
    %8 = arith.negf %5 : vector<8x128xf32>
    %9 = math.exp %8 : vector<8x128xf32>
    %cst_7 = arith.constant 1.000000e+00 : f32
    %10 = vector.broadcast %cst_7 : f32 to vector<8x128xf32>
    %11 = arith.addf %10, %9 : vector<8x128xf32>
    %12 = arith.divf %10, %11 : vector<8x128xf32>
    %13 = arith.mulf %5, %12 : vector<8x128xf32>
    %14 = arith.mulf %13, %7 : vector<8x128xf32>
    %c0_8 = arith.constant 0 : index
    %c0_9 = arith.constant 0 : index
    %15 = vector.load %arg11[%c0_8, %c0_9] : memref<8x32xf32, #tpu.memory_space<vmem>>, vector<8x32xf32>
    %16 = arith.truncf %14 : vector<8x128xf32> to vector<8x128xbf16>
    %c0_10 = arith.constant 0 : index
    %c0_11 = arith.constant 0 : index
    %17 = vector.load %arg8[%c0_10, %c0_11] : memref<128x32xbf16, #tpu.memory_space<vmem>>, vector<128x32xbf16>
    %cst_12 = arith.constant dense<0.000000e+00> : vector<8x32xf32>
    %18 = tpu.matmul %16, %17, %cst_12 {dimension_numbers = #tpu.dot_dimension_numbers<[1], [0], [0], [1], [0, 0, 1, 1], [], []>} : vector<8x128xbf16>, vector<128x32xbf16>, vector<8x32xf32> -> vector<8x32xf32>
    %19 = arith.addf %15, %18 : vector<8x32xf32>
    %c0_13 = arith.constant 0 : index
    %c0_14 = arith.constant 0 : index
    %20 = vector.load %arg11[%c0_13, %c0_14] : memref<8x32xf32, #tpu.memory_space<vmem>>, vector<8x32xf32>
    tpu.vector_store %arg11[%c0_13, %c0_14], %19 {strides = array<i32>} : memref<8x32xf32, #tpu.memory_space<vmem>>, vector<8x32xf32>,
    %c0_i32_15 = arith.constant 0 : i32
    %21 = arith.cmpi eq, %arg2, %c0_i32_15 : i32
    %22 = arith.extui %21 : i1 to i32
    %c0_i32_16 = arith.constant 0 : i32
    %23 = arith.cmpi ne, %22, %c0_i32_16 : i32
    scf.if %23 {
      %c0_17 = arith.constant 0 : index
      %c0_18 = arith.constant 0 : index
      %c0_19 = arith.constant 0 : index
      %24 = vector.load %arg3[%c0_17, %c0_18, %c0_19] : memref<1x8x32xf32, #tpu.memory_space<vmem>>, vector<1x8x32xf32>
      %25 = vector.shape_cast %24 : vector<1x8x32xf32> to vector<8x32xf32>
      %c0_20 = arith.constant 0 : index
      %c0_21 = arith.constant 0 : index
      %26 = vector.load %arg11[%c0_20, %c0_21] : memref<8x32xf32, #tpu.memory_space<vmem>>, vector<8x32xf32>
      %27 = arith.addf %25, %26 : vector<8x32xf32>
      %c0_22 = arith.constant 0 : index
      %c0_23 = arith.constant 0 : index
      %c0_24 = arith.constant 0 : index
      %28 = vector.load %arg9[%c0_22, %c0_23, %c0_24] : memref<1x8x32xf32, #tpu.memory_space<vmem>>, vector<1x8x32xf32>
      %29 = vector.shape_cast %28 : vector<1x8x32xf32> to vector<8x32xf32>
      %30 = vector.shape_cast %27 : vector<8x32xf32> to vector<1x8x32xf32>
      tpu.vector_store %arg9[%c0_22, %c0_23, %c0_24], %30 {strides = array<i32>} : memref<1x8x32xf32, #tpu.memory_space<vmem>>, vector<1x8x32xf32>,
    } else {
    }
    return
  }
  func.func @transform_0(%arg0: i32, %arg1: i32, %arg2: i32) -> (i32, i32, i32) {
    %c0_i32 = arith.constant 0 : i32
    %c0_i32_0 = arith.constant 0 : i32
    return %arg0, %arg1, %c0_i32 : i32, i32, i32
  }
  func.func @transform_1(%arg0: i32, %arg1: i32, %arg2: i32) -> (i32, i32, i32) {
    %c0_i32 = arith.constant 0 : i32
    %c0_i32_0 = arith.constant 0 : i32
    %c0_i32_1 = arith.constant 0 : i32
    return %arg0, %c0_i32, %c0_i32_0 : i32, i32, i32
  }
  func.func @transform_2(%arg0: i32, %arg1: i32, %arg2: i32) -> (i32, i32, i32) {
    %c0_i32 = arith.constant 0 : i32
    %c0_i32_0 = arith.constant 0 : i32
    %c0_i32_1 = arith.constant 0 : i32
    return %arg0, %c0_i32, %c0_i32_0 : i32, i32, i32
  }
  func.func @transform_3(%arg0: i32, %arg1: i32, %arg2: i32) -> (i32, i32) {
    %c0_i32 = arith.constant 0 : i32
    %c0_i32_0 = arith.constant 0 : i32
    return %c0_i32, %arg2 : i32, i32
  }
  func.func @transform_4(%arg0: i32, %arg1: i32, %arg2: i32) -> (i32, i32) {
    %c0_i32 = arith.constant 0 : i32
    %c0_i32_0 = arith.constant 0 : i32
    return %c0_i32, %arg2 : i32, i32
  }
  func.func @transform_5(%arg0: i32, %arg1: i32, %arg2: i32) -> (i32, i32) {
    %c0_i32 = arith.constant 0 : i32
    %c0_i32_0 = arith.constant 0 : i32
    return %arg2, %c0_i32 : i32, i32
  }
  func.func @transform_6(%arg0: i32, %arg1: i32, %arg2: i32) -> (i32, i32, i32) {
    %c0_i32 = arith.constant 0 : i32
    %c0_i32_0 = arith.constant 0 : i32
    return %arg0, %arg1, %c0_i32 : i32, i32, i32
  }
}

</mosaic_0001>

<llo_original>
// kernel: tile.19
$region0: #{tile.19}
  %s0 = inlined_call_operand.vmem [shape: f32[8,4,8], index: 0, kind: input, shape index: {}]
  %s1 = inlined_call_operand.vmem [shape: f32[8,32], index: 1, kind: output, shape index: {}]
  $region1: #{tile.19} parent=0
    #allocation0 [shape = 'u8[32768]{0}', space=vmem, size = 0x8000, scoped, tag = 'scoped mem for input reshape']
    %s3 = sshllo.u32 0, 4
    %s4 = smul.addr 4, 7
    %s5 = scalar_lea.vmem %s0, %s4
    %v6 = vld [vmem:[%s5] sm:%s3]
    %s7 = scalar_lea.vmem [#allocation0], 56
    %8 = vst [vmem:[%s7] sm:%s3] %v6
    %s9 = smul.addr 4, 6
    %s10 = scalar_lea.vmem %s0, %s9
    %v11 = vld [vmem:[%s10] sm:%s3]
    %s12 = scalar_lea.vmem [#allocation0], 48
    %13 = vst [vmem:[%s12] sm:%s3] %v11
    %s14 = smul.addr 4, 5
    %s15 = scalar_lea.vmem %s0, %s14
    %v16 = vld [vmem:[%s15] sm:%s3]
    %s17 = scalar_lea.vmem [#allocation0], 40
    %18 = vst [vmem:[%s17] sm:%s3] %v16
    %s19 = smul.addr 4, 4
    %s20 = scalar_lea.vmem %s0, %s19
    %v21 = vld [vmem:[%s20] sm:%s3]
    %s22 = scalar_lea.vmem [#allocation0], 32
    %23 = vst [vmem:[%s22] sm:%s3] %v21
    %s24 = smul.addr 4, 3
    %s25 = scalar_lea.vmem %s0, %s24
    %v26 = vld [vmem:[%s25] sm:%s3]
    %s27 = scalar_lea.vmem [#allocation0], 24
    %28 = vst [vmem:[%s27] sm:%s3] %v26
    %s29 = smul.addr 4, 2
    %s30 = scalar_lea.vmem %s0, %s29
    %v31 = vld [vmem:[%s30] sm:%s3]
    %s32 = scalar_lea.vmem [#allocation0], 16
    %33 = vst [vmem:[%s32] sm:%s3] %v31
    %s34 = scalar_lea.vmem %s0, 4
    %v35 = vld [vmem:[%s34] sm:%s3]
    %s36 = scalar_lea.vmem [#allocation0], 8
    %37 = vst [vmem:[%s36] sm:%s3] %v35
    %v38 = vld [vmem:[%s0] sm:%s3]
    %39 = vst [vmem:[#allocation0] sm:%s3] %v38
    %v40 = vld [vmem:[#allocation0] ss:$8 sm:$0xf]
    %v41 = vld [vmem:[#allocation0] ss:$8 sm:$0xf0]
    %vm42 = vcmask 1047556
    %v43 = vsel %vm42, %v41, %v40
    %vm44 = vcmask 64512
    %45 = vst.msk [vmem:[%s1] sm:$0xff] %vm44, %v43
    %s46 = scalar_lea.vmem [#allocation0], 3
    %v47 = vld [vmem:[%s46] ss:$8 sm:$0xf]
    %s48 = scalar_lea.vmem [#allocation0], 3
    %v49 = vld [vmem:[%s48] ss:$8 sm:$0xf0]
    %vm50 = vcmask 1047556
    %v51 = vsel %vm50, %v49, %v47
    %52 = vrot.lane.b32.xlu0 %v51, 24
    %v53 = vpop.permute.xlu0 %52
    %vm54 = vcmask 261312
    %55 = vst.msk [vmem:[%s1] sm:$0xff] %vm54, %v53
    %s56 = scalar_lea.vmem [#allocation0], 2
    %v57 = vld [vmem:[%s56] ss:$8 sm:$0xf]
    %s58 = scalar_lea.vmem [#allocation0], 2
    %v59 = vld [vmem:[%s58] ss:$8 sm:$0xf0]
    %vm60 = vcmask 1047556
    %v61 = vsel %vm60, %v59, %v57
    %62 = vrot.lane.b32.xlu0 %v61, 16
    %v63 = vpop.permute.xlu0 %62
    %vm64 = vcmask 195712
    %65 = vst.msk [vmem:[%s1] sm:$0xff] %vm64, %v63
    %s66 = scalar_lea.vmem [#allocation0], 1
    %v67 = vld [vmem:[%s66] ss:$8 sm:$0xf]
    %s68 = scalar_lea.vmem [#allocation0], 1
    %v69 = vld [vmem:[%s68] ss:$8 sm:$0xf0]
    %vm70 = vcmask 1047556
    %v71 = vsel %vm70, %v69, %v67
    %72 = vrot.lane.b32.xlu0 %v71, 8
    %v73 = vpop.permute.xlu0 %72
    %vm74 = vcmask 130112
    %75 = vst.msk [vmem:[%s1] sm:$0xff] %vm74, %v73

// kernel: score_lm_forward.9
$region0: #{score_lm_forward.9}
  #allocation0 [shape = 'u32[]', space=smem, size = 0x4, offset = 0x4, fixed_abs, tag = 'smem constant byte address 0x4 - core index']
  #allocation1 [shape = 'u32[144,128]{1,0:T(1,128)}', space=vmem, size = 0x12000, scoped, tag = 'internal scratch']
  #allocation2 [shape = 'f32[16,32]{1,0:T(8,128)}', space=vmem, size = 0x2000, scoped, tag = 'scratch operand']
  %s0 = inlined_call_operand.vmem [shape: bf16[16,32], index: 0, kind: input, shape index: {}]
  %s1 = inlined_call_operand.vmem [shape: bf16[32,32], index: 1, kind: input, shape index: {}]
  %s2 = inlined_call_operand.vmem [shape: f32[16,32], index: 2, kind: output, shape index: {}]
  %s3 = sld [smem:[#allocation0]]
  $region26: #{score_lm_forward.9} parent=0
    _
  %s5 = ssub.s32 1, %s3
  %s6 = scalar_select 0, %s5, %s3
  // Predicated region
  $region2: #{score_lm_forward.9} parent=0 // pred_check
    _
  $region3: #{score_lm_forward.9} parent=0 // pred_check_branch
    %8 = sbr.rel (0) target = $region5
  $region4: #{score_lm_forward.9} parent=0 // pred_region
    _
  $region5: #{score_lm_forward.9} parent=0 // pred_fallthru
    _
  // Predicated region
  $region6: #{score_lm_forward.9} parent=0 // pred_check
    _
  $region7: #{score_lm_forward.9} parent=0 // pred_check_branch
    %10 = sbr.rel (0) target = $region9
  $region8: #{score_lm_forward.9} parent=0 // pred_region
    _
  $region9: #{score_lm_forward.9} parent=0 // pred_fallthru
    _
  %p12 = scmp.eq.s32.totalorder 0, 0
  // Predicated region
  $region10: #{score_lm_forward.9} parent=0 // pred_check
    %p13 = pneg %p12
  $region11: #{score_lm_forward.9} parent=0 // pred_check_branch
    %15 = sbr.rel (%p13) target = $region13
  $region12: #{score_lm_forward.9} parent=0 // pred_region
    %vm16 = vcmask 261120
    %17 = vst.msk [vmem:[#allocation2] sm:$0xff] %vm16, 0.0
    %18 = vst.msk [vmem:[#allocation2 + $0x8] sm:$0xff] %vm16, 0.0
  $region13: #{score_lm_forward.9} parent=0 // pred_fallthru
    _
  %v19 = vld [vmem:[#allocation2] sm:$0xff]
  %v20 = vld [vmem:[#allocation2 + $0x8] sm:$0xff]
  %v21 = vld [vmem:[%s0] sm:$0xf]
  %v22 = vld [vmem:[%s0 + $0x4] sm:$0xf]
  %v23 = vld [vmem:[%s1] sm:$0xf]
  %v24 = vld [vmem:[%s1 + $0x4] sm:$0xf]
  %v25 = vld [vmem:[%s1 + $0x8] sm:$0xf]
  %v26 = vld [vmem:[%s1 + $0xc] sm:$0xf]
  %v29 = vunpack.c.l.b16 %v21
  %v30 = vunpack.c.l.b16 %v22
  %v31 = vpack.c.b16 %v30, %v29
  %v36 = vunpack.c.l.b16 %v23
  %v37 = vunpack.c.l.b16 %v24
  %v38 = vunpack.c.l.b16 %v25
  %v39 = vunpack.c.l.b16 %v26
  %v40 = vpack.c.b16 %v37, %v36
  %v41 = vpack.c.b16 %v39, %v38
  %vm44 = vcmask 261120
  %v46 = vsel %vm44, %v31, 0
  %48 = vmatprep.subr.bf16.mxu0 0
  %49 = vmatpush1.bf16.msra.mxu0 %v40
  %50 = vmatprep.subr.bf16.mxu0 0
  %51 = vmatpush1.bf16.msra.mxu0 %v41
  %52 = vmatprep.subr.bf16.mxu0 0
  %53 = vmatpush1.bf16.msra.mxu0 0
  %54 = vmatprep.subr.bf16.mxu0 0
  %55 = vmatpush1.bf16.msra.mxu0 0
  %56 = vmatprep.subr.bf16.mxu0 0
  %57 = vmatpush1.bf16.msra.mxu0 0
  %58 = vmatprep.subr.bf16.mxu0 0
  %59 = vmatpush1.bf16.msra.mxu0 0
  %60 = vmatprep.subr.bf16.mxu0 0
  %61 = vmatpush1.bf16.msra.mxu0 0
  %62 = vmatprep.subr.bf16.mxu0 0
  %63 = vmatpush1.bf16.msra.mxu0 0
  %64 = vmatprep.subr.bf16.mxu0 0
  %65 = vmatpush1.bf16.msra.mxu0 0
  %66 = vmatprep.subr.bf16.mxu0 0
  %67 = vmatpush1.bf16.msra.mxu0 0
  %68 = vmatprep.subr.bf16.mxu0 0
  %69 = vmatpush1.bf16.msra.mxu0 0
  %70 = vmatprep.subr.bf16.mxu0 0
  %71 = vmatpush1.bf16.msra.mxu0 0
  %72 = vmatprep.subr.bf16.mxu0 0
  %73 = vmatpush1.bf16.msra.mxu0 0
  %74 = vmatprep.subr.bf16.mxu0 0
  %75 = vmatpush1.bf16.msra.mxu0 0
  %76 = vmatprep.subr.bf16.mxu0 0
  %77 = vmatpush1.bf16.msra.mxu0 0
  %78 = vmatprep.subr.bf16.mxu0 0
  %79 = vmatpush1.bf16.msra.mxu0 0
  %80 = vmatprep.mubr.bf16.mxu0 0
  %81 = vmatmul.mubr.bf16.gmra.mrb[0].mxu0 %v46
  %v82 = vpop.f32.mrb[0].mxu0
  %v83 = vadd.f32 0.0, %v82
  %v84 = vpop.f32.mrb[0].mxu0
  %v85 = vpop.f32.mrb[0].mxu0
  %v86 = vadd.f32 0.0, %v85
  %v87 = vpop.f32.mrb[0].mxu0
  %88 = vdwg.mxu0
  %v89 = vadd.f32 %v19, %v83
  %v90 = vadd.f32 %v20, %v86
  %91 = vst.msk [vmem:[#allocation2] sm:$0xff] %vm44, %v89
  %92 = vst.msk [vmem:[#allocation2 + $0x8] sm:$0xff] %vm44, %v90
  // Predicated region
  $region14: #{score_lm_forward.9} parent=0 // pred_check
    %p93 = pneg %p12
  $region15: #{score_lm_forward.9} parent=0 // pred_check_branch
    %95 = sbr.rel (%p93) target = $region17
  $region16: #{score_lm_forward.9} parent=0 // pred_region
    %v96 = vld [vmem:[#allocation2] sm:$0xff]
    %v97 = vld [vmem:[#allocation2 + $0x8] sm:$0xff]
    %98 = vst.msk [vmem:[%s2] sm:$0xff] %vm44, %v96
    %99 = vst.msk [vmem:[%s2 + $0x8] sm:$0xff] %vm44, %v97
  $region17: #{score_lm_forward.9} parent=0 // pred_fallthru
    _
  // Predicated region
  $region18: #{score_lm_forward.9} parent=0 // pred_check
    _
  $region19: #{score_lm_forward.9} parent=0 // pred_check_branch
    %101 = sbr.rel (0) target = $region21
  $region20: #{score_lm_forward.9} parent=0 // pred_region
    _
  $region21: #{score_lm_forward.9} parent=0 // pred_fallthru
    _
  // Predicated region
  $region22: #{score_lm_forward.9} parent=0 // pred_check
    _
  $region23: #{score_lm_forward.9} parent=0 // pred_check_branch
    %103 = sbr.rel (0) target = $region25
  $region24: #{score_lm_forward.9} parent=0 // pred_region
    _
  $region25: #{score_lm_forward.9} parent=0 // pred_fallthru
    _

// kernel: score_lm_forward.12
$region0: #{score_lm_forward.12}
  #allocation0 [shape = 'u32[]', space=smem, size = 0x4, offset = 0x4, fixed_abs, tag = 'smem constant byte address 0x4 - core index']
  #allocation1 [shape = 'u32[144,128]{1,0:T(1,128)}', space=vmem, size = 0x12000, scoped, tag = 'internal scratch']
  %s0 = inlined_call_operand.vmem [shape: bf16[16,32], index: 0, kind: input, shape index: {}]
  %s1 = inlined_call_operand.vmem [shape: f32[16,32], index: 1, kind: input, shape index: {}]
  %s2 = inlined_call_operand.vmem [shape: bf16[32,32], index: 2, kind: input, shape index: {}]
  %s3 = inlined_call_operand.vmem [shape: f32[16,32], index: 3, kind: output, shape index: {}]
  %s4 = sld [smem:[#allocation0]]
  $region22: #{score_lm_forward.12} parent=0
    _
  %s6 = ssub.s32 1, %s4
  %s7 = scalar_select 0, %s6, %s4
  // Predicated region
  $region2: #{score_lm_forward.12} parent=0 // pred_check
    _
  $region3: #{score_lm_forward.12} parent=0 // pred_check_branch
    %9 = sbr.rel (0) target = $region5
  $region4: #{score_lm_forward.12} parent=0 // pred_region
    _
  $region5: #{score_lm_forward.12} parent=0 // pred_fallthru
    _
  // Predicated region
  $region6: #{score_lm_forward.12} parent=0 // pred_check
    _
  $region7: #{score_lm_forward.12} parent=0 // pred_check_branch
    %11 = sbr.rel (0) target = $region9
  $region8: #{score_lm_forward.12} parent=0 // pred_region
    _
  $region9: #{score_lm_forward.12} parent=0 // pred_fallthru
    _
  // Predicated region
  $region10: #{score_lm_forward.12} parent=0 // pred_check
    _
  $region11: #{score_lm_forward.12} parent=0 // pred_check_branch
    %13 = sbr.rel (0) target = $region13
  $region12: #{score_lm_forward.12} parent=0 // pred_region
    _
  $region13: #{score_lm_forward.12} parent=0 // pred_fallthru
    _
  %v15 = vld [vmem:[%s1] sm:$0xff]
  %v16 = vld [vmem:[%s1 + $0x8] sm:$0xff]
  %v17 = vld [vmem:[%s0] sm:$0xf]
  %v18 = vld [vmem:[%s0 + $0x4] sm:$0xf]
  %v19 = vld [vmem:[%s2] sm:$0xf]
  %v20 = vld [vmem:[%s2 + $0x4] sm:$0xf]
  %v21 = vld [vmem:[%s2 + $0x8] sm:$0xf]
  %v22 = vld [vmem:[%s2 + $0xc] sm:$0xf]
  %v25 = vunpack.c.l.b16 %v17
  %v26 = vunpack.c.l.b16 %v18
  %v27 = vpack.c.b16 %v26, %v25
  %v32 = vunpack.c.l.b16 %v19
  %v33 = vunpack.c.l.b16 %v20
  %v34 = vunpack.c.l.b16 %v21
  %v35 = vunpack.c.l.b16 %v22
  %v36 = vpack.c.b16 %v33, %v32
  %v37 = vpack.c.b16 %v35, %v34
  %vm40 = vcmask 261120
  %v42 = vsel %vm40, %v27, 0
  %44 = vmatprep.subr.bf16.mxu0 0
  %45 = vmatpush1.bf16.msra.mxu0 %v36
  %46 = vmatprep.subr.bf16.mxu0 0
  %47 = vmatpush1.bf16.msra.mxu0 %v37
  %48 = vmatprep.subr.bf16.mxu0 0
  %49 = vmatpush1.bf16.msra.mxu0 0
  %50 = vmatprep.subr.bf16.mxu0 0
  %51 = vmatpush1.bf16.msra.mxu0 0
  %52 = vmatprep.subr.bf16.mxu0 0
  %53 = vmatpush1.bf16.msra.mxu0 0
  %54 = vmatprep.subr.bf16.mxu0 0
  %55 = vmatpush1.bf16.msra.mxu0 0
  %56 = vmatprep.subr.bf16.mxu0 0
  %57 = vmatpush1.bf16.msra.mxu0 0
  %58 = vmatprep.subr.bf16.mxu0 0
  %59 = vmatpush1.bf16.msra.mxu0 0
  %60 = vmatprep.subr.bf16.mxu0 0
  %61 = vmatpush1.bf16.msra.mxu0 0
  %62 = vmatprep.subr.bf16.mxu0 0
  %63 = vmatpush1.bf16.msra.mxu0 0
  %64 = vmatprep.subr.bf16.mxu0 0
  %65 = vmatpush1.bf16.msra.mxu0 0
  %66 = vmatprep.subr.bf16.mxu0 0
  %67 = vmatpush1.bf16.msra.mxu0 0
  %68 = vmatprep.subr.bf16.mxu0 0
  %69 = vmatpush1.bf16.msra.mxu0 0
  %70 = vmatprep.subr.bf16.mxu0 0
  %71 = vmatpush1.bf16.msra.mxu0 0
  %72 = vmatprep.subr.bf16.mxu0 0
  %73 = vmatpush1.bf16.msra.mxu0 0
  %74 = vmatprep.subr.bf16.mxu0 0
  %75 = vmatpush1.bf16.msra.mxu0 0
  %76 = vmatprep.mubr.bf16.mxu0 0
  %77 = vmatmul.mubr.bf16.gmra.mrb[0].mxu0 %v42
  %v78 = vpop.f32.mrb[0].mxu0
  %v79 = vadd.f32 0.0, %v78
  %v80 = vpop.f32.mrb[0].mxu0
  %v81 = vpop.f32.mrb[0].mxu0
  %v82 = vadd.f32 0.0, %v81
  %v83 = vpop.f32.mrb[0].mxu0
  %84 = vdwg.mxu0
  %v85 = vadd.f32 %v15, %v79
  %v86 = vadd.f32 %v16, %v82
  %87 = vst.msk [vmem:[%s3] sm:$0xff] %vm40, %v85
  %88 = vst.msk [vmem:[%s3 + $0x8] sm:$0xff] %vm40, %v86
  // Predicated region
  $region14: #{score_lm_forward.12} parent=0 // pred_check
    _
  $region15: #{score_lm_forward.12} parent=0 // pred_check_branch
    %90 = sbr.rel (0) target = $region17
  $region16: #{score_lm_forward.12} parent=0 // pred_region
    _
  $region17: #{score_lm_forward.12} parent=0 // pred_fallthru
    _
  // Predicated region
  $region18: #{score_lm_forward.12} parent=0 // pred_check
    _
  $region19: #{score_lm_forward.12} parent=0 // pred_check_branch
    %92 = sbr.rel (0) target = $region21
  $region20: #{score_lm_forward.12} parent=0 // pred_region
    _
  $region21: #{score_lm_forward.12} parent=0 // pred_fallthru
    _

// kernel: score_lm_forward.11
$region0: #{score_lm_forward.11}
  #allocation0 [shape = 'u32[]', space=smem, size = 0x4, offset = 0x4, fixed_abs, tag = 'smem constant byte address 0x4 - core index']
  #allocation1 [shape = 'u32[144,128]{1,0:T(1,128)}', space=vmem, size = 0x12000, scoped, tag = 'internal scratch']
  #allocation2 [shape = 'f32[8,1]{1,0:T(8,128)}', space=vmem, size = 0x1000, scoped, tag = 'scratch operand']
  #allocation3 [shape = 'f32[8,1]{1,0:T(8,128)}', space=vmem, size = 0x1000, scoped, tag = 'scratch operand']
  #allocation4 [shape = 'f32[8,8]{1,0:T(8,128)}', space=vmem, size = 0x1000, scoped, tag = 'scratch operand']
  %s0 = inlined_call_operand.vmem [shape: bf16[8,8,8], index: 0, kind: input, shape index: {}]
  %s1 = inlined_call_operand.vmem [shape: bf16[8,8,8], index: 1, kind: input, shape index: {}]
  %s2 = inlined_call_operand.vmem [shape: bf16[8,8,8], index: 2, kind: input, shape index: {}]
  %s3 = inlined_call_operand.vmem [shape: bf16[8,8,8], index: 3, kind: output, shape index: {}]
  %s4 = sld [smem:[#allocation0]]
  $region53: #{score_lm_forward.11} parent=0
    _
  %s6 = ssub.s32 1, %s4
  %s7 = scalar_select 0, %s6, %s4
  loop: start=0, step=1, limit=10
  $region2: #{score_lm_forward.11} parent=0 // loop_pre_header
    _
  $region3: #{score_lm_forward.11} parent=0 // loop_header
    %s9 = sphi 0, %s13
    %p10 = scmp.ge.s32.totalorder %s9, 10
    %s16 = sphi 0, %s35
    %s17 = sphi 0, %s31
    %s18 = sphi 0, %s27
    %s19 = sphi 0, %s16
    %s20 = sphi 0, %s17
    %s21 = sphi 0, %s18
    %s22 = sphi 0, %s19
    %s23 = sphi 0, %s20
    %s24 = sphi 0, %s21
    %s40 = sphi 0, %s42
    %s43 = sphi 0, %s40
    %s44 = sphi 0, %s43
    %s60 = sphi 0, %s44
    %s68 = sphi 0, %s70
    %s71 = sphi 0, %s68
    %s72 = sphi 0, %s71
    %s88 = sphi 0, %s72
    %s96 = sphi 0, %s98
    %s99 = sphi 0, %s96
    %s100 = sphi 0, %s99
    %s116 = sphi 0, %s100
    %s124 = sphi 0, %s126
    %s127 = sphi 0, %s124
    %s128 = sphi 0, %s127
    %s144 = sphi 0, %s128
  $region4: #{score_lm_forward.11} parent=0 // loop_header_branch
    %12 = sbr.rel (%p10) target = $region8
  $region5: #{score_lm_forward.11} parent=0 // loop_body
    %s14 = ssub.s32 %s9, 1
    %s15 = ssub.s32 %s9, 2
    %s25 = sadd.s32 1, %s18
    %p26 = scmp.ge.s32.totalorder %s25, 1
    %s27 = scalar_select %p26, 0, %s25
    %s28 = sadd.s32 1, %s17
    %s29 = scalar_select %p26, %s28, %s17
    %p30 = scmp.ge.s32.totalorder %s29, 1
    %s31 = scalar_select %p30, 0, %s29
    %s32 = sadd.s32 1, %s16
    %s33 = scalar_select %p30, %s32, %s16
    %p34 = scmp.ge.s32.totalorder %s33, 8
    %s35 = scalar_select %p34, 0, %s33
    %s36 = ssub.s32 %s16, %s35
    %s37 = ssub.s32 %s17, %s31
    %s38 = sor.u32 %s36, %s37
    %p39 = scmp.eq.s32.totalorder %s38, 0
    %s41 = sadd.s32 %s40, 1
    %s42 = scalar_select %p39, %s40, %s41
    %p45 = pneg %p39
    %p46 = scmp.eq.s32.totalorder %s9, 7
    %p47 = por %p45, %p46
    %p48 = scmp.ne.s32.totalorder %s40, %s43
    %p49 = scmp.eq.s32.totalorder %s9, 0
    %p50 = por %p48, %p49
    %p51 = scmp.ne.s32.totalorder %s40, %s43
    %p52 = scmp.eq.s32.totalorder %s14, 7
    %p53 = por %p51, %p52
    %p54 = scmp.ne.s32.totalorder %s43, %s44
    %p55 = scmp.eq.s32.totalorder %s14, 0
    %p56 = por %p54, %p55
    %p57 = scmp.ne.s32.totalorder %s43, %s44
    %p58 = scmp.eq.s32.totalorder %s15, 7
    %p59 = por %p57, %p58
    %p61 = scmp.ne.s32.totalorder %s44, %s60
    %p62 = scmp.eq.s32.totalorder %s15, 0
    %p63 = por %p61, %p62
    %s64 = ssub.s32 %s16, %s35
    %s65 = ssub.s32 %s18, %s27
    %s66 = sor.u32 %s64, %s65
    %p67 = scmp.eq.s32.totalorder %s66, 0
    %s69 = sadd.s32 %s68, 1
    %s70 = scalar_select %p67, %s68, %s69
    %p73 = pneg %p67
    %p74 = scmp.eq.s32.totalorder %s9, 7
    %p75 = por %p73, %p74
    %p76 = scmp.ne.s32.totalorder %s68, %s71
    %p77 = scmp.eq.s32.totalorder %s9, 0
    %p78 = por %p76, %p77
    %p79 = scmp.ne.s32.totalorder %s68, %s71
    %p80 = scmp.eq.s32.totalorder %s14, 7
    %p81 = por %p79, %p80
    %p82 = scmp.ne.s32.totalorder %s71, %s72
    %p83 = scmp.eq.s32.totalorder %s14, 0
    %p84 = por %p82, %p83
    %p85 = scmp.ne.s32.totalorder %s71, %s72
    %p86 = scmp.eq.s32.totalorder %s15, 7
    %p87 = por %p85, %p86
    %p89 = scmp.ne.s32.totalorder %s72, %s88
    %p90 = scmp.eq.s32.totalorder %s15, 0
    %p91 = por %p89, %p90
    %s92 = ssub.s32 %s16, %s35
    %s93 = ssub.s32 %s18, %s27
    %s94 = sor.u32 %s92, %s93
    %p95 = scmp.eq.s32.totalorder %s94, 0
    %s97 = sadd.s32 %s96, 1
    %s98 = scalar_select %p95, %s96, %s97
    %p101 = pneg %p95
    %p102 = scmp.eq.s32.totalorder %s9, 7
    %p103 = por %p101, %p102
    %p104 = scmp.ne.s32.totalorder %s96, %s99
    %p105 = scmp.eq.s32.totalorder %s9, 0
    %p106 = por %p104, %p105
    %p107 = scmp.ne.s32.totalorder %s96, %s99
    %p108 = scmp.eq.s32.totalorder %s14, 7
    %p109 = por %p107, %p108
    %p110 = scmp.ne.s32.totalorder %s99, %s100
    %p111 = scmp.eq.s32.totalorder %s14, 0
    %p112 = por %p110, %p111
    %p113 = scmp.ne.s32.totalorder %s99, %s100
    %p114 = scmp.eq.s32.totalorder %s15, 7
    %p115 = por %p113, %p114
    %p117 = scmp.ne.s32.totalorder %s100, %s116
    %p118 = scmp.eq.s32.totalorder %s15, 0
    %p119 = por %p117, %p118
    %s120 = ssub.s32 %s16, %s35
    %s121 = ssub.s32 %s17, %s31
    %s122 = sor.u32 %s120, %s121
    %p123 = scmp.eq.s32.totalorder %s122, 0
    %s125 = sadd.s32 %s124, 1
    %s126 = scalar_select %p123, %s124, %s125
    %p129 = pneg %p123
    %p130 = scmp.eq.s32.totalorder %s9, 7
    %p131 = por %p129, %p130
    %p132 = scmp.ne.s32.totalorder %s124, %s127
    %p133 = scmp.eq.s32.totalorder %s9, 0
    %p134 = por %p132, %p133
    %p135 = scmp.ne.s32.totalorder %s124, %s127
    %p136 = scmp.eq.s32.totalorder %s14, 7
    %p137 = por %p135, %p136
    %p138 = scmp.ne.s32.totalorder %s127, %s128
    %p139 = scmp.eq.s32.totalorder %s14, 0
    %p140 = por %p138, %p139
    %p141 = scmp.ne.s32.totalorder %s127, %s128
    %p142 = scmp.eq.s32.totalorder %s15, 7
    %p143 = por %p141, %p142
    %p145 = scmp.ne.s32.totalorder %s128, %s144
    %p146 = scmp.eq.s32.totalorder %s15, 0
    %p147 = por %p145, %p146
    %p148 = scmp.le.s32.totalorder 1, %s9
    %p149 = scmp.lt.s32.totalorder %s9, 9
    %p150 = pnand %p148, %p149
    %p151 = pneg %p150
    // Predicated region
    $region9: #{score_lm_forward.11} parent=5 // pred_check
      _
    $region10: #{score_lm_forward.11} parent=5 // pred_check_branch
      %153 = sbr.rel (%p150) target = $region12
    $region11: #{score_lm_forward.11} parent=5 // pred_region
      %s154 = ssub.s32 %s9, 1
    $region12: #{score_lm_forward.11} parent=5 // pred_fallthru
      _
    %p155 = scmp.lt.s32.totalorder %s9, 8
    // Predicated region
    $region13: #{score_lm_forward.11} parent=5 // pred_check
      %p156 = pneg %p155
    $region14: #{score_lm_forward.11} parent=5 // pred_check_branch
      %158 = sbr.rel (%p156) target = $region16
    $region15: #{score_lm_forward.11} parent=5 // pred_region
      // Predicated region
      $region17: #{score_lm_forward.11} parent=15 // pred_check
        %p159 = pneg %p50
      $region18: #{score_lm_forward.11} parent=15 // pred_check_branch
        %161 = sbr.rel (%p159) target = $region20
      $region19: #{score_lm_forward.11} parent=15 // pred_region
        %p162 = scmp.lt.s32.totalorder %s16, 7
        %s163 = scalar_select %p162, %s16, 7
        %p164 = scmp.lt.s32.totalorder %s17, 0
        %s165 = scalar_select %p164, %s17, 0
        %s166 = sadd.s32 %s165, %s163
        %s167 = smul.addr %s166, 4
        %s168 = scalar_lea.vmem %s0, %s167
      $region20: #{score_lm_forward.11} parent=15 // pred_fallthru
        _
      // Predicated region
      $region21: #{score_lm_forward.11} parent=15 // pred_check
        %p169 = pneg %p78
      $region22: #{score_lm_forward.11} parent=15 // pred_check_branch
        %171 = sbr.rel (%p169) target = $region24
      $region23: #{score_lm_forward.11} parent=15 // pred_region
        %p172 = scmp.lt.s32.totalorder %s16, 7
        %s173 = scalar_select %p172, %s16, 7
        %p174 = scmp.lt.s32.totalorder %s18, 0
        %s175 = scalar_select %p174, %s18, 0
        %s176 = sadd.s32 %s175, %s173
        %s177 = smul.addr %s176, 4
        %s178 = scalar_lea.vmem %s1, %s177
      $region24: #{score_lm_forward.11} parent=15 // pred_fallthru
        _
      // Predicated region
      $region25: #{score_lm_forward.11} parent=15 // pred_check
        %p179 = pneg %p106
      $region26: #{score_lm_forward.11} parent=15 // pred_check_branch
        %181 = sbr.rel (%p179) target = $region28
      $region27: #{score_lm_forward.11} parent=15 // pred_region
        %p182 = scmp.lt.s32.totalorder %s16, 7
        %s183 = scalar_select %p182, %s16, 7
        %p184 = scmp.lt.s32.totalorder %s18, 0
        %s185 = scalar_select %p184, %s18, 0
        %s186 = sadd.s32 %s185, %s183
        %s187 = smul.addr %s186, 4
        %s188 = scalar_lea.vmem %s2, %s187
      $region28: #{score_lm_forward.11} parent=15 // pred_fallthru
        _
    $region16: #{score_lm_forward.11} parent=5 // pred_fallthru
      _
    %p189 = scmp.le.s32.totalorder 1, %s9
    %p190 = scmp.lt.s32.totalorder %s9, 9
    %p191 = pnand %p189, %p190
    %p192 = pneg %p191
    // Predicated region
    $region29: #{score_lm_forward.11} parent=5 // pred_check
      _
    $region30: #{score_lm_forward.11} parent=5 // pred_check_branch
      %194 = sbr.rel (%p191) target = $region32
    $region31: #{score_lm_forward.11} parent=5 // pred_region
      %s195 = ssub.s32 %s9, 1
      %p196 = scmp.lt.s32.totalorder %s19, 7
      %s197 = scalar_select %p196, %s19, 7
      %p198 = scmp.lt.s32.totalorder %s20, 0
      %s199 = scalar_select %p198, %s20, 0
      %s200 = sadd.s32 %s199, %s197
      %s201 = smul.addr %s200, 4
      %s202 = scalar_lea.vmem %s0, %s201
      %p203 = pneg %p56
      %p204 = pneg %p53
      %p205 = scmp.lt.s32.totalorder %s19, 7
      %s206 = scalar_select %p205, %s19, 7
      %p207 = scmp.lt.s32.totalorder %s21, 0
      %s208 = scalar_select %p207, %s21, 0
      %s209 = sadd.s32 %s208, %s206
      %s210 = smul.addr %s209, 4
      %s211 = scalar_lea.vmem %s1, %s210
      %p212 = pneg %p84
      %p213 = pneg %p81
      %p214 = scmp.lt.s32.totalorder %s19, 7
      %s215 = scalar_select %p214, %s19, 7
      %p216 = scmp.lt.s32.totalorder %s21, 0
      %s217 = scalar_select %p216, %s21, 0
      %s218 = sadd.s32 %s217, %s215
      %s219 = smul.addr %s218, 4
      %s220 = scalar_lea.vmem %s2, %s219
      %p221 = pneg %p112
      %p222 = pneg %p109
      %p223 = pneg %p140
      %p224 = pneg %p137
      %p225 = scmp.lt.s32.totalorder %s19, 7
      %s226 = scalar_select %p225, %s19, 7
      %p227 = scmp.lt.s32.totalorder %s20, 0
      %s228 = scalar_select %p227, %s20, 0
      %s229 = sadd.s32 %s228, %s226
      %s230 = smul.addr %s229, 4
      %s231 = scalar_lea.vmem %s3, %s230
      %p232 = scmp.lt.s32.totalorder %s19, 7
      %s233 = scalar_select %p232, %s19, 7
      %p234 = scmp.lt.s32.totalorder %s20, 0
      %s235 = scalar_select %p234, %s20, 0
      %s236 = sadd.s32 %s235, %s233
      %s237 = smul.addr %s236, 4
      %s238 = scalar_lea.vmem %s0, %s237
      %p239 = scmp.lt.s32.totalorder %s19, 7
      %s240 = scalar_select %p239, %s19, 7
      %p241 = scmp.lt.s32.totalorder %s21, 0
      %s242 = scalar_select %p241, %s21, 0
      %s243 = sadd.s32 %s242, %s240
      %s244 = smul.addr %s243, 4
      %s245 = scalar_lea.vmem %s1, %s244
      %p246 = scmp.lt.s32.totalorder %s19, 7
      %s247 = scalar_select %p246, %s19, 7
      %p248 = scmp.lt.s32.totalorder %s21, 0
      %s249 = scalar_select %p248, %s21, 0
      %s250 = sadd.s32 %s249, %s247
      %s251 = smul.addr %s250, 4
      %s252 = scalar_lea.vmem %s2, %s251
      %p253 = scmp.lt.s32.totalorder %s19, 7
      %s254 = scalar_select %p253, %s19, 7
      %p255 = scmp.lt.s32.totalorder %s20, 0
      %s256 = scalar_select %p255, %s20, 0
      %s257 = sadd.s32 %s256, %s254
      %s258 = smul.addr %s257, 4
      %s259 = scalar_lea.vmem %s3, %s258
      %p261 = scmp.eq.s32.totalorder %s21, 0
      // Predicated region
      $region33: #{score_lm_forward.11} parent=31 // pred_check
        %p262 = pneg %p261
      $region34: #{score_lm_forward.11} parent=31 // pred_check_branch
        %264 = sbr.rel (%p262) target = $region36
      $region35: #{score_lm_forward.11} parent=31 // pred_region
        %vm265 = vcmask 7168
        %266 = vst.msk [vmem:[#allocation2] sm:$0xff] %vm265, -inf
        %267 = vst.msk [vmem:[#allocation3] sm:$0xff] %vm265, 0.0
        %vm268 = vcmask 64512
        %269 = vst.msk [vmem:[#allocation4] sm:$0xff] %vm268, 0.0
      $region36: #{score_lm_forward.11} parent=31 // pred_fallthru
        _
      %v270 = vld [vmem:[%s238] sm:$0xf]
      %v271 = vld [vmem:[%s245] sm:$0xf]
      %vm272 = vcmask 64512
      %v274 = vsel %vm272, %v270, 0
      %v277 = vsel %vm272, %v271, 0
      %279 = vmatprep.subr.bf16.mxu0 0
      %280 = vmatpush1.bf16.xpose.msra.mxu0 %v277
      %281 = vmatprep.subr.bf16.mxu0 0
      %282 = vmatpush1.bf16.xpose.msra.mxu0 0
      %283 = vmatprep.subr.bf16.mxu0 0
      %284 = vmatpush1.bf16.xpose.msra.mxu0 0
      %285 = vmatprep.subr.bf16.mxu0 0
      %286 = vmatpush1.bf16.xpose.msra.mxu0 0
      %287 = vmatprep.subr.bf16.mxu0 0
      %288 = vmatpush1.bf16.xpose.msra.mxu0 0
      %289 = vmatprep.subr.bf16.mxu0 0
      %290 = vmatpush1.bf16.xpose.msra.mxu0 0
      %291 = vmatprep.subr.bf16.mxu0 0
      %292 = vmatpush1.bf16.xpose.msra.mxu0 0
      %293 = vmatprep.subr.bf16.mxu0 0
      %294 = vmatpush1.bf16.xpose.msra.mxu0 0
      %295 = vmatprep.subr.bf16.mxu0 0
      %296 = vmatpush1.bf16.xpose.msra.mxu0 0
      %297 = vmatprep.subr.bf16.mxu0 0
      %298 = vmatpush1.bf16.xpose.msra.mxu0 0
      %299 = vmatprep.subr.bf16.mxu0 0
      %300 = vmatpush1.bf16.xpose.msra.mxu0 0
      %301 = vmatprep.subr.bf16.mxu0 0
      %302 = vmatpush1.bf16.xpose.msra.mxu0 0
      %303 = vmatprep.subr.bf16.mxu0 0
      %304 = vmatpush1.bf16.xpose.msra.mxu0 0
      %305 = vmatprep.subr.bf16.mxu0 0
      %306 = vmatpush1.bf16.xpose.msra.mxu0 0
      %307 = vmatprep.subr.bf16.mxu0 0
      %308 = vmatpush1.bf16.xpose.msra.mxu0 0
      %309 = vmatprep.subr.bf16.mxu0 0
      %310 = vmatpush1.bf16.xpose.msra.mxu0 0
      %311 = vmatprep.mubr.bf16.mxu0 0
      %312 = vmatmul.mubr.bf16.gmra.mrb[0].mxu0 %v274
      %v313 = vpop.f32.mrb[0].mxu0
      %v314 = vadd.f32 0.0, %v313
      %v315 = vpop.f32.mrb[0].mxu0
      %v316 = vpop.f32.mrb[0].mxu0
      %v317 = vpop.f32.mrb[0].mxu0
      %318 = vdwg.mxu0
      %v319 = vld [vmem:[#allocation2] sm:$0xff]
      %v320 = vsel %vm272, %v314, -inf
      %321 = vmax.xlane.f32.xlu0 %v320
      %v322 = vpop.xlane.xlu0 %321
      %v323 = vmax.f32 %v319, %v322
      %v324 = vsub.f32 %v319, %v323
      %v325 = vmul.f32 %v324, 1.442695
      %v326 = vpow.pop %v325
      %328 = vset.pattern.permute.xlu0 0
      %329 = vperm.xlu0 %328, %v323
      %v330 = vpop.permute.xlu0 %329
      %v332 = vsub.f32 %v314, %v330
      %v333 = vmul.f32 %v332, 1.442695
      %v334 = vpow.pop %v333
      %v335 = vld [vmem:[#allocation3] sm:$0xff]
      %v336 = vmul.f32 %v326, %v335
      %v337 = vsel %vm272, %v334, 0.0
      %338 = vadd.xlane.f32.xlu0 %v337
      %v339 = vpop.xlane.xlu0 %338
      %v340 = vadd.f32 %v336, %v339
      %vm341 = vcmask 7168
      %342 = vst.msk [vmem:[#allocation3] sm:$0xff] %vm341, %v340
      %v343 = vld [vmem:[#allocation4] sm:$0xff]
      %345 = vset.pattern.permute.xlu0 0
      %346 = vperm.xlu0 %345, %v326
      %v347 = vpop.permute.xlu0 %346
      %v349 = vmul.f32 %v347, %v343
      %v350 = vpack.c.bf16 %v334, %v334
      %v351 = vld [vmem:[%s252] sm:$0xf]
      %v353 = vsel %vm272, %v350, 0
      %vm355 = vcmask 1043456
      %v357 = vsel %vm355, %v351, 0
      %359 = vmatprep.subr.bf16.mxu0 0
      %360 = vmatpush1.bf16.msra.mxu0 %v357
      %361 = vmatprep.subr.bf16.mxu0 0
      %362 = vmatpush1.bf16.msra.mxu0 0
      %363 = vmatprep.subr.bf16.mxu0 0
      %364 = vmatpush1.bf16.msra.mxu0 0
      %365 = vmatprep.subr.bf16.mxu0 0
      %366 = vmatpush1.bf16.msra.mxu0 0
      %367 = vmatprep.subr.bf16.mxu0 0
      %368 = vmatpush1.bf16.msra.mxu0 0
      %369 = vmatprep.subr.bf16.mxu0 0
      %370 = vmatpush1.bf16.msra.mxu0 0
      %371 = vmatprep.subr.bf16.mxu0 0
      %372 = vmatpush1.bf16.msra.mxu0 0
      %373 = vmatprep.subr.bf16.mxu0 0
      %374 = vmatpush1.bf16.msra.mxu0 0
      %375 = vmatprep.subr.bf16.mxu0 0
      %376 = vmatpush1.bf16.msra.mxu0 0
      %377 = vmatprep.subr.bf16.mxu0 0
      %378 = vmatpush1.bf16.msra.mxu0 0
      %379 = vmatprep.subr.bf16.mxu0 0
      %380 = vmatpush1.bf16.msra.mxu0 0
      %381 = vmatprep.subr.bf16.mxu0 0
      %382 = vmatpush1.bf16.msra.mxu0 0
      %383 = vmatprep.subr.bf16.mxu0 0
      %384 = vmatpush1.bf16.msra.mxu0 0
      %385 = vmatprep.subr.bf16.mxu0 0
      %386 = vmatpush1.bf16.msra.mxu0 0
      %387 = vmatprep.subr.bf16.mxu0 0
      %388 = vmatpush1.bf16.msra.mxu0 0
      %389 = vmatprep.subr.bf16.mxu0 0
      %390 = vmatpush1.bf16.msra.mxu0 0
      %391 = vmatprep.mubr.bf16.mxu0 0
      %392 = vmatmul.mubr.bf16.gmra.mrb[0].mxu0 %v353
      %v393 = vpop.f32.mrb[0].mxu0
      %v394 = vadd.f32 0.0, %v393
      %v395 = vpop.f32.mrb[0].mxu0
      %v396 = vpop.f32.mrb[0].mxu0
      %v397 = vpop.f32.mrb[0].mxu0
      %398 = vdwg.mxu0
      %v399 = vadd.f32 %v349, %v394
      %400 = vst.msk [vmem:[#allocation4] sm:$0xff] %vm272, %v399
      %401 = vst.msk [vmem:[#allocation2] sm:$0xff] %vm341, %v323
      // Predicated region
      $region37: #{score_lm_forward.11} parent=31 // pred_check
        %p402 = pneg %p261
      $region38: #{score_lm_forward.11} parent=31 // pred_check_branch
        %404 = sbr.rel (%p402) target = $region40
      $region39: #{score_lm_forward.11} parent=31 // pred_region
        %v405 = vld [vmem:[#allocation4] sm:$0xff]
        %v406 = vld [vmem:[#allocation3] sm:$0xff]
        %v407 = vrcp.pop %v406
        %409 = vset.pattern.permute.xlu0 0
        %410 = vperm.xlu0 %409, %v407
        %v411 = vpop.permute.xlu0 %410
        %v413 = vmul.f32 %v405, %v411
        %v414 = vpack.c.bf16 %v413, %v413
        %vm415 = vcmask 60416
        %416 = vst.msk [vmem:[%s259] sm:$0xf] %vm415, %v414
      $region40: #{score_lm_forward.11} parent=31 // pred_fallthru
        _
      %p417 = scmp.lt.s32.totalorder %s19, 7
      %s418 = scalar_select %p417, %s19, 7
      %p419 = scmp.lt.s32.totalorder %s20, 0
      %s420 = scalar_select %p419, %s20, 0
      %s421 = sadd.s32 %s420, %s418
      %s422 = smul.addr %s421, 4
      %s423 = scalar_lea.vmem %s3, %s422
      // Predicated region
      $region41: #{score_lm_forward.11} parent=31 // pred_check
        %p424 = pneg %p137
      $region42: #{score_lm_forward.11} parent=31 // pred_check_branch
        %426 = sbr.rel (%p424) target = $region44
      $region43: #{score_lm_forward.11} parent=31 // pred_region
        _
      $region44: #{score_lm_forward.11} parent=31 // pred_fallthru
        _
    $region32: #{score_lm_forward.11} parent=5 // pred_fallthru
      _
    %p427 = scmp.le.s32.totalorder 2, %s9
    // Predicated region
    $region45: #{score_lm_forward.11} parent=5 // pred_check
      %p428 = pneg %p427
    $region46: #{score_lm_forward.11} parent=5 // pred_check_branch
      %430 = sbr.rel (%p428) target = $region48
    $region47: #{score_lm_forward.11} parent=5 // pred_region
      %s431 = ssub.s32 %s9, 2
      // Predicated region
      $region49: #{score_lm_forward.11} parent=47 // pred_check
        %p432 = pneg %p143
      $region50: #{score_lm_forward.11} parent=47 // pred_check_branch
        %434 = sbr.rel (%p432) target = $region52
      $region51: #{score_lm_forward.11} parent=47 // pred_region
        %p435 = scmp.lt.s32.totalorder %s22, 7
        %s436 = scalar_select %p435, %s22, 7
        %p437 = scmp.lt.s32.totalorder %s23, 0
        %s438 = scalar_select %p437, %s23, 0
        %s439 = sadd.s32 %s438, %s436
        %s440 = smul.addr %s439, 4
        %s441 = scalar_lea.vmem %s3, %s440
      $region52: #{score_lm_forward.11} parent=47 // pred_fallthru
        _
    $region48: #{score_lm_forward.11} parent=5 // pred_fallthru
      _
  $region6: #{score_lm_forward.11} parent=0 // loop_footer
    %s13 = sadd.s32 1, %s9
  $region7: #{score_lm_forward.11} parent=0 // loop_footer_branch
    %8 = sbr.rel target = $region3
  $region8: #{score_lm_forward.11} parent=0 // loop_exit
    _

// kernel: score_lm_forward.10
$region0: #{score_lm_forward.10}
  #allocation0 [shape = 'u32[]', space=smem, size = 0x4, offset = 0x4, fixed_abs, tag = 'smem constant byte address 0x4 - core index']
  #allocation1 [shape = 'u32[144,128]{1,0:T(1,128)}', space=vmem, size = 0x12000, scoped, tag = 'internal scratch']
  %s0 = inlined_call_operand.vmem [shape: f32[2,8,32], index: 0, kind: input, shape index: {}]
  %s1 = inlined_call_operand.vmem [shape: f32[2,1,32], index: 1, kind: input, shape index: {}]
  %s2 = inlined_call_operand.vmem [shape: f32[2,1,32], index: 2, kind: input, shape index: {}]
  %s3 = inlined_call_operand.vmem [shape: bf16[32,32], index: 3, kind: input, shape index: {}]
  %s4 = inlined_call_operand.vmem [shape: bf16[32,32], index: 4, kind: input, shape index: {}]
  %s5 = inlined_call_operand.vmem [shape: bf16[32,32], index: 5, kind: input, shape index: {}]
  %s6 = inlined_call_operand.vmem [shape: f32[8,32], index: 6, kind: input, shape index: {}]
  %s7 = inlined_call_operand.vmem [shape: f32[8,32], index: 7, kind: input, shape index: {}]
  %s8 = inlined_call_operand.vmem [shape: f32[8,32], index: 8, kind: input, shape index: {}]
  %s9 = inlined_call_operand.vmem [shape: bf16[2,8,32], index: 9, kind: output, shape index: {0}]
  %s10 = inlined_call_operand.vmem [shape: bf16[2,8,32], index: 10, kind: output, shape index: {1}]
  %s11 = inlined_call_operand.vmem [shape: bf16[2,8,32], index: 11, kind: output, shape index: {2}]
  %12 = xla_tuple %s9, %s10, %s11
  %s13 = sld [smem:[#allocation0]]
  $region85: #{score_lm_forward.10} parent=0
    _
  %s15 = ssub.s32 1, %s13
  %s16 = scalar_select 0, %s15, %s13
  loop: start=0, step=1, limit=4
  $region2: #{score_lm_forward.10} parent=0 // loop_pre_header
    _
  $region3: #{score_lm_forward.10} parent=0 // loop_header
    %s18 = sphi 0, %s22
    %p19 = scmp.ge.s32.totalorder %s18, 4
    %s25 = sphi 0, %s37
    %s26 = sphi 0, %s33
    %s27 = sphi 0, %s25
    %s28 = sphi 0, %s26
    %s29 = sphi 0, %s27
    %s30 = sphi 0, %s28
    %s42 = sphi 0, %s44
    %s45 = sphi 0, %s42
    %s46 = sphi 0, %s45
    %s62 = sphi 0, %s46
    %s68 = sphi 0, %s70
    %s71 = sphi 0, %s68
    %s72 = sphi 0, %s71
    %s88 = sphi 0, %s72
    %s94 = sphi 0, %s96
    %s97 = sphi 0, %s94
    %s98 = sphi 0, %s97
    %s114 = sphi 0, %s98
    %s118 = sphi 0, %s118
    %s120 = sphi 0, %s118
    %s121 = sphi 0, %s120
    %s135 = sphi 0, %s121
    %s139 = sphi 0, %s139
    %s141 = sphi 0, %s139
    %s142 = sphi 0, %s141
    %s156 = sphi 0, %s142
    %s160 = sphi 0, %s160
    %s162 = sphi 0, %s160
    %s163 = sphi 0, %s162
    %s177 = sphi 0, %s163
    %s183 = sphi 0, %s185
    %s186 = sphi 0, %s183
    %s187 = sphi 0, %s186
    %s203 = sphi 0, %s187
    %s209 = sphi 0, %s211
    %s212 = sphi 0, %s209
    %s213 = sphi 0, %s212
    %s229 = sphi 0, %s213
    %s235 = sphi 0, %s237
    %s238 = sphi 0, %s235
    %s239 = sphi 0, %s238
    %s255 = sphi 0, %s239
    %s263 = sphi 0, %s265
    %s266 = sphi 0, %s263
    %s267 = sphi 0, %s266
    %s283 = sphi 0, %s267
    %s291 = sphi 0, %s293
    %s294 = sphi 0, %s291
    %s295 = sphi 0, %s294
    %s311 = sphi 0, %s295
    %s319 = sphi 0, %s321
    %s322 = sphi 0, %s319
    %s323 = sphi 0, %s322
    %s339 = sphi 0, %s323
  $region4: #{score_lm_forward.10} parent=0 // loop_header_branch
    %21 = sbr.rel (%p19) target = $region8
  $region5: #{score_lm_forward.10} parent=0 // loop_body
    %s23 = ssub.s32 %s18, 1
    %s24 = ssub.s32 %s18, 2
    %s31 = sadd.s32 1, %s26
    %p32 = scmp.ge.s32.totalorder %s31, 1
    %s33 = scalar_select %p32, 0, %s31
    %s34 = sadd.s32 1, %s25
    %s35 = scalar_select %p32, %s34, %s25
    %p36 = scmp.ge.s32.totalorder %s35, 2
    %s37 = scalar_select %p36, 0, %s35
    %s38 = ssub.s32 %s25, %s37
    %s39 = ssub.s32 %s26, %s33
    %s40 = sor.u32 %s38, %s39
    %p41 = scmp.eq.s32.totalorder %s40, 0
    %s43 = sadd.s32 %s42, 1
    %s44 = scalar_select %p41, %s42, %s43
    %p47 = pneg %p41
    %p48 = scmp.eq.s32.totalorder %s18, 1
    %p49 = por %p47, %p48
    %p50 = scmp.ne.s32.totalorder %s42, %s45
    %p51 = scmp.eq.s32.totalorder %s18, 0
    %p52 = por %p50, %p51
    %p53 = scmp.ne.s32.totalorder %s42, %s45
    %p54 = scmp.eq.s32.totalorder %s23, 1
    %p55 = por %p53, %p54
    %p56 = scmp.ne.s32.totalorder %s45, %s46
    %p57 = scmp.eq.s32.totalorder %s23, 0
    %p58 = por %p56, %p57
    %p59 = scmp.ne.s32.totalorder %s45, %s46
    %p60 = scmp.eq.s32.totalorder %s24, 1
    %p61 = por %p59, %p60
    %p63 = scmp.ne.s32.totalorder %s46, %s62
    %p64 = scmp.eq.s32.totalorder %s24, 0
    %p65 = por %p63, %p64
    %s66 = ssub.s32 %s25, %s37
    %p67 = scmp.eq.s32.totalorder %s66, 0
    %s69 = sadd.s32 %s68, 1
    %s70 = scalar_select %p67, %s68, %s69
    %p73 = pneg %p67
    %p74 = scmp.eq.s32.totalorder %s18, 1
    %p75 = por %p73, %p74
    %p76 = scmp.ne.s32.totalorder %s68, %s71
    %p77 = scmp.eq.s32.totalorder %s18, 0
    %p78 = por %p76, %p77
    %p79 = scmp.ne.s32.totalorder %s68, %s71
    %p80 = scmp.eq.s32.totalorder %s23, 1
    %p81 = por %p79, %p80
    %p82 = scmp.ne.s32.totalorder %s71, %s72
    %p83 = scmp.eq.s32.totalorder %s23, 0
    %p84 = por %p82, %p83
    %p85 = scmp.ne.s32.totalorder %s71, %s72
    %p86 = scmp.eq.s32.totalorder %s24, 1
    %p87 = por %p85, %p86
    %p89 = scmp.ne.s32.totalorder %s72, %s88
    %p90 = scmp.eq.s32.totalorder %s24, 0
    %p91 = por %p89, %p90
    %s92 = ssub.s32 %s25, %s37
    %p93 = scmp.eq.s32.totalorder %s92, 0
    %s95 = sadd.s32 %s94, 1
    %s96 = scalar_select %p93, %s94, %s95
    %p99 = pneg %p93
    %p100 = scmp.eq.s32.totalorder %s18, 1
    %p101 = por %p99, %p100
    %p102 = scmp.ne.s32.totalorder %s94, %s97
    %p103 = scmp.eq.s32.totalorder %s18, 0
    %p104 = por %p102, %p103
    %p105 = scmp.ne.s32.totalorder %s94, %s97
    %p106 = scmp.eq.s32.totalorder %s23, 1
    %p107 = por %p105, %p106
    %p108 = scmp.ne.s32.totalorder %s97, %s98
    %p109 = scmp.eq.s32.totalorder %s23, 0
    %p110 = por %p108, %p109
    %p111 = scmp.ne.s32.totalorder %s97, %s98
    %p112 = scmp.eq.s32.totalorder %s24, 1
    %p113 = por %p111, %p112
    %p115 = scmp.ne.s32.totalorder %s98, %s114
    %p116 = scmp.eq.s32.totalorder %s24, 0
    %p117 = por %p115, %p116
    %s119 = sadd.s32 %s118, 1
    %p122 = scmp.eq.s32.totalorder %s18, 1
    %p123 = scmp.ne.s32.totalorder %s118, %s120
    %p124 = scmp.eq.s32.totalorder %s18, 0
    %p125 = por %p123, %p124
    %p126 = scmp.ne.s32.totalorder %s118, %s120
    %p127 = scmp.eq.s32.totalorder %s23, 1
    %p128 = por %p126, %p127
    %p129 = scmp.ne.s32.totalorder %s120, %s121
    %p130 = scmp.eq.s32.totalorder %s23, 0
    %p131 = por %p129, %p130
    %p132 = scmp.ne.s32.totalorder %s120, %s121
    %p133 = scmp.eq.s32.totalorder %s24, 1
    %p134 = por %p132, %p133
    %p136 = scmp.ne.s32.totalorder %s121, %s135
    %p137 = scmp.eq.s32.totalorder %s24, 0
    %p138 = por %p136, %p137
    %s140 = sadd.s32 %s139, 1
    %p143 = scmp.eq.s32.totalorder %s18, 1
    %p144 = scmp.ne.s32.totalorder %s139, %s141
    %p145 = scmp.eq.s32.totalorder %s18, 0
    %p146 = por %p144, %p145
    %p147 = scmp.ne.s32.totalorder %s139, %s141
    %p148 = scmp.eq.s32.totalorder %s23, 1
    %p149 = por %p147, %p148
    %p150 = scmp.ne.s32.totalorder %s141, %s142
    %p151 = scmp.eq.s32.totalorder %s23, 0
    %p152 = por %p150, %p151
    %p153 = scmp.ne.s32.totalorder %s141, %s142
    %p154 = scmp.eq.s32.totalorder %s24, 1
    %p155 = por %p153, %p154
    %p157 = scmp.ne.s32.totalorder %s142, %s156
    %p158 = scmp.eq.s32.totalorder %s24, 0
    %p159 = por %p157, %p158
    %s161 = sadd.s32 %s160, 1
    %p164 = scmp.eq.s32.totalorder %s18, 1
    %p165 = scmp.ne.s32.totalorder %s160, %s162
    %p166 = scmp.eq.s32.totalorder %s18, 0
    %p167 = por %p165, %p166
    %p168 = scmp.ne.s32.totalorder %s160, %s162
    %p169 = scmp.eq.s32.totalorder %s23, 1
    %p170 = por %p168, %p169
    %p171 = scmp.ne.s32.totalorder %s162, %s163
    %p172 = scmp.eq.s32.totalorder %s23, 0
    %p173 = por %p171, %p172
    %p174 = scmp.ne.s32.totalorder %s162, %s163
    %p175 = scmp.eq.s32.totalorder %s24, 1
    %p176 = por %p174, %p175
    %p178 = scmp.ne.s32.totalorder %s163, %s177
    %p179 = scmp.eq.s32.totalorder %s24, 0
    %p180 = por %p178, %p179
    %s181 = ssub.s32 %s26, %s33
    %p182 = scmp.eq.s32.totalorder %s181, 0
    %s184 = sadd.s32 %s183, 1
    %s185 = scalar_select %p182, %s183, %s184
    %p188 = pneg %p182
    %p189 = scmp.eq.s32.totalorder %s18, 1
    %p190 = por %p188, %p189
    %p191 = scmp.ne.s32.totalorder %s183, %s186
    %p192 = scmp.eq.s32.totalorder %s18, 0
    %p193 = por %p191, %p192
    %p194 = scmp.ne.s32.totalorder %s183, %s186
    %p195 = scmp.eq.s32.totalorder %s23, 1
    %p196 = por %p194, %p195
    %p197 = scmp.ne.s32.totalorder %s186, %s187
    %p198 = scmp.eq.s32.totalorder %s23, 0
    %p199 = por %p197, %p198
    %p200 = scmp.ne.s32.totalorder %s186, %s187
    %p201 = scmp.eq.s32.totalorder %s24, 1
    %p202 = por %p200, %p201
    %p204 = scmp.ne.s32.totalorder %s187, %s203
    %p205 = scmp.eq.s32.totalorder %s24, 0
    %p206 = por %p204, %p205
    %s207 = ssub.s32 %s26, %s33
    %p208 = scmp.eq.s32.totalorder %s207, 0
    %s210 = sadd.s32 %s209, 1
    %s211 = scalar_select %p208, %s209, %s210
    %p214 = pneg %p208
    %p215 = scmp.eq.s32.totalorder %s18, 1
    %p216 = por %p214, %p215
    %p217 = scmp.ne.s32.totalorder %s209, %s212
    %p218 = scmp.eq.s32.totalorder %s18, 0
    %p219 = por %p217, %p218
    %p220 = scmp.ne.s32.totalorder %s209, %s212
    %p221 = scmp.eq.s32.totalorder %s23, 1
    %p222 = por %p220, %p221
    %p223 = scmp.ne.s32.totalorder %s212, %s213
    %p224 = scmp.eq.s32.totalorder %s23, 0
    %p225 = por %p223, %p224
    %p226 = scmp.ne.s32.totalorder %s212, %s213
    %p227 = scmp.eq.s32.totalorder %s24, 1
    %p228 = por %p226, %p227
    %p230 = scmp.ne.s32.totalorder %s213, %s229
    %p231 = scmp.eq.s32.totalorder %s24, 0
    %p232 = por %p230, %p231
    %s233 = ssub.s32 %s26, %s33
    %p234 = scmp.eq.s32.totalorder %s233, 0
    %s236 = sadd.s32 %s235, 1
    %s237 = scalar_select %p234, %s235, %s236
    %p240 = pneg %p234
    %p241 = scmp.eq.s32.totalorder %s18, 1
    %p242 = por %p240, %p241
    %p243 = scmp.ne.s32.totalorder %s235, %s238
    %p244 = scmp.eq.s32.totalorder %s18, 0
    %p245 = por %p243, %p244
    %p246 = scmp.ne.s32.totalorder %s235, %s238
    %p247 = scmp.eq.s32.totalorder %s23, 1
    %p248 = por %p246, %p247
    %p249 = scmp.ne.s32.totalorder %s238, %s239
    %p250 = scmp.eq.s32.totalorder %s23, 0
    %p251 = por %p249, %p250
    %p252 = scmp.ne.s32.totalorder %s238, %s239
    %p253 = scmp.eq.s32.totalorder %s24, 1
    %p254 = por %p252, %p253
    %p256 = scmp.ne.s32.totalorder %s239, %s255
    %p257 = scmp.eq.s32.totalorder %s24, 0
    %p258 = por %p256, %p257
    %s259 = ssub.s32 %s25, %s37
    %s260 = ssub.s32 %s26, %s33
    %s261 = sor.u32 %s259, %s260
    %p262 = scmp.eq.s32.totalorder %s261, 0
    %s264 = sadd.s32 %s263, 1
    %s265 = scalar_select %p262, %s263, %s264
    %p268 = pneg %p262
    %p269 = scmp.eq.s32.totalorder %s18, 1
    %p270 = por %p268, %p269
    %p271 = scmp.ne.s32.totalorder %s263, %s266
    %p272 = scmp.eq.s32.totalorder %s18, 0
    %p273 = por %p271, %p272
    %p274 = scmp.ne.s32.totalorder %s263, %s266
    %p275 = scmp.eq.s32.totalorder %s23, 1
    %p276 = por %p274, %p275
    %p277 = scmp.ne.s32.totalorder %s266, %s267
    %p278 = scmp.eq.s32.totalorder %s23, 0
    %p279 = por %p277, %p278
    %p280 = scmp.ne.s32.totalorder %s266, %s267
    %p281 = scmp.eq.s32.totalorder %s24, 1
    %p282 = por %p280, %p281
    %p284 = scmp.ne.s32.totalorder %s267, %s283
    %p285 = scmp.eq.s32.totalorder %s24, 0
    %p286 = por %p284, %p285
    %s287 = ssub.s32 %s25, %s37
    %s288 = ssub.s32 %s26, %s33
    %s289 = sor.u32 %s287, %s288
    %p290 = scmp.eq.s32.totalorder %s289, 0
    %s292 = sadd.s32 %s291, 1
    %s293 = scalar_select %p290, %s291, %s292
    %p296 = pneg %p290
    %p297 = scmp.eq.s32.totalorder %s18, 1
    %p298 = por %p296, %p297
    %p299 = scmp.ne.s32.totalorder %s291, %s294
    %p300 = scmp.eq.s32.totalorder %s18, 0
    %p301 = por %p299, %p300
    %p302 = scmp.ne.s32.totalorder %s291, %s294
    %p303 = scmp.eq.s32.totalorder %s23, 1
    %p304 = por %p302, %p303
    %p305 = scmp.ne.s32.totalorder %s294, %s295
    %p306 = scmp.eq.s32.totalorder %s23, 0
    %p307 = por %p305, %p306
    %p308 = scmp.ne.s32.totalorder %s294, %s295
    %p309 = scmp.eq.s32.totalorder %s24, 1
    %p310 = por %p308, %p309
    %p312 = scmp.ne.s32.totalorder %s295, %s311
    %p313 = scmp.eq.s32.totalorder %s24, 0
    %p314 = por %p312, %p313
    %s315 = ssub.s32 %s25, %s37
    %s316 = ssub.s32 %s26, %s33
    %s317 = sor.u32 %s315, %s316
    %p318 = scmp.eq.s32.totalorder %s317, 0
    %s320 = sadd.s32 %s319, 1
    %s321 = scalar_select %p318, %s319, %s320
    %p324 = pneg %p318
    %p325 = scmp.eq.s32.totalorder %s18, 1
    %p326 = por %p324, %p325
    %p327 = scmp.ne.s32.totalorder %s319, %s322
    %p328 = scmp.eq.s32.totalorder %s18, 0
    %p329 = por %p327, %p328
    %p330 = scmp.ne.s32.totalorder %s319, %s322
    %p331 = scmp.eq.s32.totalorder %s23, 1
    %p332 = por %p330, %p331
    %p333 = scmp.ne.s32.totalorder %s322, %s323
    %p334 = scmp.eq.s32.totalorder %s23, 0
    %p335 = por %p333, %p334
    %p336 = scmp.ne.s32.totalorder %s322, %s323
    %p337 = scmp.eq.s32.totalorder %s24, 1
    %p338 = por %p336, %p337
    %p340 = scmp.ne.s32.totalorder %s323, %s339
    %p341 = scmp.eq.s32.totalorder %s24, 0
    %p342 = por %p340, %p341
    %p343 = scmp.le.s32.totalorder 1, %s18
    %p344 = scmp.lt.s32.totalorder %s18, 3
    %p345 = pnand %p343, %p344
    %p346 = pneg %p345
    // Predicated region
    $region9: #{score_lm_forward.10} parent=5 // pred_check
      _
    $region10: #{score_lm_forward.10} parent=5 // pred_check_branch
      %348 = sbr.rel (%p345) target = $region12
    $region11: #{score_lm_forward.10} parent=5 // pred_region
      %s349 = ssub.s32 %s18, 1
      // Predicated region
      $region13: #{score_lm_forward.10} parent=11 // pred_check
        %p350 = pneg %p131
      $region14: #{score_lm_forward.10} parent=11 // pred_check_branch
        %352 = sbr.rel (%p350) target = $region16
      $region15: #{score_lm_forward.10} parent=11 // pred_region
        _
      $region16: #{score_lm_forward.10} parent=11 // pred_fallthru
        _
      // Predicated region
      $region17: #{score_lm_forward.10} parent=11 // pred_check
        %p353 = pneg %p152
      $region18: #{score_lm_forward.10} parent=11 // pred_check_branch
        %355 = sbr.rel (%p353) target = $region20
      $region19: #{score_lm_forward.10} parent=11 // pred_region
        _
      $region20: #{score_lm_forward.10} parent=11 // pred_fallthru
        _
      // Predicated region
      $region21: #{score_lm_forward.10} parent=11 // pred_check
        %p356 = pneg %p173
      $region22: #{score_lm_forward.10} parent=11 // pred_check_branch
        %358 = sbr.rel (%p356) target = $region24
      $region23: #{score_lm_forward.10} parent=11 // pred_region
        _
      $region24: #{score_lm_forward.10} parent=11 // pred_fallthru
        _
      // Predicated region
      $region25: #{score_lm_forward.10} parent=11 // pred_check
        %p359 = pneg %p199
      $region26: #{score_lm_forward.10} parent=11 // pred_check_branch
        %361 = sbr.rel (%p359) target = $region28
      $region27: #{score_lm_forward.10} parent=11 // pred_region
        %p362 = scmp.lt.s32.totalorder %s28, 0
        %s363 = scalar_select %p362, %s28, 0
        %s364 = smul.addr %s363, 8
        %s365 = scalar_lea.vmem %s6, %s364
      $region28: #{score_lm_forward.10} parent=11 // pred_fallthru
        _
      // Predicated region
      $region29: #{score_lm_forward.10} parent=11 // pred_check
        %p366 = pneg %p225
      $region30: #{score_lm_forward.10} parent=11 // pred_check_branch
        %368 = sbr.rel (%p366) target = $region32
      $region31: #{score_lm_forward.10} parent=11 // pred_region
        %p369 = scmp.lt.s32.totalorder %s28, 0
        %s370 = scalar_select %p369, %s28, 0
        %s371 = smul.addr %s370, 8
        %s372 = scalar_lea.vmem %s7, %s371
      $region32: #{score_lm_forward.10} parent=11 // pred_fallthru
        _
      // Predicated region
      $region33: #{score_lm_forward.10} parent=11 // pred_check
        %p373 = pneg %p251
      $region34: #{score_lm_forward.10} parent=11 // pred_check_branch
        %375 = sbr.rel (%p373) target = $region36
      $region35: #{score_lm_forward.10} parent=11 // pred_region
        %p376 = scmp.lt.s32.totalorder %s28, 0
        %s377 = scalar_select %p376, %s28, 0
        %s378 = smul.addr %s377, 8
        %s379 = scalar_lea.vmem %s8, %s378
      $region36: #{score_lm_forward.10} parent=11 // pred_fallthru
        _
    $region12: #{score_lm_forward.10} parent=5 // pred_fallthru
      _
    %p380 = scmp.lt.s32.totalorder %s18, 2
    // Predicated region
    $region37: #{score_lm_forward.10} parent=5 // pred_check
      %p381 = pneg %p380
    $region38: #{score_lm_forward.10} parent=5 // pred_check_branch
      %383 = sbr.rel (%p381) target = $region40
    $region39: #{score_lm_forward.10} parent=5 // pred_region
      // Predicated region
      $region41: #{score_lm_forward.10} parent=39 // pred_check
        %p384 = pneg %p52
      $region42: #{score_lm_forward.10} parent=39 // pred_check_branch
        %386 = sbr.rel (%p384) target = $region44
      $region43: #{score_lm_forward.10} parent=39 // pred_region
        %p387 = scmp.lt.s32.totalorder %s25, 1
        %s388 = scalar_select %p387, %s25, 1
        %p389 = scmp.lt.s32.totalorder %s26, 0
        %s390 = scalar_select %p389, %s26, 0
        %s391 = sadd.s32 %s390, %s388
        %s392 = smul.addr %s391, 8
        %s393 = scalar_lea.vmem %s0, %s392
      $region44: #{score_lm_forward.10} parent=39 // pred_fallthru
        _
      // Predicated region
      $region45: #{score_lm_forward.10} parent=39 // pred_check
        %p394 = pneg %p78
      $region46: #{score_lm_forward.10} parent=39 // pred_check_branch
        %396 = sbr.rel (%p394) target = $region48
      $region47: #{score_lm_forward.10} parent=39 // pred_region
        %p397 = scmp.lt.s32.totalorder %s25, 1
        %s398 = scalar_select %p397, %s25, 1
        %s399 = scalar_lea.vmem %s1, %s398
      $region48: #{score_lm_forward.10} parent=39 // pred_fallthru
        _
      // Predicated region
      $region49: #{score_lm_forward.10} parent=39 // pred_check
        %p400 = pneg %p104
      $region50: #{score_lm_forward.10} parent=39 // pred_check_branch
        %402 = sbr.rel (%p400) target = $region52
      $region51: #{score_lm_forward.10} parent=39 // pred_region
        %p403 = scmp.lt.s32.totalorder %s25, 1
        %s404 = scalar_select %p403, %s25, 1
        %s405 = scalar_lea.vmem %s2, %s404
      $region52: #{score_lm_forward.10} parent=39 // pred_fallthru
        _
    $region40: #{score_lm_forward.10} parent=5 // pred_fallthru
      _
    %p406 = scmp.le.s32.totalorder 1, %s18
    %p407 = scmp.lt.s32.totalorder %s18, 3
    %p408 = pnand %p406, %p407
    %p409 = pneg %p408
    // Predicated region
    $region53: #{score_lm_forward.10} parent=5 // pred_check
      _
    $region54: #{score_lm_forward.10} parent=5 // pred_check_branch
      %411 = sbr.rel (%p408) target = $region56
    $region55: #{score_lm_forward.10} parent=5 // pred_region
      %s412 = ssub.s32 %s18, 1
      %p413 = scmp.lt.s32.totalorder %s27, 1
      %s414 = scalar_select %p413, %s27, 1
      %p415 = scmp.lt.s32.totalorder %s28, 0
      %s416 = scalar_select %p415, %s28, 0
      %s417 = sadd.s32 %s416, %s414
      %s418 = smul.addr %s417, 8
      %s419 = scalar_lea.vmem %s0, %s418
      %p420 = pneg %p58
      %p421 = pneg %p55
      %p422 = scmp.lt.s32.totalorder %s27, 1
      %s423 = scalar_select %p422, %s27, 1
      %s424 = scalar_lea.vmem %s1, %s423
      %p425 = pneg %p84
      %p426 = pneg %p81
      %p427 = scmp.lt.s32.totalorder %s27, 1
      %s428 = scalar_select %p427, %s27, 1
      %s429 = scalar_lea.vmem %s2, %s428
      %p430 = pneg %p110
      %p431 = pneg %p107
      %p432 = pneg %p131
      %p433 = pneg %p128
      %p434 = pneg %p152
      %p435 = pneg %p149
      %p436 = pneg %p173
      %p437 = pneg %p170
      %p438 = scmp.lt.s32.totalorder %s28, 0
      %s439 = scalar_select %p438, %s28, 0
      %s440 = smul.addr %s439, 8
      %s441 = scalar_lea.vmem %s6, %s440
      %p442 = pneg %p199
      %p443 = pneg %p196
      %p444 = scmp.lt.s32.totalorder %s28, 0
      %s445 = scalar_select %p444, %s28, 0
      %s446 = smul.addr %s445, 8
      %s447 = scalar_lea.vmem %s7, %s446
      %p448 = pneg %p225
      %p449 = pneg %p222
      %p450 = scmp.lt.s32.totalorder %s28, 0
      %s451 = scalar_select %p450, %s28, 0
      %s452 = smul.addr %s451, 8
      %s453 = scalar_lea.vmem %s8, %s452
      %p454 = pneg %p251
      %p455 = pneg %p248
      %p456 = pneg %p279
      %p457 = pneg %p276
      %p458 = scmp.lt.s32.totalorder %s27, 1
      %s459 = scalar_select %p458, %s27, 1
      %p460 = scmp.lt.s32.totalorder %s28, 0
      %s461 = scalar_select %p460, %s28, 0
      %s462 = sadd.s32 %s461, %s459
      %s463 = smul.addr %s462, 4
      %s464 = scalar_lea.vmem %s9, %s463
      %p465 = pneg %p307
      %p466 = pneg %p304
      %p467 = scmp.lt.s32.totalorder %s27, 1
      %s468 = scalar_select %p467, %s27, 1
      %p469 = scmp.lt.s32.totalorder %s28, 0
      %s470 = scalar_select %p469, %s28, 0
      %s471 = sadd.s32 %s470, %s468
      %s472 = smul.addr %s471, 4
      %s473 = scalar_lea.vmem %s10, %s472
      %p474 = pneg %p335
      %p475 = pneg %p332
      %p476 = scmp.lt.s32.totalorder %s27, 1
      %s477 = scalar_select %p476, %s27, 1
      %p478 = scmp.lt.s32.totalorder %s28, 0
      %s479 = scalar_select %p478, %s28, 0
      %s480 = sadd.s32 %s479, %s477
      %s481 = smul.addr %s480, 4
      %s482 = scalar_lea.vmem %s11, %s481
      %p483 = scmp.lt.s32.totalorder %s27, 1
      %s484 = scalar_select %p483, %s27, 1
      %p485 = scmp.lt.s32.totalorder %s28, 0
      %s486 = scalar_select %p485, %s28, 0
      %s487 = sadd.s32 %s486, %s484
      %s488 = smul.addr %s487, 8
      %s489 = scalar_lea.vmem %s0, %s488
      %p490 = scmp.lt.s32.totalorder %s27, 1
      %s491 = scalar_select %p490, %s27, 1
      %s492 = scalar_lea.vmem %s1, %s491
      %p493 = scmp.lt.s32.totalorder %s27, 1
      %s494 = scalar_select %p493, %s27, 1
      %s495 = scalar_lea.vmem %s2, %s494
      %p496 = scmp.lt.s32.totalorder %s28, 0
      %s497 = scalar_select %p496, %s28, 0
      %s498 = smul.addr %s497, 8
      %s499 = scalar_lea.vmem %s6, %s498
      %p500 = scmp.lt.s32.totalorder %s28, 0
      %s501 = scalar_select %p500, %s28, 0
      %s502 = smul.addr %s501, 8
      %s503 = scalar_lea.vmem %s7, %s502
      %p504 = scmp.lt.s32.totalorder %s28, 0
      %s505 = scalar_select %p504, %s28, 0
      %s506 = smul.addr %s505, 8
      %s507 = scalar_lea.vmem %s8, %s506
      %p508 = scmp.lt.s32.totalorder %s27, 1
      %s509 = scalar_select %p508, %s27, 1
      %p510 = scmp.lt.s32.totalorder %s28, 0
      %s511 = scalar_select %p510, %s28, 0
      %s512 = sadd.s32 %s511, %s509
      %s513 = smul.addr %s512, 4
      %s514 = scalar_lea.vmem %s9, %s513
      %p515 = scmp.lt.s32.totalorder %s27, 1
      %s516 = scalar_select %p515, %s27, 1
      %p517 = scmp.lt.s32.totalorder %s28, 0
      %s518 = scalar_select %p517, %s28, 0
      %s519 = sadd.s32 %s518, %s516
      %s520 = smul.addr %s519, 4
      %s521 = scalar_lea.vmem %s10, %s520
      %p522 = scmp.lt.s32.totalorder %s27, 1
      %s523 = scalar_select %p522, %s27, 1
      %p524 = scmp.lt.s32.totalorder %s28, 0
      %s525 = scalar_select %p524, %s28, 0
      %s526 = sadd.s32 %s525, %s523
      %s527 = smul.addr %s526, 4
      %s528 = scalar_lea.vmem %s11, %s527
      %v530 = vld [vmem:[%s489] sm:$0xff]
      %vm531 = vcmask 261120
      %v532 = vsel %vm531, %v530, 0.0
      %533 = vadd.xlane.f32.xlu0 %v532
      %v534 = vpop.xlane.xlu0 %533
      %v535 = vrcp.pop 32.0
      %v536 = vmul.f32 %v534, %v535
      %v537 = vsub.f32 %v530, %v536
      %v538 = vmul.f32 %v537, %v537
      %v539 = vsel %vm531, %v538, 0.0
      %540 = vadd.xlane.f32.xlu0 %v539
      %v541 = vpop.xlane.xlu0 %540
      %v542 = vmul.f32 %v541, %v535
      %v543 = vadd.f32 %v542, 1e-05
      %v544 = vrsqrt.pop %v543
      %v545 = vmul.f32 %v537, %v544
      %v546 = vld [vmem:[%s492] sm:$0x1]
      %v548 = vlaneseq
      %v549 = vshrl.u32 %v548, 7
      %v550 = vsub.s32 0, %v549
      %v551 = vrot.slane %v546, %v550
      %v553 = vmul.f32 %v545, %v551
      %v554 = vld [vmem:[%s495] sm:$0x1]
      %v556 = vlaneseq
      %v557 = vshrl.u32 %v556, 7
      %v558 = vsub.s32 0, %v557
      %v559 = vrot.slane %v554, %v558
      %v561 = vadd.f32 %v553, %v559
      %v562 = vpack.c.bf16 %v561, %v561
      %v563 = vld [vmem:[%s499] sm:$0xff]
      %v564 = vld [vmem:[%s503] sm:$0xff]
      %v565 = vld [vmem:[%s507] sm:$0xff]
      %v566 = vld [vmem:[%s3] sm:$0xf]
      %v567 = vld [vmem:[%s3 + $0x4] sm:$0xf]
      %v568 = vld [vmem:[%s3 + $0x8] sm:$0xf]
      %v569 = vld [vmem:[%s3 + $0xc] sm:$0xf]
      %v574 = vunpack.c.l.b16 %v566
      %v575 = vunpack.c.l.b16 %v567
      %v576 = vunpack.c.l.b16 %v568
      %v577 = vunpack.c.l.b16 %v569
      %v578 = vpack.c.b16 %v575, %v574
      %v579 = vpack.c.b16 %v577, %v576
      %v583 = vsel %vm531, %v562, 0
      %585 = vmatprep.subr.bf16.mxu0 0
      %586 = vmatpush1.bf16.msra.mxu0 %v578
      %587 = vmatprep.subr.bf16.mxu0 0
      %588 = vmatpush1.bf16.msra.mxu0 %v579
      %589 = vmatprep.subr.bf16.mxu0 0
      %590 = vmatpush1.bf16.msra.mxu0 0
      %591 = vmatprep.subr.bf16.mxu0 0
      %592 = vmatpush1.bf16.msra.mxu0 0
      %593 = vmatprep.subr.bf16.mxu0 0
      %594 = vmatpush1.bf16.msra.mxu0 0
      %595 = vmatprep.subr.bf16.mxu0 0
      %596 = vmatpush1.bf16.msra.mxu0 0
      %597 = vmatprep.subr.bf16.mxu0 0
      %598 = vmatpush1.bf16.msra.mxu0 0
      %599 = vmatprep.subr.bf16.mxu0 0
      %600 = vmatpush1.bf16.msra.mxu0 0
      %601 = vmatprep.subr.bf16.mxu0 0
      %602 = vmatpush1.bf16.msra.mxu0 0
      %603 = vmatprep.subr.bf16.mxu0 0
      %604 = vmatpush1.bf16.msra.mxu0 0
      %605 = vmatprep.subr.bf16.mxu0 0
      %606 = vmatpush1.bf16.msra.mxu0 0
      %607 = vmatprep.subr.bf16.mxu0 0
      %608 = vmatpush1.bf16.msra.mxu0 0
      %609 = vmatprep.subr.bf16.mxu0 0
      %610 = vmatpush1.bf16.msra.mxu0 0
      %611 = vmatprep.subr.bf16.mxu0 0
      %612 = vmatpush1.bf16.msra.mxu0 0
      %613 = vmatprep.subr.bf16.mxu0 0
      %614 = vmatpush1.bf16.msra.mxu0 0
      %615 = vmatprep.subr.bf16.mxu0 0
      %616 = vmatpush1.bf16.msra.mxu0 0
      %617 = vmatprep.mubr.bf16.mxu0 0
      %618 = vmatmul.mubr.bf16.gmra.mrb[0].mxu0 %v583
      %v619 = vpop.f32.mrb[0].mxu0
      %v620 = vadd.f32 0.0, %v619
      %v621 = vpop.f32.mrb[0].mxu0
      %v622 = vpop.f32.mrb[0].mxu0
      %v623 = vpop.f32.mrb[0].mxu0
      %624 = vdwg.mxu0
      %v625 = vmul.f32 %v620, 0.35355338
      %v626 = vsub.f32 %v565, %v564
      %v627 = vsub.f32 0.0, %v625
      %629 = vrot.lane.b32.xlu0 %v627, 124
      %v630 = vpop.permute.xlu0 %629
      %633 = vrot.lane.b32.xlu0 %v625, 4
      %v634 = vpop.permute.xlu0 %633
      %vm636 = vcmask 31744
      %v637 = vsel %vm636, %v630, %v634
      %638 = vrot.lane.b32.xlu0 %v627, 116
      %v639 = vpop.permute.xlu0 %638
      %641 = vrot.lane.b32.xlu0 %v625, 124
      %v642 = vpop.permute.xlu0 %641
      %v644 = vsel %vm636, %v639, %v642
      %645 = vrot.lane.b32.xlu0 %v627, 108
      %v646 = vpop.permute.xlu0 %645
      %648 = vrot.lane.b32.xlu0 %v625, 116
      %v649 = vpop.permute.xlu0 %648
      %v651 = vsel %vm636, %v646, %v649
      %652 = vrot.lane.b32.xlu0 %v627, 100
      %v653 = vpop.permute.xlu0 %652
      %655 = vrot.lane.b32.xlu0 %v625, 108
      %v656 = vpop.permute.xlu0 %655
      %v658 = vsel %vm636, %v653, %v656
      %660 = vrot.lane.b32.xlu0 %v644, 8
      %v661 = vpop.permute.xlu0 %660
      %664 = vrot.lane.b32.xlu0 %v651, 16
      %v665 = vpop.permute.xlu0 %664
      %668 = vrot.lane.b32.xlu0 %v658, 24
      %v669 = vpop.permute.xlu0 %668
      %vm671 = vcmask 64512
      %v672 = vsel %vm671, %v637, %v661
      %vm673 = vcmask 130048
      %v674 = vsel %vm673, %v672, %v665
      %vm675 = vcmask 195584
      %v676 = vsel %vm675, %v674, %v669
      %v677 = vmul.f32 %v625, %v563
      %v678 = vmul.f32 %v676, %v626
      %v679 = vadd.f32 %v677, %v678
      %v680 = vpack.c.bf16 %v679, %v679
      %vm681 = vcmask 257024
      %682 = vst.msk [vmem:[%s514] sm:$0xf] %vm681, %v680
      %v683 = vld [vmem:[%s4] sm:$0xf]
      %v684 = vld [vmem:[%s4 + $0x4] sm:$0xf]
      %v685 = vld [vmem:[%s4 + $0x8] sm:$0xf]
      %v686 = vld [vmem:[%s4 + $0xc] sm:$0xf]
      %v691 = vunpack.c.l.b16 %v683
      %v692 = vunpack.c.l.b16 %v684
      %v693 = vunpack.c.l.b16 %v685
      %v694 = vunpack.c.l.b16 %v686
      %v695 = vpack.c.b16 %v692, %v691
      %v696 = vpack.c.b16 %v694, %v693
      %699 = vmatprep.subr.bf16.mxu0 0
      %700 = vmatpush1.bf16.msra.mxu0 %v695
      %701 = vmatprep.subr.bf16.mxu0 0
      %702 = vmatpush1.bf16.msra.mxu0 %v696
      %703 = vmatprep.subr.bf16.mxu0 0
      %704 = vmatpush1.bf16.msra.mxu0 0
      %705 = vmatprep.subr.bf16.mxu0 0
      %706 = vmatpush1.bf16.msra.mxu0 0
      %707 = vmatprep.subr.bf16.mxu0 0
      %708 = vmatpush1.bf16.msra.mxu0 0
      %709 = vmatprep.subr.bf16.mxu0 0
      %710 = vmatpush1.bf16.msra.mxu0 0
      %711 = vmatprep.subr.bf16.mxu0 0
      %712 = vmatpush1.bf16.msra.mxu0 0
      %713 = vmatprep.subr.bf16.mxu0 0
      %714 = vmatpush1.bf16.msra.mxu0 0
      %715 = vmatprep.subr.bf16.mxu0 0
      %716 = vmatpush1.bf16.msra.mxu0 0
      %717 = vmatprep.subr.bf16.mxu0 0
      %718 = vmatpush1.bf16.msra.mxu0 0
      %719 = vmatprep.subr.bf16.mxu0 0
      %720 = vmatpush1.bf16.msra.mxu0 0
      %721 = vmatprep.subr.bf16.mxu0 0
      %722 = vmatpush1.bf16.msra.mxu0 0
      %723 = vmatprep.subr.bf16.mxu0 0
      %724 = vmatpush1.bf16.msra.mxu0 0
      %725 = vmatprep.subr.bf16.mxu0 0
      %726 = vmatpush1.bf16.msra.mxu0 0
      %727 = vmatprep.subr.bf16.mxu0 0
      %728 = vmatpush1.bf16.msra.mxu0 0
      %729 = vmatprep.subr.bf16.mxu0 0
      %730 = vmatpush1.bf16.msra.mxu0 0
      %731 = vmatprep.mubr.bf16.mxu0 0
      %732 = vmatmul.mubr.bf16.gmra.mrb[0].mxu0 %v583
      %v733 = vpop.f32.mrb[0].mxu0
      %v734 = vadd.f32 0.0, %v733
      %v735 = vpop.f32.mrb[0].mxu0
      %v736 = vpop.f32.mrb[0].mxu0
      %v737 = vpop.f32.mrb[0].mxu0
      %738 = vdwg.mxu0
      %v739 = vsub.f32 0.0, %v734
      %741 = vrot.lane.b32.xlu0 %v739, 124
      %v742 = vpop.permute.xlu0 %741
      %745 = vrot.lane.b32.xlu0 %v734, 4
      %v746 = vpop.permute.xlu0 %745
      %v748 = vsel %vm636, %v742, %v746
      %749 = vrot.lane.b32.xlu0 %v739, 116
      %v750 = vpop.permute.xlu0 %749
      %752 = vrot.lane.b32.xlu0 %v734, 124
      %v753 = vpop.permute.xlu0 %752
      %v755 = vsel %vm636, %v750, %v753
      %756 = vrot.lane.b32.xlu0 %v739, 108
      %v757 = vpop.permute.xlu0 %756
      %759 = vrot.lane.b32.xlu0 %v734, 116
      %v760 = vpop.permute.xlu0 %759
      %v762 = vsel %vm636, %v757, %v760
      %763 = vrot.lane.b32.xlu0 %v739, 100
      %v764 = vpop.permute.xlu0 %763
      %766 = vrot.lane.b32.xlu0 %v734, 108
      %v767 = vpop.permute.xlu0 %766
      %v769 = vsel %vm636, %v764, %v767
      %771 = vrot.lane.b32.xlu0 %v755, 8
      %v772 = vpop.permute.xlu0 %771
      %775 = vrot.lane.b32.xlu0 %v762, 16
      %v776 = vpop.permute.xlu0 %775
      %779 = vrot.lane.b32.xlu0 %v769, 24
      %v780 = vpop.permute.xlu0 %779
      %v782 = vsel %vm671, %v748, %v772
      %v783 = vsel %vm673, %v782, %v776
      %v784 = vsel %vm675, %v783, %v780
      %v785 = vmul.f32 %v734, %v563
      %v786 = vmul.f32 %v784, %v626
      %v787 = vadd.f32 %v785, %v786
      %v788 = vpack.c.bf16 %v787, %v787
      %789 = vst.msk [vmem:[%s521] sm:$0xf] %vm681, %v788
      %v790 = vld [vmem:[%s5] sm:$0xf]
      %v791 = vld [vmem:[%s5 + $0x4] sm:$0xf]
      %v792 = vld [vmem:[%s5 + $0x8] sm:$0xf]
      %v793 = vld [vmem:[%s5 + $0xc] sm:$0xf]
      %v798 = vunpack.c.l.b16 %v790
      %v799 = vunpack.c.l.b16 %v791
      %v800 = vunpack.c.l.b16 %v792
      %v801 = vunpack.c.l.b16 %v793
      %v802 = vpack.c.b16 %v799, %v798
      %v803 = vpack.c.b16 %v801, %v800
      %806 = vmatprep.subr.bf16.mxu0 0
      %807 = vmatpush1.bf16.msra.mxu0 %v802
      %808 = vmatprep.subr.bf16.mxu0 0
      %809 = vmatpush1.bf16.msra.mxu0 %v803
      %810 = vmatprep.subr.bf16.mxu0 0
      %811 = vmatpush1.bf16.msra.mxu0 0
      %812 = vmatprep.subr.bf16.mxu0 0
      %813 = vmatpush1.bf16.msra.mxu0 0
      %814 = vmatprep.subr.bf16.mxu0 0
      %815 = vmatpush1.bf16.msra.mxu0 0
      %816 = vmatprep.subr.bf16.mxu0 0
      %817 = vmatpush1.bf16.msra.mxu0 0
      %818 = vmatprep.subr.bf16.mxu0 0
      %819 = vmatpush1.bf16.msra.mxu0 0
      %820 = vmatprep.subr.bf16.mxu0 0
      %821 = vmatpush1.bf16.msra.mxu0 0
      %822 = vmatprep.subr.bf16.mxu0 0
      %823 = vmatpush1.bf16.msra.mxu0 0
      %824 = vmatprep.subr.bf16.mxu0 0
      %825 = vmatpush1.bf16.msra.mxu0 0
      %826 = vmatprep.subr.bf16.mxu0 0
      %827 = vmatpush1.bf16.msra.mxu0 0
      %828 = vmatprep.subr.bf16.mxu0 0
      %829 = vmatpush1.bf16.msra.mxu0 0
      %830 = vmatprep.subr.bf16.mxu0 0
      %831 = vmatpush1.bf16.msra.mxu0 0
      %832 = vmatprep.subr.bf16.mxu0 0
      %833 = vmatpush1.bf16.msra.mxu0 0
      %834 = vmatprep.subr.bf16.mxu0 0
      %835 = vmatpush1.bf16.msra.mxu0 0
      %836 = vmatprep.subr.bf16.mxu0 0
      %837 = vmatpush1.bf16.msra.mxu0 0
      %838 = vmatprep.mubr.bf16.mxu0 0
      %839 = vmatmul.mubr.bf16.gmra.mrb[0].mxu0 %v583
      %v840 = vpop.f32.mrb[0].mxu0
      %v841 = vadd.f32 0.0, %v840
      %v842 = vpop.f32.mrb[0].mxu0
      %v843 = vpop.f32.mrb[0].mxu0
      %v844 = vpop.f32.mrb[0].mxu0
      %845 = vdwg.mxu0
      %v846 = vpack.c.bf16 %v841, %v841
      %847 = vst.msk [vmem:[%s528] sm:$0xf] %vm681, %v846
      %p848 = scmp.lt.s32.totalorder %s27, 1
      %s849 = scalar_select %p848, %s27, 1
      %p850 = scmp.lt.s32.totalorder %s28, 0
      %s851 = scalar_select %p850, %s28, 0
      %s852 = sadd.s32 %s851, %s849
      %s853 = smul.addr %s852, 4
      %s854 = scalar_lea.vmem %s9, %s853
      %p855 = scmp.lt.s32.totalorder %s27, 1
      %s856 = scalar_select %p855, %s27, 1
      %p857 = scmp.lt.s32.totalorder %s28, 0
      %s858 = scalar_select %p857, %s28, 0
      %s859 = sadd.s32 %s858, %s856
      %s860 = smul.addr %s859, 4
      %s861 = scalar_lea.vmem %s10, %s860
      %p862 = scmp.lt.s32.totalorder %s27, 1
      %s863 = scalar_select %p862, %s27, 1
      %p864 = scmp.lt.s32.totalorder %s28, 0
      %s865 = scalar_select %p864, %s28, 0
      %s866 = sadd.s32 %s865, %s863
      %s867 = smul.addr %s866, 4
      %s868 = scalar_lea.vmem %s11, %s867
      // Predicated region
      $region57: #{score_lm_forward.10} parent=55 // pred_check
        %p869 = pneg %p276
      $region58: #{score_lm_forward.10} parent=55 // pred_check_branch
        %871 = sbr.rel (%p869) target = $region60
      $region59: #{score_lm_forward.10} parent=55 // pred_region
        _
      $region60: #{score_lm_forward.10} parent=55 // pred_fallthru
        _
      // Predicated region
      $region61: #{score_lm_forward.10} parent=55 // pred_check
        %p872 = pneg %p304
      $region62: #{score_lm_forward.10} parent=55 // pred_check_branch
        %874 = sbr.rel (%p872) target = $region64
      $region63: #{score_lm_forward.10} parent=55 // pred_region
        _
      $region64: #{score_lm_forward.10} parent=55 // pred_fallthru
        _
      // Predicated region
      $region65: #{score_lm_forward.10} parent=55 // pred_check
        %p875 = pneg %p332
      $region66: #{score_lm_forward.10} parent=55 // pred_check_branch
        %877 = sbr.rel (%p875) target = $region68
      $region67: #{score_lm_forward.10} parent=55 // pred_region
        _
      $region68: #{score_lm_forward.10} parent=55 // pred_fallthru
        _
    $region56: #{score_lm_forward.10} parent=5 // pred_fallthru
      _
    %p878 = scmp.le.s32.totalorder 2, %s18
    // Predicated region
    $region69: #{score_lm_forward.10} parent=5 // pred_check
      %p879 = pneg %p878
    $region70: #{score_lm_forward.10} parent=5 // pred_check_branch
      %881 = sbr.rel (%p879) target = $region72
    $region71: #{score_lm_forward.10} parent=5 // pred_region
      %s882 = ssub.s32 %s18, 2
      // Predicated region
      $region73: #{score_lm_forward.10} parent=71 // pred_check
        %p883 = pneg %p282
      $region74: #{score_lm_forward.10} parent=71 // pred_check_branch
        %885 = sbr.rel (%p883) target = $region76
      $region75: #{score_lm_forward.10} parent=71 // pred_region
        %p886 = scmp.lt.s32.totalorder %s29, 1
        %s887 = scalar_select %p886, %s29, 1
        %p888 = scmp.lt.s32.totalorder %s30, 0
        %s889 = scalar_select %p888, %s30, 0
        %s890 = sadd.s32 %s889, %s887
        %s891 = smul.addr %s890, 4
        %s892 = scalar_lea.vmem %s9, %s891
      $region76: #{score_lm_forward.10} parent=71 // pred_fallthru
        _
      // Predicated region
      $region77: #{score_lm_forward.10} parent=71 // pred_check
        %p893 = pneg %p310
      $region78: #{score_lm_forward.10} parent=71 // pred_check_branch
        %895 = sbr.rel (%p893) target = $region80
      $region79: #{score_lm_forward.10} parent=71 // pred_region
        %p896 = scmp.lt.s32.totalorder %s29, 1
        %s897 = scalar_select %p896, %s29, 1
        %p898 = scmp.lt.s32.totalorder %s30, 0
        %s899 = scalar_select %p898, %s30, 0
        %s900 = sadd.s32 %s899, %s897
        %s901 = smul.addr %s900, 4
        %s902 = scalar_lea.vmem %s10, %s901
      $region80: #{score_lm_forward.10} parent=71 // pred_fallthru
        _
      // Predicated region
      $region81: #{score_lm_forward.10} parent=71 // pred_check
        %p903 = pneg %p338
      $region82: #{score_lm_forward.10} parent=71 // pred_check_branch
        %905 = sbr.rel (%p903) target = $region84
      $region83: #{score_lm_forward.10} parent=71 // pred_region
        %p906 = scmp.lt.s32.totalorder %s29, 1
        %s907 = scalar_select %p906, %s29, 1
        %p908 = scmp.lt.s32.totalorder %s30, 0
        %s909 = scalar_select %p908, %s30, 0
        %s910 = sadd.s32 %s909, %s907
        %s911 = smul.addr %s910, 4
        %s912 = scalar_lea.vmem %s11, %s911
      $region84: #{score_lm_forward.10} parent=71 // pred_fallthru
        _
    $region72: #{score_lm_forward.10} parent=5 // pred_fallthru
      _
  $region6: #{score_lm_forward.10} parent=0 // loop_footer
    %s22 = sadd.s32 1, %s18
  $region7: #{score_lm_forward.10} parent=0 // loop_footer_branch
    %17 = sbr.rel target = $region3
  $region8: #{score_lm_forward.10} parent=0 // loop_exit
    _

// kernel: score_lm_forward.13
$region0: #{score_lm_forward.13}
  #allocation0 [shape = 'u32[]', space=smem, size = 0x4, offset = 0x4, fixed_abs, tag = 'smem constant byte address 0x4 - core index']
  #allocation1 [shape = 'u32[144,128]{1,0:T(1,128)}', space=vmem, size = 0x12000, scoped, tag = 'internal scratch']
  #allocation2 [shape = 'bf16[8,32]{1,0:T(8,128)(2,1)}', space=vmem, size = 0x800, scoped, tag = 'scratch operand']
  #allocation3 [shape = 'f32[8,32]{1,0:T(8,128)}', space=vmem, size = 0x1000, scoped, tag = 'scratch operand']
  %s0 = inlined_call_operand.vmem [shape: f32[2,8,32], index: 0, kind: input, shape index: {}]
  %s1 = inlined_call_operand.vmem [shape: f32[2,1,32], index: 1, kind: input, shape index: {}]
  %s2 = inlined_call_operand.vmem [shape: f32[2,1,32], index: 2, kind: input, shape index: {}]
  %s3 = inlined_call_operand.vmem [shape: bf16[32,128], index: 3, kind: input, shape index: {}]
  %s4 = inlined_call_operand.vmem [shape: bf16[32,128], index: 4, kind: input, shape index: {}]
  %s5 = inlined_call_operand.vmem [shape: bf16[128,32], index: 5, kind: input, shape index: {}]
  %s6 = inlined_call_operand.vmem [shape: f32[2,8,32], index: 6, kind: output, shape index: {}]
  %s7 = sld [smem:[#allocation0]]
  $region65: #{score_lm_forward.13} parent=0
    _
  %s9 = ssub.s32 1, %s7
  %s10 = scalar_select 0, %s9, %s7
  loop: start=0, step=1, limit=4
  $region2: #{score_lm_forward.13} parent=0 // loop_pre_header
    _
  $region3: #{score_lm_forward.13} parent=0 // loop_header
    %s12 = sphi 0, %s16
    %p13 = scmp.ge.s32.totalorder %s12, 4
    %s19 = sphi 0, %s38
    %s20 = sphi 0, %s34
    %s21 = sphi 0, %s30
    %s22 = sphi 0, %s19
    %s23 = sphi 0, %s20
    %s24 = sphi 0, %s21
    %s25 = sphi 0, %s22
    %s26 = sphi 0, %s23
    %s27 = sphi 0, %s24
    %s43 = sphi 0, %s45
    %s46 = sphi 0, %s43
    %s47 = sphi 0, %s46
    %s63 = sphi 0, %s47
    %s69 = sphi 0, %s71
    %s72 = sphi 0, %s69
    %s73 = sphi 0, %s72
    %s89 = sphi 0, %s73
    %s95 = sphi 0, %s97
    %s98 = sphi 0, %s95
    %s99 = sphi 0, %s98
    %s115 = sphi 0, %s99
    %s121 = sphi 0, %s123
    %s124 = sphi 0, %s121
    %s125 = sphi 0, %s124
    %s141 = sphi 0, %s125
    %s147 = sphi 0, %s149
    %s150 = sphi 0, %s147
    %s151 = sphi 0, %s150
    %s167 = sphi 0, %s151
    %s173 = sphi 0, %s175
    %s176 = sphi 0, %s173
    %s177 = sphi 0, %s176
    %s193 = sphi 0, %s177
    %s201 = sphi 0, %s203
    %s204 = sphi 0, %s201
    %s205 = sphi 0, %s204
    %s221 = sphi 0, %s205
  $region4: #{score_lm_forward.13} parent=0 // loop_header_branch
    %15 = sbr.rel (%p13) target = $region8
  $region5: #{score_lm_forward.13} parent=0 // loop_body
    %s17 = ssub.s32 %s12, 1
    %s18 = ssub.s32 %s12, 2
    %s28 = sadd.s32 1, %s21
    %p29 = scmp.ge.s32.totalorder %s28, 1
    %s30 = scalar_select %p29, 0, %s28
    %s31 = sadd.s32 1, %s20
    %s32 = scalar_select %p29, %s31, %s20
    %p33 = scmp.ge.s32.totalorder %s32, 1
    %s34 = scalar_select %p33, 0, %s32
    %s35 = sadd.s32 1, %s19
    %s36 = scalar_select %p33, %s35, %s19
    %p37 = scmp.ge.s32.totalorder %s36, 2
    %s38 = scalar_select %p37, 0, %s36
    %s39 = ssub.s32 %s19, %s38
    %s40 = ssub.s32 %s20, %s34
    %s41 = sor.u32 %s39, %s40
    %p42 = scmp.eq.s32.totalorder %s41, 0
    %s44 = sadd.s32 %s43, 1
    %s45 = scalar_select %p42, %s43, %s44
    %p48 = pneg %p42
    %p49 = scmp.eq.s32.totalorder %s12, 1
    %p50 = por %p48, %p49
    %p51 = scmp.ne.s32.totalorder %s43, %s46
    %p52 = scmp.eq.s32.totalorder %s12, 0
    %p53 = por %p51, %p52
    %p54 = scmp.ne.s32.totalorder %s43, %s46
    %p55 = scmp.eq.s32.totalorder %s17, 1
    %p56 = por %p54, %p55
    %p57 = scmp.ne.s32.totalorder %s46, %s47
    %p58 = scmp.eq.s32.totalorder %s17, 0
    %p59 = por %p57, %p58
    %p60 = scmp.ne.s32.totalorder %s46, %s47
    %p61 = scmp.eq.s32.totalorder %s18, 1
    %p62 = por %p60, %p61
    %p64 = scmp.ne.s32.totalorder %s47, %s63
    %p65 = scmp.eq.s32.totalorder %s18, 0
    %p66 = por %p64, %p65
    %s67 = ssub.s32 %s19, %s38
    %p68 = scmp.eq.s32.totalorder %s67, 0
    %s70 = sadd.s32 %s69, 1
    %s71 = scalar_select %p68, %s69, %s70
    %p74 = pneg %p68
    %p75 = scmp.eq.s32.totalorder %s12, 1
    %p76 = por %p74, %p75
    %p77 = scmp.ne.s32.totalorder %s69, %s72
    %p78 = scmp.eq.s32.totalorder %s12, 0
    %p79 = por %p77, %p78
    %p80 = scmp.ne.s32.totalorder %s69, %s72
    %p81 = scmp.eq.s32.totalorder %s17, 1
    %p82 = por %p80, %p81
    %p83 = scmp.ne.s32.totalorder %s72, %s73
    %p84 = scmp.eq.s32.totalorder %s17, 0
    %p85 = por %p83, %p84
    %p86 = scmp.ne.s32.totalorder %s72, %s73
    %p87 = scmp.eq.s32.totalorder %s18, 1
    %p88 = por %p86, %p87
    %p90 = scmp.ne.s32.totalorder %s73, %s89
    %p91 = scmp.eq.s32.totalorder %s18, 0
    %p92 = por %p90, %p91
    %s93 = ssub.s32 %s19, %s38
    %p94 = scmp.eq.s32.totalorder %s93, 0
    %s96 = sadd.s32 %s95, 1
    %s97 = scalar_select %p94, %s95, %s96
    %p100 = pneg %p94
    %p101 = scmp.eq.s32.totalorder %s12, 1
    %p102 = por %p100, %p101
    %p103 = scmp.ne.s32.totalorder %s95, %s98
    %p104 = scmp.eq.s32.totalorder %s12, 0
    %p105 = por %p103, %p104
    %p106 = scmp.ne.s32.totalorder %s95, %s98
    %p107 = scmp.eq.s32.totalorder %s17, 1
    %p108 = por %p106, %p107
    %p109 = scmp.ne.s32.totalorder %s98, %s99
    %p110 = scmp.eq.s32.totalorder %s17, 0
    %p111 = por %p109, %p110
    %p112 = scmp.ne.s32.totalorder %s98, %s99
    %p113 = scmp.eq.s32.totalorder %s18, 1
    %p114 = por %p112, %p113
    %p116 = scmp.ne.s32.totalorder %s99, %s115
    %p117 = scmp.eq.s32.totalorder %s18, 0
    %p118 = por %p116, %p117
    %s119 = ssub.s32 %s21, %s30
    %p120 = scmp.eq.s32.totalorder %s119, 0
    %s122 = sadd.s32 %s121, 1
    %s123 = scalar_select %p120, %s121, %s122
    %p126 = pneg %p120
    %p127 = scmp.eq.s32.totalorder %s12, 1
    %p128 = por %p126, %p127
    %p129 = scmp.ne.s32.totalorder %s121, %s124
    %p130 = scmp.eq.s32.totalorder %s12, 0
    %p131 = por %p129, %p130
    %p132 = scmp.ne.s32.totalorder %s121, %s124
    %p133 = scmp.eq.s32.totalorder %s17, 1
    %p134 = por %p132, %p133
    %p135 = scmp.ne.s32.totalorder %s124, %s125
    %p136 = scmp.eq.s32.totalorder %s17, 0
    %p137 = por %p135, %p136
    %p138 = scmp.ne.s32.totalorder %s124, %s125
    %p139 = scmp.eq.s32.totalorder %s18, 1
    %p140 = por %p138, %p139
    %p142 = scmp.ne.s32.totalorder %s125, %s141
    %p143 = scmp.eq.s32.totalorder %s18, 0
    %p144 = por %p142, %p143
    %s145 = ssub.s32 %s21, %s30
    %p146 = scmp.eq.s32.totalorder %s145, 0
    %s148 = sadd.s32 %s147, 1
    %s149 = scalar_select %p146, %s147, %s148
    %p152 = pneg %p146
    %p153 = scmp.eq.s32.totalorder %s12, 1
    %p154 = por %p152, %p153
    %p155 = scmp.ne.s32.totalorder %s147, %s150
    %p156 = scmp.eq.s32.totalorder %s12, 0
    %p157 = por %p155, %p156
    %p158 = scmp.ne.s32.totalorder %s147, %s150
    %p159 = scmp.eq.s32.totalorder %s17, 1
    %p160 = por %p158, %p159
    %p161 = scmp.ne.s32.totalorder %s150, %s151
    %p162 = scmp.eq.s32.totalorder %s17, 0
    %p163 = por %p161, %p162
    %p164 = scmp.ne.s32.totalorder %s150, %s151
    %p165 = scmp.eq.s32.totalorder %s18, 1
    %p166 = por %p164, %p165
    %p168 = scmp.ne.s32.totalorder %s151, %s167
    %p169 = scmp.eq.s32.totalorder %s18, 0
    %p170 = por %p168, %p169
    %s171 = ssub.s32 %s21, %s30
    %p172 = scmp.eq.s32.totalorder %s171, 0
    %s174 = sadd.s32 %s173, 1
    %s175 = scalar_select %p172, %s173, %s174
    %p178 = pneg %p172
    %p179 = scmp.eq.s32.totalorder %s12, 1
    %p180 = por %p178, %p179
    %p181 = scmp.ne.s32.totalorder %s173, %s176
    %p182 = scmp.eq.s32.totalorder %s12, 0
    %p183 = por %p181, %p182
    %p184 = scmp.ne.s32.totalorder %s173, %s176
    %p185 = scmp.eq.s32.totalorder %s17, 1
    %p186 = por %p184, %p185
    %p187 = scmp.ne.s32.totalorder %s176, %s177
    %p188 = scmp.eq.s32.totalorder %s17, 0
    %p189 = por %p187, %p188
    %p190 = scmp.ne.s32.totalorder %s176, %s177
    %p191 = scmp.eq.s32.totalorder %s18, 1
    %p192 = por %p190, %p191
    %p194 = scmp.ne.s32.totalorder %s177, %s193
    %p195 = scmp.eq.s32.totalorder %s18, 0
    %p196 = por %p194, %p195
    %s197 = ssub.s32 %s19, %s38
    %s198 = ssub.s32 %s20, %s34
    %s199 = sor.u32 %s197, %s198
    %p200 = scmp.eq.s32.totalorder %s199, 0
    %s202 = sadd.s32 %s201, 1
    %s203 = scalar_select %p200, %s201, %s202
    %p206 = pneg %p200
    %p207 = scmp.eq.s32.totalorder %s12, 1
    %p208 = por %p206, %p207
    %p209 = scmp.ne.s32.totalorder %s201, %s204
    %p210 = scmp.eq.s32.totalorder %s12, 0
    %p211 = por %p209, %p210
    %p212 = scmp.ne.s32.totalorder %s201, %s204
    %p213 = scmp.eq.s32.totalorder %s17, 1
    %p214 = por %p212, %p213
    %p215 = scmp.ne.s32.totalorder %s204, %s205
    %p216 = scmp.eq.s32.totalorder %s17, 0
    %p217 = por %p215, %p216
    %p218 = scmp.ne.s32.totalorder %s204, %s205
    %p219 = scmp.eq.s32.totalorder %s18, 1
    %p220 = por %p218, %p219
    %p222 = scmp.ne.s32.totalorder %s205, %s221
    %p223 = scmp.eq.s32.totalorder %s18, 0
    %p224 = por %p222, %p223
    %p225 = scmp.le.s32.totalorder 1, %s12
    %p226 = scmp.lt.s32.totalorder %s12, 3
    %p227 = pnand %p225, %p226
    %p228 = pneg %p227
    // Predicated region
    $region9: #{score_lm_forward.13} parent=5 // pred_check
      _
    $region10: #{score_lm_forward.13} parent=5 // pred_check_branch
      %230 = sbr.rel (%p227) target = $region12
    $region11: #{score_lm_forward.13} parent=5 // pred_region
      %s231 = ssub.s32 %s12, 1
      // Predicated region
      $region13: #{score_lm_forward.13} parent=11 // pred_check
        %p232 = pneg %p137
      $region14: #{score_lm_forward.13} parent=11 // pred_check_branch
        %234 = sbr.rel (%p232) target = $region16
      $region15: #{score_lm_forward.13} parent=11 // pred_region
        %p235 = scmp.lt.s32.totalorder %s24, 0
        %s236 = scalar_select %p235, %s24, 0
        %s237 = smul.addr %s236, 4
        %s238 = scalar_lea.vmem %s3, %s237
      $region16: #{score_lm_forward.13} parent=11 // pred_fallthru
        _
      // Predicated region
      $region17: #{score_lm_forward.13} parent=11 // pred_check
        %p239 = pneg %p163
      $region18: #{score_lm_forward.13} parent=11 // pred_check_branch
        %241 = sbr.rel (%p239) target = $region20
      $region19: #{score_lm_forward.13} parent=11 // pred_region
        %p242 = scmp.lt.s32.totalorder %s24, 0
        %s243 = scalar_select %p242, %s24, 0
        %s244 = smul.addr %s243, 4
        %s245 = scalar_lea.vmem %s4, %s244
      $region20: #{score_lm_forward.13} parent=11 // pred_fallthru
        _
      // Predicated region
      $region21: #{score_lm_forward.13} parent=11 // pred_check
        %p246 = pneg %p189
      $region22: #{score_lm_forward.13} parent=11 // pred_check_branch
        %248 = sbr.rel (%p246) target = $region24
      $region23: #{score_lm_forward.13} parent=11 // pred_region
        %s249 = smul.u32 16, %s24
        %p250 = scmp.lt.s32.totalorder %s249, 15
        %s251 = scalar_select %p250, %s249, 15
        %s252 = smul.addr %s251, 4
        %s253 = scalar_lea.vmem %s5, %s252
        %s254 = smul.u32 16, %s24
      $region24: #{score_lm_forward.13} parent=11 // pred_fallthru
        _
    $region12: #{score_lm_forward.13} parent=5 // pred_fallthru
      _
    %p255 = scmp.lt.s32.totalorder %s12, 2
    // Predicated region
    $region25: #{score_lm_forward.13} parent=5 // pred_check
      %p256 = pneg %p255
    $region26: #{score_lm_forward.13} parent=5 // pred_check_branch
      %258 = sbr.rel (%p256) target = $region28
    $region27: #{score_lm_forward.13} parent=5 // pred_region
      // Predicated region
      $region29: #{score_lm_forward.13} parent=27 // pred_check
        %p259 = pneg %p53
      $region30: #{score_lm_forward.13} parent=27 // pred_check_branch
        %261 = sbr.rel (%p259) target = $region32
      $region31: #{score_lm_forward.13} parent=27 // pred_region
        %p262 = scmp.lt.s32.totalorder %s19, 1
        %s263 = scalar_select %p262, %s19, 1
        %p264 = scmp.lt.s32.totalorder %s20, 0
        %s265 = scalar_select %p264, %s20, 0
        %s266 = sadd.s32 %s265, %s263
        %s267 = smul.addr %s266, 8
        %s268 = scalar_lea.vmem %s0, %s267
      $region32: #{score_lm_forward.13} parent=27 // pred_fallthru
        _
      // Predicated region
      $region33: #{score_lm_forward.13} parent=27 // pred_check
        %p269 = pneg %p79
      $region34: #{score_lm_forward.13} parent=27 // pred_check_branch
        %271 = sbr.rel (%p269) target = $region36
      $region35: #{score_lm_forward.13} parent=27 // pred_region
        %p272 = scmp.lt.s32.totalorder %s19, 1
        %s273 = scalar_select %p272, %s19, 1
        %s274 = scalar_lea.vmem %s1, %s273
      $region36: #{score_lm_forward.13} parent=27 // pred_fallthru
        _
      // Predicated region
      $region37: #{score_lm_forward.13} parent=27 // pred_check
        %p275 = pneg %p105
      $region38: #{score_lm_forward.13} parent=27 // pred_check_branch
        %277 = sbr.rel (%p275) target = $region40
      $region39: #{score_lm_forward.13} parent=27 // pred_region
        %p278 = scmp.lt.s32.totalorder %s19, 1
        %s279 = scalar_select %p278, %s19, 1
        %s280 = scalar_lea.vmem %s2, %s279
      $region40: #{score_lm_forward.13} parent=27 // pred_fallthru
        _
    $region28: #{score_lm_forward.13} parent=5 // pred_fallthru
      _
    %p281 = scmp.le.s32.totalorder 1, %s12
    %p282 = scmp.lt.s32.totalorder %s12, 3
    %p283 = pnand %p281, %p282
    %p284 = pneg %p283
    // Predicated region
    $region41: #{score_lm_forward.13} parent=5 // pred_check
      _
    $region42: #{score_lm_forward.13} parent=5 // pred_check_branch
      %286 = sbr.rel (%p283) target = $region44
    $region43: #{score_lm_forward.13} parent=5 // pred_region
      %s287 = ssub.s32 %s12, 1
      %p288 = scmp.lt.s32.totalorder %s22, 1
      %s289 = scalar_select %p288, %s22, 1
      %p290 = scmp.lt.s32.totalorder %s23, 0
      %s291 = scalar_select %p290, %s23, 0
      %s292 = sadd.s32 %s291, %s289
      %s293 = smul.addr %s292, 8
      %s294 = scalar_lea.vmem %s0, %s293
      %p295 = pneg %p59
      %p296 = pneg %p56
      %p297 = scmp.lt.s32.totalorder %s22, 1
      %s298 = scalar_select %p297, %s22, 1
      %s299 = scalar_lea.vmem %s1, %s298
      %p300 = pneg %p85
      %p301 = pneg %p82
      %p302 = scmp.lt.s32.totalorder %s22, 1
      %s303 = scalar_select %p302, %s22, 1
      %s304 = scalar_lea.vmem %s2, %s303
      %p305 = pneg %p111
      %p306 = pneg %p108
      %p307 = scmp.lt.s32.totalorder %s24, 0
      %s308 = scalar_select %p307, %s24, 0
      %s309 = smul.addr %s308, 4
      %s310 = scalar_lea.vmem %s3, %s309
      %p311 = pneg %p137
      %p312 = pneg %p134
      %p313 = scmp.lt.s32.totalorder %s24, 0
      %s314 = scalar_select %p313, %s24, 0
      %s315 = smul.addr %s314, 4
      %s316 = scalar_lea.vmem %s4, %s315
      %p317 = pneg %p163
      %p318 = pneg %p160
      %s319 = smul.u32 16, %s24
      %p320 = scmp.lt.s32.totalorder %s319, 15
      %s321 = scalar_select %p320, %s319, 15
      %s322 = smul.addr %s321, 4
      %s323 = scalar_lea.vmem %s5, %s322
      %p324 = pneg %p189
      %p325 = pneg %p186
      %p326 = pneg %p217
      %p327 = pneg %p214
      %p328 = scmp.lt.s32.totalorder %s22, 1
      %s329 = scalar_select %p328, %s22, 1
      %p330 = scmp.lt.s32.totalorder %s23, 0
      %s331 = scalar_select %p330, %s23, 0
      %s332 = sadd.s32 %s331, %s329
      %s333 = smul.addr %s332, 8
      %s334 = scalar_lea.vmem %s6, %s333
      %p335 = scmp.lt.s32.totalorder %s22, 1
      %s336 = scalar_select %p335, %s22, 1
      %p337 = scmp.lt.s32.totalorder %s23, 0
      %s338 = scalar_select %p337, %s23, 0
      %s339 = sadd.s32 %s338, %s336
      %s340 = smul.addr %s339, 8
      %s341 = scalar_lea.vmem %s0, %s340
      %p342 = scmp.lt.s32.totalorder %s22, 1
      %s343 = scalar_select %p342, %s22, 1
      %s344 = scalar_lea.vmem %s1, %s343
      %p345 = scmp.lt.s32.totalorder %s22, 1
      %s346 = scalar_select %p345, %s22, 1
      %s347 = scalar_lea.vmem %s2, %s346
      %p348 = scmp.lt.s32.totalorder %s24, 0
      %s349 = scalar_select %p348, %s24, 0
      %s350 = smul.addr %s349, 4
      %s351 = scalar_lea.vmem %s3, %s350
      %p352 = scmp.lt.s32.totalorder %s24, 0
      %s353 = scalar_select %p352, %s24, 0
      %s354 = smul.addr %s353, 4
      %s355 = scalar_lea.vmem %s4, %s354
      %s356 = smul.u32 16, %s24
      %p357 = scmp.lt.s32.totalorder %s356, 15
      %s358 = scalar_select %p357, %s356, 15
      %s359 = smul.addr %s358, 4
      %s360 = scalar_lea.vmem %s5, %s359
      %s361 = smul.u32 16, %s24
      %p362 = scmp.lt.s32.totalorder %s22, 1
      %s363 = scalar_select %p362, %s22, 1
      %p364 = scmp.lt.s32.totalorder %s23, 0
      %s365 = scalar_select %p364, %s23, 0
      %s366 = sadd.s32 %s365, %s363
      %s367 = smul.addr %s366, 8
      %s368 = scalar_lea.vmem %s6, %s367
      %p370 = scmp.eq.s32.totalorder %s24, 0
      // Predicated region
      $region45: #{score_lm_forward.13} parent=43 // pred_check
        %p371 = pneg %p370
      $region46: #{score_lm_forward.13} parent=43 // pred_check_branch
        %373 = sbr.rel (%p371) target = $region48
      $region47: #{score_lm_forward.13} parent=43 // pred_region
        %v374 = vld [vmem:[%s341] sm:$0xff]
        %vm375 = vcmask 261120
        %v376 = vsel %vm375, %v374, 0.0
        %377 = vadd.xlane.f32.xlu0 %v376
        %v378 = vpop.xlane.xlu0 %377
        %v379 = vrcp.pop 32.0
        %v380 = vmul.f32 %v378, %v379
        %v381 = vsub.f32 %v374, %v380
        %v382 = vmul.f32 %v381, %v381
        %v383 = vsel %vm375, %v382, 0.0
        %384 = vadd.xlane.f32.xlu0 %v383
        %v385 = vpop.xlane.xlu0 %384
        %v386 = vmul.f32 %v385, %v379
        %v387 = vadd.f32 %v386, 1e-05
        %v388 = vrsqrt.pop %v387
        %v389 = vmul.f32 %v381, %v388
        %v390 = vld [vmem:[%s344] sm:$0x1]
        %v392 = vlaneseq
        %v393 = vshrl.u32 %v392, 7
        %v394 = vsub.s32 0, %v393
        %v395 = vrot.slane %v390, %v394
        %v397 = vmul.f32 %v389, %v395
        %v398 = vld [vmem:[%s347] sm:$0x1]
        %v400 = vlaneseq
        %v401 = vshrl.u32 %v400, 7
        %v402 = vsub.s32 0, %v401
        %v403 = vrot.slane %v398, %v402
        %v405 = vadd.f32 %v397, %v403
        %v406 = vpack.c.bf16 %v405, %v405
        %vm407 = vcmask 257024
        %408 = vst.msk [vmem:[#allocation2] sm:$0xf] %vm407, %v406
        %409 = vst.msk [vmem:[#allocation3] sm:$0xff] %vm375, 0.0
      $region48: #{score_lm_forward.13} parent=43 // pred_fallthru
        _
      %v410 = vld [vmem:[#allocation2] sm:$0xf]
      %v411 = vld [vmem:[%s351] sm:$0xf]
      %v412 = vld [vmem:[%s351 + $0x4] sm:$0xf]
      %v413 = vld [vmem:[%s351 + $0x8] sm:$0xf]
      %v414 = vld [vmem:[%s351 + $0xc] sm:$0xf]
      %v419 = vunpack.c.l.b16 %v411
      %v420 = vunpack.c.l.b16 %v412
      %v421 = vunpack.c.l.b16 %v413
      %v422 = vunpack.c.l.b16 %v414
      %v423 = vpack.c.b16 %v420, %v419
      %v424 = vpack.c.b16 %v422, %v421
      %vm427 = vcmask 261120
      %v429 = vsel %vm427, %v410, 0
      %431 = vmatprep.subr.bf16.mxu0 0
      %432 = vmatpush1.bf16.msra.mxu0 %v423
      %433 = vmatprep.subr.bf16.mxu0 0
      %434 = vmatpush1.bf16.msra.mxu0 %v424
      %435 = vmatprep.subr.bf16.mxu0 0
      %436 = vmatpush1.bf16.msra.mxu0 0
      %437 = vmatprep.subr.bf16.mxu0 0
      %438 = vmatpush1.bf16.msra.mxu0 0
      %439 = vmatprep.subr.bf16.mxu0 0
      %440 = vmatpush1.bf16.msra.mxu0 0
      %441 = vmatprep.subr.bf16.mxu0 0
      %442 = vmatpush1.bf16.msra.mxu0 0
      %443 = vmatprep.subr.bf16.mxu0 0
      %444 = vmatpush1.bf16.msra.mxu0 0
      %445 = vmatprep.subr.bf16.mxu0 0
      %446 = vmatpush1.bf16.msra.mxu0 0
      %447 = vmatprep.subr.bf16.mxu0 0
      %448 = vmatpush1.bf16.msra.mxu0 0
      %449 = vmatprep.subr.bf16.mxu0 0
      %450 = vmatpush1.bf16.msra.mxu0 0
      %451 = vmatprep.subr.bf16.mxu0 0
      %452 = vmatpush1.bf16.msra.mxu0 0
      %453 = vmatprep.subr.bf16.mxu0 0
      %454 = vmatpush1.bf16.msra.mxu0 0
      %455 = vmatprep.subr.bf16.mxu0 0
      %456 = vmatpush1.bf16.msra.mxu0 0
      %457 = vmatprep.subr.bf16.mxu0 0
      %458 = vmatpush1.bf16.msra.mxu0 0
      %459 = vmatprep.subr.bf16.mxu0 0
      %460 = vmatpush1.bf16.msra.mxu0 0
      %461 = vmatprep.subr.bf16.mxu0 0
      %462 = vmatpush1.bf16.msra.mxu0 0
      %463 = vmatprep.mubr.bf16.mxu0 0
      %464 = vmatmul.mubr.bf16.gmra.mrb[0].mxu0 %v429
      %v465 = vpop.f32.mrb[0].mxu0
      %v466 = vadd.f32 0.0, %v465
      %v467 = vpop.f32.mrb[0].mxu0
      %v468 = vpop.f32.mrb[0].mxu0
      %v469 = vpop.f32.mrb[0].mxu0
      %470 = vdwg.mxu0
      %v471 = vld [vmem:[%s355] sm:$0xf]
      %v472 = vld [vmem:[%s355 + $0x4] sm:$0xf]
      %v473 = vld [vmem:[%s355 + $0x8] sm:$0xf]
      %v474 = vld [vmem:[%s355 + $0xc] sm:$0xf]
      %v479 = vunpack.c.l.b16 %v471
      %v480 = vunpack.c.l.b16 %v472
      %v481 = vunpack.c.l.b16 %v473
      %v482 = vunpack.c.l.b16 %v474
      %v483 = vpack.c.b16 %v480, %v479
      %v484 = vpack.c.b16 %v482, %v481
      %487 = vmatprep.subr.bf16.mxu0 0
      %488 = vmatpush1.bf16.msra.mxu0 %v483
      %489 = vmatprep.subr.bf16.mxu0 0
      %490 = vmatpush1.bf16.msra.mxu0 %v484
      %491 = vmatprep.subr.bf16.mxu0 0
      %492 = vmatpush1.bf16.msra.mxu0 0
      %493 = vmatprep.subr.bf16.mxu0 0
      %494 = vmatpush1.bf16.msra.mxu0 0
      %495 = vmatprep.subr.bf16.mxu0 0
      %496 = vmatpush1.bf16.msra.mxu0 0
      %497 = vmatprep.subr.bf16.mxu0 0
      %498 = vmatpush1.bf16.msra.mxu0 0
      %499 = vmatprep.subr.bf16.mxu0 0
      %500 = vmatpush1.bf16.msra.mxu0 0
      %501 = vmatprep.subr.bf16.mxu0 0
      %502 = vmatpush1.bf16.msra.mxu0 0
      %503 = vmatprep.subr.bf16.mxu0 0
      %504 = vmatpush1.bf16.msra.mxu0 0
      %505 = vmatprep.subr.bf16.mxu0 0
      %506 = vmatpush1.bf16.msra.mxu0 0
      %507 = vmatprep.subr.bf16.mxu0 0
      %508 = vmatpush1.bf16.msra.mxu0 0
      %509 = vmatprep.subr.bf16.mxu0 0
      %510 = vmatpush1.bf16.msra.mxu0 0
      %511 = vmatprep.subr.bf16.mxu0 0
      %512 = vmatpush1.bf16.msra.mxu0 0
      %513 = vmatprep.subr.bf16.mxu0 0
      %514 = vmatpush1.bf16.msra.mxu0 0
      %515 = vmatprep.subr.bf16.mxu0 0
      %516 = vmatpush1.bf16.msra.mxu0 0
      %517 = vmatprep.subr.bf16.mxu0 0
      %518 = vmatpush1.bf16.msra.mxu0 0
      %519 = vmatprep.mubr.bf16.mxu0 0
      %520 = vmatmul.mubr.bf16.gmra.mrb[0].mxu0 %v429
      %v521 = vpop.f32.mrb[0].mxu0
      %v522 = vadd.f32 0.0, %v521
      %v523 = vpop.f32.mrb[0].mxu0
      %v524 = vpop.f32.mrb[0].mxu0
      %v525 = vpop.f32.mrb[0].mxu0
      %526 = vdwg.mxu0
      %v527 = vxor.u32 %v466, 2147483648
      %v528 = vmul.f32 %v527, 1.442695
      %v529 = vpow.pop %v528
      %v530 = vadd.f32 %v529, 1.0
      %v531 = vrcp.pop %v530
      %v532 = vmul.f32 1.0, %v531
      %v533 = vmul.f32 %v466, %v532
      %v534 = vmul.f32 %v533, %v522
      %v535 = vld [vmem:[#allocation3] sm:$0xff]
      %v536 = vpack.c.bf16 %v534, %v534
      %v537 = vld [vmem:[%s360] sm:$0xf]
      %v538 = vld [vmem:[%s360 + $0x4] sm:$0xf]
      %v539 = vld [vmem:[%s360 + $0x8] sm:$0xf]
      %v540 = vld [vmem:[%s360 + $0xc] sm:$0xf]
      %v541 = vld [vmem:[%s360 + $0x10] sm:$0xf]
      %v542 = vld [vmem:[%s360 + $0x14] sm:$0xf]
      %v543 = vld [vmem:[%s360 + $0x18] sm:$0xf]
      %v544 = vld [vmem:[%s360 + $0x1c] sm:$0xf]
      %v545 = vld [vmem:[%s360 + $0x20] sm:$0xf]
      %v546 = vld [vmem:[%s360 + $0x24] sm:$0xf]
      %v547 = vld [vmem:[%s360 + $0x28] sm:$0xf]
      %v548 = vld [vmem:[%s360 + $0x2c] sm:$0xf]
      %v549 = vld [vmem:[%s360 + $0x30] sm:$0xf]
      %v550 = vld [vmem:[%s360 + $0x34] sm:$0xf]
      %v551 = vld [vmem:[%s360 + $0x38] sm:$0xf]
      %v552 = vld [vmem:[%s360 + $0x3c] sm:$0xf]
      %v569 = vunpack.c.l.b16 %v537
      %v570 = vunpack.c.l.b16 %v538
      %v571 = vunpack.c.l.b16 %v539
      %v572 = vunpack.c.l.b16 %v540
      %v573 = vunpack.c.l.b16 %v541
      %v574 = vunpack.c.l.b16 %v542
      %v575 = vunpack.c.l.b16 %v543
      %v576 = vunpack.c.l.b16 %v544
      %v577 = vunpack.c.l.b16 %v545
      %v578 = vunpack.c.l.b16 %v546
      %v579 = vunpack.c.l.b16 %v547
      %v580 = vunpack.c.l.b16 %v548
      %v581 = vunpack.c.l.b16 %v549
      %v582 = vunpack.c.l.b16 %v550
      %v583 = vunpack.c.l.b16 %v551
      %v584 = vunpack.c.l.b16 %v552
      %v585 = vpack.c.b16 %v570, %v569
      %v586 = vpack.c.b16 %v572, %v571
      %v587 = vpack.c.b16 %v574, %v573
      %v588 = vpack.c.b16 %v576, %v575
      %v589 = vpack.c.b16 %v578, %v577
      %v590 = vpack.c.b16 %v580, %v579
      %v591 = vpack.c.b16 %v582, %v581
      %v592 = vpack.c.b16 %v584, %v583
      %601 = vmatprep.subr.bf16.mxu0 0
      %602 = vmatpush1.bf16.msra.mxu0 %v585
      %603 = vmatprep.subr.bf16.mxu0 0
      %604 = vmatpush1.bf16.msra.mxu0 %v586
      %605 = vmatprep.subr.bf16.mxu0 0
      %606 = vmatpush1.bf16.msra.mxu0 %v587
      %607 = vmatprep.subr.bf16.mxu0 0
      %608 = vmatpush1.bf16.msra.mxu0 %v588
      %609 = vmatprep.subr.bf16.mxu0 0
      %610 = vmatpush1.bf16.msra.mxu0 %v589
      %611 = vmatprep.subr.bf16.mxu0 0
      %612 = vmatpush1.bf16.msra.mxu0 %v590
      %613 = vmatprep.subr.bf16.mxu0 0
      %614 = vmatpush1.bf16.msra.mxu0 %v591
      %615 = vmatprep.subr.bf16.mxu0 0
      %616 = vmatpush1.bf16.msra.mxu0 %v592
      %617 = vmatprep.subr.bf16.mxu0 0
      %618 = vmatpush1.bf16.msra.mxu0 0
      %619 = vmatprep.subr.bf16.mxu0 0
      %620 = vmatpush1.bf16.msra.mxu0 0
      %621 = vmatprep.subr.bf16.mxu0 0
      %622 = vmatpush1.bf16.msra.mxu0 0
      %623 = vmatprep.subr.bf16.mxu0 0
      %624 = vmatpush1.bf16.msra.mxu0 0
      %625 = vmatprep.subr.bf16.mxu0 0
      %626 = vmatpush1.bf16.msra.mxu0 0
      %627 = vmatprep.subr.bf16.mxu0 0
      %628 = vmatpush1.bf16.msra.mxu0 0
      %629 = vmatprep.subr.bf16.mxu0 0
      %630 = vmatpush1.bf16.msra.mxu0 0
      %631 = vmatprep.subr.bf16.mxu0 0
      %632 = vmatpush1.bf16.msra.mxu0 0
      %633 = vmatprep.mubr.bf16.mxu0 0
      %634 = vmatmul.mubr.bf16.gmra.mrb[0].mxu0 %v536
      %v635 = vpop.f32.mrb[0].mxu0
      %v636 = vadd.f32 0.0, %v635
      %v637 = vpop.f32.mrb[0].mxu0
      %v638 = vpop.f32.mrb[0].mxu0
      %v639 = vpop.f32.mrb[0].mxu0
      %640 = vdwg.mxu0
      %v641 = vadd.f32 %v535, %v636
      %642 = vst.msk [vmem:[#allocation3] sm:$0xff] %vm427, %v641
      // Predicated region
      $region49: #{score_lm_forward.13} parent=43 // pred_check
        %p643 = pneg %p370
      $region50: #{score_lm_forward.13} parent=43 // pred_check_branch
        %645 = sbr.rel (%p643) target = $region52
      $region51: #{score_lm_forward.13} parent=43 // pred_region
        %v646 = vld [vmem:[%s341] sm:$0xff]
        %v647 = vld [vmem:[#allocation3] sm:$0xff]
        %v648 = vadd.f32 %v646, %v647
        %649 = vst.msk [vmem:[%s368] sm:$0xff] %vm427, %v648
      $region52: #{score_lm_forward.13} parent=43 // pred_fallthru
        _
      %p650 = scmp.lt.s32.totalorder %s22, 1
      %s651 = scalar_select %p650, %s22, 1
      %p652 = scmp.lt.s32.totalorder %s23, 0
      %s653 = scalar_select %p652, %s23, 0
      %s654 = sadd.s32 %s653, %s651
      %s655 = smul.addr %s654, 8
      %s656 = scalar_lea.vmem %s6, %s655
      // Predicated region
      $region53: #{score_lm_forward.13} parent=43 // pred_check
        %p657 = pneg %p214
      $region54: #{score_lm_forward.13} parent=43 // pred_check_branch
        %659 = sbr.rel (%p657) target = $region56
      $region55: #{score_lm_forward.13} parent=43 // pred_region
        _
      $region56: #{score_lm_forward.13} parent=43 // pred_fallthru
        _
    $region44: #{score_lm_forward.13} parent=5 // pred_fallthru
      _
    %p660 = scmp.le.s32.totalorder 2, %s12
    // Predicated region
    $region57: #{score_lm_forward.13} parent=5 // pred_check
      %p661 = pneg %p660
    $region58: #{score_lm_forward.13} parent=5 // pred_check_branch
      %663 = sbr.rel (%p661) target = $region60
    $region59: #{score_lm_forward.13} parent=5 // pred_region
      %s664 = ssub.s32 %s12, 2
      // Predicated region
      $region61: #{score_lm_forward.13} parent=59 // pred_check
        %p665 = pneg %p220
      $region62: #{score_lm_forward.13} parent=59 // pred_check_branch
        %667 = sbr.rel (%p665) target = $region64
      $region63: #{score_lm_forward.13} parent=59 // pred_region
        %p668 = scmp.lt.s32.totalorder %s25, 1
        %s669 = scalar_select %p668, %s25, 1
        %p670 = scmp.lt.s32.totalorder %s26, 0
        %s671 = scalar_select %p670, %s26, 0
        %s672 = sadd.s32 %s671, %s669
        %s673 = smul.addr %s672, 8
        %s674 = scalar_lea.vmem %s6, %s673
      $region64: #{score_lm_forward.13} parent=59 // pred_fallthru
        _
    $region60: #{score_lm_forward.13} parent=5 // pred_fallthru
      _
  $region6: #{score_lm_forward.13} parent=0 // loop_footer
    %s16 = sadd.s32 1, %s12
  $region7: #{score_lm_forward.13} parent=0 // loop_footer_branch
    %11 = sbr.rel target = $region3
  $region8: #{score_lm_forward.13} parent=0 // loop_exit
    _

// kernel: score_lm_forward.17
$region0: #{score_lm_forward.17}
  #allocation0 [shape = 'u32[]', space=smem, size = 0x4, offset = 0x4, fixed_abs, tag = 'smem constant byte address 0x4 - core index']
  #allocation1 [shape = 'u32[144,128]{1,0:T(1,128)}', space=vmem, size = 0x12000, scoped, tag = 'internal scratch']
  #allocation2 [shape = 'bf16[8,32]{1,0:T(8,128)(2,1)}', space=vmem, size = 0x800, scoped, tag = 'scratch operand']
  #allocation3 [shape = 'f32[8,32]{1,0:T(8,128)}', space=vmem, size = 0x1000, scoped, tag = 'scratch operand']
  %s0 = inlined_call_operand.vmem [shape: f32[2,8,32], index: 0, kind: input, shape index: {}]
  %s1 = inlined_call_operand.vmem [shape: f32[2,1,32], index: 1, kind: input, shape index: {}]
  %s2 = inlined_call_operand.vmem [shape: f32[2,1,32], index: 2, kind: input, shape index: {}]
  %s3 = inlined_call_operand.vmem [shape: bf16[32,128], index: 3, kind: input, shape index: {}]
  %s4 = inlined_call_operand.vmem [shape: bf16[32,128], index: 4, kind: input, shape index: {}]
  %s5 = inlined_call_operand.vmem [shape: bf16[128,32], index: 5, kind: input, shape index: {}]
  %s6 = inlined_call_operand.hbm [shape: f32[2,8,32], index: 6, kind: output, shape index: {}]
  %s7 = sld [smem:[#allocation0]]
  $region65: #{score_lm_forward.17} parent=0
    _
  %s9 = ssub.s32 1, %s7
  %s10 = scalar_select 0, %s9, %s7
  $region1: #{score_lm_forward.17} parent=0
    #allocation4 [shape = 'u8[8192]{0}', space=vmem, size = 0x2000, scoped, tag = 'output window, operand 0']
    #allocation5 [shape = 's32[2]{0}', space=sflag, size = 0x8, scoped, tag = 'scoped memory for score_lm_forward.17']
    %11 = vsyncpa [#allocation5], 0
    %s12 = scalar_lea.sflag [#allocation5], 1
    %13 = vsyncpa %s12, 0
    loop: start=0, step=1, limit=4
    $region2: #{score_lm_forward.17} parent=1 // loop_pre_header
      _
    $region3: #{score_lm_forward.17} parent=1 // loop_header
      %s15 = sphi 0, %s19
      %p16 = scmp.ge.s32.totalorder %s15, 4
      %s22 = sphi 0, %s41
      %s23 = sphi 0, %s37
      %s24 = sphi 0, %s33
      %s25 = sphi 0, %s22
      %s26 = sphi 0, %s23
      %s27 = sphi 0, %s24
      %s28 = sphi 0, %s25
      %s29 = sphi 0, %s26
      %s30 = sphi 0, %s27
      %s46 = sphi 0, %s48
      %s49 = sphi 0, %s46
      %s50 = sphi 0, %s49
      %s66 = sphi 0, %s50
      %s72 = sphi 0, %s74
      %s75 = sphi 0, %s72
      %s76 = sphi 0, %s75
      %s92 = sphi 0, %s76
      %s98 = sphi 0, %s100
      %s101 = sphi 0, %s98
      %s102 = sphi 0, %s101
      %s118 = sphi 0, %s102
      %s124 = sphi 0, %s126
      %s127 = sphi 0, %s124
      %s128 = sphi 0, %s127
      %s144 = sphi 0, %s128
      %s150 = sphi 0, %s152
      %s153 = sphi 0, %s150
      %s154 = sphi 0, %s153
      %s170 = sphi 0, %s154
      %s176 = sphi 0, %s178
      %s179 = sphi 0, %s176
      %s180 = sphi 0, %s179
      %s196 = sphi 0, %s180
      %s204 = sphi 0, %s206
      %s207 = sphi 0, %s204
      %s208 = sphi 0, %s207
      %s224 = sphi 0, %s208
    $region4: #{score_lm_forward.17} parent=1 // loop_header_branch
      %18 = sbr.rel (%p16) target = $region8
    $region5: #{score_lm_forward.17} parent=1 // loop_body
      %s20 = ssub.s32 %s15, 1
      %s21 = ssub.s32 %s15, 2
      %s31 = sadd.s32 1, %s24
      %p32 = scmp.ge.s32.totalorder %s31, 1
      %s33 = scalar_select %p32, 0, %s31
      %s34 = sadd.s32 1, %s23
      %s35 = scalar_select %p32, %s34, %s23
      %p36 = scmp.ge.s32.totalorder %s35, 1
      %s37 = scalar_select %p36, 0, %s35
      %s38 = sadd.s32 1, %s22
      %s39 = scalar_select %p36, %s38, %s22
      %p40 = scmp.ge.s32.totalorder %s39, 2
      %s41 = scalar_select %p40, 0, %s39
      %s42 = ssub.s32 %s22, %s41
      %s43 = ssub.s32 %s23, %s37
      %s44 = sor.u32 %s42, %s43
      %p45 = scmp.eq.s32.totalorder %s44, 0
      %s47 = sadd.s32 %s46, 1
      %s48 = scalar_select %p45, %s46, %s47
      %p51 = pneg %p45
      %p52 = scmp.eq.s32.totalorder %s15, 1
      %p53 = por %p51, %p52
      %p54 = scmp.ne.s32.totalorder %s46, %s49
      %p55 = scmp.eq.s32.totalorder %s15, 0
      %p56 = por %p54, %p55
      %p57 = scmp.ne.s32.totalorder %s46, %s49
      %p58 = scmp.eq.s32.totalorder %s20, 1
      %p59 = por %p57, %p58
      %p60 = scmp.ne.s32.totalorder %s49, %s50
      %p61 = scmp.eq.s32.totalorder %s20, 0
      %p62 = por %p60, %p61
      %p63 = scmp.ne.s32.totalorder %s49, %s50
      %p64 = scmp.eq.s32.totalorder %s21, 1
      %p65 = por %p63, %p64
      %p67 = scmp.ne.s32.totalorder %s50, %s66
      %p68 = scmp.eq.s32.totalorder %s21, 0
      %p69 = por %p67, %p68
      %s70 = ssub.s32 %s22, %s41
      %p71 = scmp.eq.s32.totalorder %s70, 0
      %s73 = sadd.s32 %s72, 1
      %s74 = scalar_select %p71, %s72, %s73
      %p77 = pneg %p71
      %p78 = scmp.eq.s32.totalorder %s15, 1
      %p79 = por %p77, %p78
      %p80 = scmp.ne.s32.totalorder %s72, %s75
      %p81 = scmp.eq.s32.totalorder %s15, 0
      %p82 = por %p80, %p81
      %p83 = scmp.ne.s32.totalorder %s72, %s75
      %p84 = scmp.eq.s32.totalorder %s20, 1
      %p85 = por %p83, %p84
      %p86 = scmp.ne.s32.totalorder %s75, %s76
      %p87 = scmp.eq.s32.totalorder %s20, 0
      %p88 = por %p86, %p87
      %p89 = scmp.ne.s32.totalorder %s75, %s76
      %p90 = scmp.eq.s32.totalorder %s21, 1
      %p91 = por %p89, %p90
      %p93 = scmp.ne.s32.totalorder %s76, %s92
      %p94 = scmp.eq.s32.totalorder %s21, 0
      %p95 = por %p93, %p94
      %s96 = ssub.s32 %s22, %s41
      %p97 = scmp.eq.s32.totalorder %s96, 0
      %s99 = sadd.s32 %s98, 1
      %s100 = scalar_select %p97, %s98, %s99
      %p103 = pneg %p97
      %p104 = scmp.eq.s32.totalorder %s15, 1
      %p105 = por %p103, %p104
      %p106 = scmp.ne.s32.totalorder %s98, %s101
      %p107 = scmp.eq.s32.totalorder %s15, 0
      %p108 = por %p106, %p107
      %p109 = scmp.ne.s32.totalorder %s98, %s101
      %p110 = scmp.eq.s32.totalorder %s20, 1
      %p111 = por %p109, %p110
      %p112 = scmp.ne.s32.totalorder %s101, %s102
      %p113 = scmp.eq.s32.totalorder %s20, 0
      %p114 = por %p112, %p113
      %p115 = scmp.ne.s32.totalorder %s101, %s102
      %p116 = scmp.eq.s32.totalorder %s21, 1
      %p117 = por %p115, %p116
      %p119 = scmp.ne.s32.totalorder %s102, %s118
      %p120 = scmp.eq.s32.totalorder %s21, 0
      %p121 = por %p119, %p120
      %s122 = ssub.s32 %s24, %s33
      %p123 = scmp.eq.s32.totalorder %s122, 0
      %s125 = sadd.s32 %s124, 1
      %s126 = scalar_select %p123, %s124, %s125
      %p129 = pneg %p123
      %p130 = scmp.eq.s32.totalorder %s15, 1
      %p131 = por %p129, %p130
      %p132 = scmp.ne.s32.totalorder %s124, %s127
      %p133 = scmp.eq.s32.totalorder %s15, 0
      %p134 = por %p132, %p133
      %p135 = scmp.ne.s32.totalorder %s124, %s127
      %p136 = scmp.eq.s32.totalorder %s20, 1
      %p137 = por %p135, %p136
      %p138 = scmp.ne.s32.totalorder %s127, %s128
      %p139 = scmp.eq.s32.totalorder %s20, 0
      %p140 = por %p138, %p139
      %p141 = scmp.ne.s32.totalorder %s127, %s128
      %p142 = scmp.eq.s32.totalorder %s21, 1
      %p143 = por %p141, %p142
      %p145 = scmp.ne.s32.totalorder %s128, %s144
      %p146 = scmp.eq.s32.totalorder %s21, 0
      %p147 = por %p145, %p146
      %s148 = ssub.s32 %s24, %s33
      %p149 = scmp.eq.s32.totalorder %s148, 0
      %s151 = sadd.s32 %s150, 1
      %s152 = scalar_select %p149, %s150, %s151
      %p155 = pneg %p149
      %p156 = scmp.eq.s32.totalorder %s15, 1
      %p157 = por %p155, %p156
      %p158 = scmp.ne.s32.totalorder %s150, %s153
      %p159 = scmp.eq.s32.totalorder %s15, 0
      %p160 = por %p158, %p159
      %p161 = scmp.ne.s32.totalorder %s150, %s153
      %p162 = scmp.eq.s32.totalorder %s20, 1
      %p163 = por %p161, %p162
      %p164 = scmp.ne.s32.totalorder %s153, %s154
      %p165 = scmp.eq.s32.totalorder %s20, 0
      %p166 = por %p164, %p165
      %p167 = scmp.ne.s32.totalorder %s153, %s154
      %p168 = scmp.eq.s32.totalorder %s21, 1
      %p169 = por %p167, %p168
      %p171 = scmp.ne.s32.totalorder %s154, %s170
      %p172 = scmp.eq.s32.totalorder %s21, 0
      %p173 = por %p171, %p172
      %s174 = ssub.s32 %s24, %s33
      %p175 = scmp.eq.s32.totalorder %s174, 0
      %s177 = sadd.s32 %s176, 1
      %s178 = scalar_select %p175, %s176, %s177
      %p181 = pneg %p175
      %p182 = scmp.eq.s32.totalorder %s15, 1
      %p183 = por %p181, %p182
      %p184 = scmp.ne.s32.totalorder %s176, %s179
      %p185 = scmp.eq.s32.totalorder %s15, 0
      %p186 = por %p184, %p185
      %p187 = scmp.ne.s32.totalorder %s176, %s179
      %p188 = scmp.eq.s32.totalorder %s20, 1
      %p189 = por %p187, %p188
      %p190 = scmp.ne.s32.totalorder %s179, %s180
      %p191 = scmp.eq.s32.totalorder %s20, 0
      %p192 = por %p190, %p191
      %p193 = scmp.ne.s32.totalorder %s179, %s180
      %p194 = scmp.eq.s32.totalorder %s21, 1
      %p195 = por %p193, %p194
      %p197 = scmp.ne.s32.totalorder %s180, %s196
      %p198 = scmp.eq.s32.totalorder %s21, 0
      %p199 = por %p197, %p198
      %s200 = ssub.s32 %s22, %s41
      %s201 = ssub.s32 %s23, %s37
      %s202 = sor.u32 %s200, %s201
      %p203 = scmp.eq.s32.totalorder %s202, 0
      %s205 = sadd.s32 %s204, 1
      %s206 = scalar_select %p203, %s204, %s205
      %p209 = pneg %p203
      %p210 = scmp.eq.s32.totalorder %s15, 1
      %p211 = por %p209, %p210
      %p212 = scmp.ne.s32.totalorder %s204, %s207
      %p213 = scmp.eq.s32.totalorder %s15, 0
      %p214 = por %p212, %p213
      %p215 = scmp.ne.s32.totalorder %s204, %s207
      %p216 = scmp.eq.s32.totalorder %s20, 1
      %p217 = por %p215, %p216
      %p218 = scmp.ne.s32.totalorder %s207, %s208
      %p219 = scmp.eq.s32.totalorder %s20, 0
      %p220 = por %p218, %p219
      %p221 = scmp.ne.s32.totalorder %s207, %s208
      %p222 = scmp.eq.s32.totalorder %s21, 1
      %p223 = por %p221, %p222
      %p225 = scmp.ne.s32.totalorder %s208, %s224
      %p226 = scmp.eq.s32.totalorder %s21, 0
      %p227 = por %p225, %p226
      %p228 = scmp.le.s32.totalorder 1, %s15
      %p229 = scmp.lt.s32.totalorder %s15, 3
      %p230 = pnand %p228, %p229
      %p231 = pneg %p230
      // Predicated region
      $region9: #{score_lm_forward.17} parent=5 // pred_check
        _
      $region10: #{score_lm_forward.17} parent=5 // pred_check_branch
        %233 = sbr.rel (%p230) target = $region12
      $region11: #{score_lm_forward.17} parent=5 // pred_region
        %s234 = ssub.s32 %s15, 1
        // Predicated region
        $region13: #{score_lm_forward.17} parent=11 // pred_check
          %p235 = pneg %p140
        $region14: #{score_lm_forward.17} parent=11 // pred_check_branch
          %237 = sbr.rel (%p235) target = $region16
        $region15: #{score_lm_forward.17} parent=11 // pred_region
          %p238 = scmp.lt.s32.totalorder %s27, 0
          %s239 = scalar_select %p238, %s27, 0
          %s240 = smul.addr %s239, 4
          %s241 = scalar_lea.vmem %s3, %s240
        $region16: #{score_lm_forward.17} parent=11 // pred_fallthru
          _
        // Predicated region
        $region17: #{score_lm_forward.17} parent=11 // pred_check
          %p242 = pneg %p166
        $region18: #{score_lm_forward.17} parent=11 // pred_check_branch
          %244 = sbr.rel (%p242) target = $region20
        $region19: #{score_lm_forward.17} parent=11 // pred_region
          %p245 = scmp.lt.s32.totalorder %s27, 0
          %s246 = scalar_select %p245, %s27, 0
          %s247 = smul.addr %s246, 4
          %s248 = scalar_lea.vmem %s4, %s247
        $region20: #{score_lm_forward.17} parent=11 // pred_fallthru
          _
        // Predicated region
        $region21: #{score_lm_forward.17} parent=11 // pred_check
          %p249 = pneg %p192
        $region22: #{score_lm_forward.17} parent=11 // pred_check_branch
          %251 = sbr.rel (%p249) target = $region24
        $region23: #{score_lm_forward.17} parent=11 // pred_region
          %s252 = smul.u32 16, %s27
          %p253 = scmp.lt.s32.totalorder %s252, 15
          %s254 = scalar_select %p253, %s252, 15
          %s255 = smul.addr %s254, 4
          %s256 = scalar_lea.vmem %s5, %s255
          %s257 = smul.u32 16, %s27
        $region24: #{score_lm_forward.17} parent=11 // pred_fallthru
          _
      $region12: #{score_lm_forward.17} parent=5 // pred_fallthru
        _
      %p258 = scmp.lt.s32.totalorder %s15, 2
      // Predicated region
      $region25: #{score_lm_forward.17} parent=5 // pred_check
        %p259 = pneg %p258
      $region26: #{score_lm_forward.17} parent=5 // pred_check_branch
        %261 = sbr.rel (%p259) target = $region28
      $region27: #{score_lm_forward.17} parent=5 // pred_region
        // Predicated region
        $region29: #{score_lm_forward.17} parent=27 // pred_check
          %p262 = pneg %p56
        $region30: #{score_lm_forward.17} parent=27 // pred_check_branch
          %264 = sbr.rel (%p262) target = $region32
        $region31: #{score_lm_forward.17} parent=27 // pred_region
          %p265 = scmp.lt.s32.totalorder %s22, 1
          %s266 = scalar_select %p265, %s22, 1
          %p267 = scmp.lt.s32.totalorder %s23, 0
          %s268 = scalar_select %p267, %s23, 0
          %s269 = sadd.s32 %s268, %s266
          %s270 = smul.addr %s269, 8
          %s271 = scalar_lea.vmem %s0, %s270
        $region32: #{score_lm_forward.17} parent=27 // pred_fallthru
          _
        // Predicated region
        $region33: #{score_lm_forward.17} parent=27 // pred_check
          %p272 = pneg %p82
        $region34: #{score_lm_forward.17} parent=27 // pred_check_branch
          %274 = sbr.rel (%p272) target = $region36
        $region35: #{score_lm_forward.17} parent=27 // pred_region
          %p275 = scmp.lt.s32.totalorder %s22, 1
          %s276 = scalar_select %p275, %s22, 1
          %s277 = scalar_lea.vmem %s1, %s276
        $region36: #{score_lm_forward.17} parent=27 // pred_fallthru
          _
        // Predicated region
        $region37: #{score_lm_forward.17} parent=27 // pred_check
          %p278 = pneg %p108
        $region38: #{score_lm_forward.17} parent=27 // pred_check_branch
          %280 = sbr.rel (%p278) target = $region40
        $region39: #{score_lm_forward.17} parent=27 // pred_region
          %p281 = scmp.lt.s32.totalorder %s22, 1
          %s282 = scalar_select %p281, %s22, 1
          %s283 = scalar_lea.vmem %s2, %s282
        $region40: #{score_lm_forward.17} parent=27 // pred_fallthru
          _
      $region28: #{score_lm_forward.17} parent=5 // pred_fallthru
        _
      %p284 = scmp.le.s32.totalorder 1, %s15
      %p285 = scmp.lt.s32.totalorder %s15, 3
      %p286 = pnand %p284, %p285
      %p287 = pneg %p286
      // Predicated region
      $region41: #{score_lm_forward.17} parent=5 // pred_check
        _
      $region42: #{score_lm_forward.17} parent=5 // pred_check_branch
        %289 = sbr.rel (%p286) target = $region44
      $region43: #{score_lm_forward.17} parent=5 // pred_region
        %s290 = ssub.s32 %s15, 1
        %p291 = scmp.lt.s32.totalorder %s25, 1
        %s292 = scalar_select %p291, %s25, 1
        %p293 = scmp.lt.s32.totalorder %s26, 0
        %s294 = scalar_select %p293, %s26, 0
        %s295 = sadd.s32 %s294, %s292
        %s296 = smul.addr %s295, 8
        %s297 = scalar_lea.vmem %s0, %s296
        %p298 = pneg %p62
        %p299 = pneg %p59
        %p300 = scmp.lt.s32.totalorder %s25, 1
        %s301 = scalar_select %p300, %s25, 1
        %s302 = scalar_lea.vmem %s1, %s301
        %p303 = pneg %p88
        %p304 = pneg %p85
        %p305 = scmp.lt.s32.totalorder %s25, 1
        %s306 = scalar_select %p305, %s25, 1
        %s307 = scalar_lea.vmem %s2, %s306
        %p308 = pneg %p114
        %p309 = pneg %p111
        %p310 = scmp.lt.s32.totalorder %s27, 0
        %s311 = scalar_select %p310, %s27, 0
        %s312 = smul.addr %s311, 4
        %s313 = scalar_lea.vmem %s3, %s312
        %p314 = pneg %p140
        %p315 = pneg %p137
        %p316 = scmp.lt.s32.totalorder %s27, 0
        %s317 = scalar_select %p316, %s27, 0
        %s318 = smul.addr %s317, 4
        %s319 = scalar_lea.vmem %s4, %s318
        %p320 = pneg %p166
        %p321 = pneg %p163
        %s322 = smul.u32 16, %s27
        %p323 = scmp.lt.s32.totalorder %s322, 15
        %s324 = scalar_select %p323, %s322, 15
        %s325 = smul.addr %s324, 4
        %s326 = scalar_lea.vmem %s5, %s325
        %p327 = pneg %p192
        %p328 = pneg %p189
        %p329 = pneg %p220
        %p330 = pneg %p217
        %s331 = sand.u32 %s207, 1
        %s332 = scalar_lea.sflag [#allocation5], %s331
        %s333 = sand.u32 %s207, 1
        %s334 = smul.addr %s333, 8
        %s335 = scalar_lea.vmem [#allocation4], %s334
        %p336 = scmp.lt.s32.totalorder %s25, 1
        %s337 = scalar_select %p336, %s25, 1
        %p338 = scmp.lt.s32.totalorder %s26, 0
        %s339 = scalar_select %p338, %s26, 0
        %s340 = sadd.s32 %s339, %s337
        %s341 = smul.addr %s340, 8
        %s342 = scalar_lea.vmem %s0, %s341
        %p343 = scmp.lt.s32.totalorder %s25, 1
        %s344 = scalar_select %p343, %s25, 1
        %s345 = scalar_lea.vmem %s1, %s344
        %p346 = scmp.lt.s32.totalorder %s25, 1
        %s347 = scalar_select %p346, %s25, 1
        %s348 = scalar_lea.vmem %s2, %s347
        %p349 = scmp.lt.s32.totalorder %s27, 0
        %s350 = scalar_select %p349, %s27, 0
        %s351 = smul.addr %s350, 4
        %s352 = scalar_lea.vmem %s3, %s351
        %p353 = scmp.lt.s32.totalorder %s27, 0
        %s354 = scalar_select %p353, %s27, 0
        %s355 = smul.addr %s354, 4
        %s356 = scalar_lea.vmem %s4, %s355
        %s357 = smul.u32 16, %s27
        %p358 = scmp.lt.s32.totalorder %s357, 15
        %s359 = scalar_select %p358, %s357, 15
        %s360 = smul.addr %s359, 4
        %s361 = scalar_lea.vmem %s5, %s360
        %s362 = smul.u32 16, %s27
        %p364 = scmp.eq.s32.totalorder %s27, 0
        // Predicated region
        $region45: #{score_lm_forward.17} parent=43 // pred_check
          %p365 = pneg %p364
        $region46: #{score_lm_forward.17} parent=43 // pred_check_branch
          %367 = sbr.rel (%p365) target = $region48
        $region47: #{score_lm_forward.17} parent=43 // pred_region
          %v368 = vld [vmem:[%s342] sm:$0xff]
          %vm369 = vcmask 261120
          %v370 = vsel %vm369, %v368, 0.0
          %371 = vadd.xlane.f32.xlu0 %v370
          %v372 = vpop.xlane.xlu0 %371
          %v373 = vrcp.pop 32.0
          %v374 = vmul.f32 %v372, %v373
          %v375 = vsub.f32 %v368, %v374
          %v376 = vmul.f32 %v375, %v375
          %v377 = vsel %vm369, %v376, 0.0
          %378 = vadd.xlane.f32.xlu0 %v377
          %v379 = vpop.xlane.xlu0 %378
          %v380 = vmul.f32 %v379, %v373
          %v381 = vadd.f32 %v380, 1e-05
          %v382 = vrsqrt.pop %v381
          %v383 = vmul.f32 %v375, %v382
          %v384 = vld [vmem:[%s345] sm:$0x1]
          %v386 = vlaneseq
          %v387 = vshrl.u32 %v386, 7
          %v388 = vsub.s32 0, %v387
          %v389 = vrot.slane %v384, %v388
          %v391 = vmul.f32 %v383, %v389
          %v392 = vld [vmem:[%s348] sm:$0x1]
          %v394 = vlaneseq
          %v395 = vshrl.u32 %v394, 7
          %v396 = vsub.s32 0, %v395
          %v397 = vrot.slane %v392, %v396
          %v399 = vadd.f32 %v391, %v397
          %v400 = vpack.c.bf16 %v399, %v399
          %vm401 = vcmask 257024
          %402 = vst.msk [vmem:[#allocation2] sm:$0xf] %vm401, %v400
          %403 = vst.msk [vmem:[#allocation3] sm:$0xff] %vm369, 0.0
        $region48: #{score_lm_forward.17} parent=43 // pred_fallthru
          _
        %v404 = vld [vmem:[#allocation2] sm:$0xf]
        %v405 = vld [vmem:[%s352] sm:$0xf]
        %v406 = vld [vmem:[%s352 + $0x4] sm:$0xf]
        %v407 = vld [vmem:[%s352 + $0x8] sm:$0xf]
        %v408 = vld [vmem:[%s352 + $0xc] sm:$0xf]
        %v413 = vunpack.c.l.b16 %v405
        %v414 = vunpack.c.l.b16 %v406
        %v415 = vunpack.c.l.b16 %v407
        %v416 = vunpack.c.l.b16 %v408
        %v417 = vpack.c.b16 %v414, %v413
        %v418 = vpack.c.b16 %v416, %v415
        %vm421 = vcmask 261120
        %v423 = vsel %vm421, %v404, 0
        %425 = vmatprep.subr.bf16.mxu0 0
        %426 = vmatpush1.bf16.msra.mxu0 %v417
        %427 = vmatprep.subr.bf16.mxu0 0
        %428 = vmatpush1.bf16.msra.mxu0 %v418
        %429 = vmatprep.subr.bf16.mxu0 0
        %430 = vmatpush1.bf16.msra.mxu0 0
        %431 = vmatprep.subr.bf16.mxu0 0
        %432 = vmatpush1.bf16.msra.mxu0 0
        %433 = vmatprep.subr.bf16.mxu0 0
        %434 = vmatpush1.bf16.msra.mxu0 0
        %435 = vmatprep.subr.bf16.mxu0 0
        %436 = vmatpush1.bf16.msra.mxu0 0
        %437 = vmatprep.subr.bf16.mxu0 0
        %438 = vmatpush1.bf16.msra.mxu0 0
        %439 = vmatprep.subr.bf16.mxu0 0
        %440 = vmatpush1.bf16.msra.mxu0 0
        %441 = vmatprep.subr.bf16.mxu0 0
        %442 = vmatpush1.bf16.msra.mxu0 0
        %443 = vmatprep.subr.bf16.mxu0 0
        %444 = vmatpush1.bf16.msra.mxu0 0
        %445 = vmatprep.subr.bf16.mxu0 0
        %446 = vmatpush1.bf16.msra.mxu0 0
        %447 = vmatprep.subr.bf16.mxu0 0
        %448 = vmatpush1.bf16.msra.mxu0 0
        %449 = vmatprep.subr.bf16.mxu0 0
        %450 = vmatpush1.bf16.msra.mxu0 0
        %451 = vmatprep.subr.bf16.mxu0 0
        %452 = vmatpush1.bf16.msra.mxu0 0
        %453 = vmatprep.subr.bf16.mxu0 0
        %454 = vmatpush1.bf16.msra.mxu0 0
        %455 = vmatprep.subr.bf16.mxu0 0
        %456 = vmatpush1.bf16.msra.mxu0 0
        %457 = vmatprep.mubr.bf16.mxu0 0
        %458 = vmatmul.mubr.bf16.gmra.mrb[0].mxu0 %v423
        %v459 = vpop.f32.mrb[0].mxu0
        %v460 = vadd.f32 0.0, %v459
        %v461 = vpop.f32.mrb[0].mxu0
        %v462 = vpop.f32.mrb[0].mxu0
        %v463 = vpop.f32.mrb[0].mxu0
        %464 = vdwg.mxu0
        %v465 = vld [vmem:[%s356] sm:$0xf]
        %v466 = vld [vmem:[%s356 + $0x4] sm:$0xf]
        %v467 = vld [vmem:[%s356 + $0x8] sm:$0xf]
        %v468 = vld [vmem:[%s356 + $0xc] sm:$0xf]
        %v473 = vunpack.c.l.b16 %v465
        %v474 = vunpack.c.l.b16 %v466
        %v475 = vunpack.c.l.b16 %v467
        %v476 = vunpack.c.l.b16 %v468
        %v477 = vpack.c.b16 %v474, %v473
        %v478 = vpack.c.b16 %v476, %v475
        %481 = vmatprep.subr.bf16.mxu0 0
        %482 = vmatpush1.bf16.msra.mxu0 %v477
        %483 = vmatprep.subr.bf16.mxu0 0
        %484 = vmatpush1.bf16.msra.mxu0 %v478
        %485 = vmatprep.subr.bf16.mxu0 0
        %486 = vmatpush1.bf16.msra.mxu0 0
        %487 = vmatprep.subr.bf16.mxu0 0
        %488 = vmatpush1.bf16.msra.mxu0 0
        %489 = vmatprep.subr.bf16.mxu0 0
        %490 = vmatpush1.bf16.msra.mxu0 0
        %491 = vmatprep.subr.bf16.mxu0 0
        %492 = vmatpush1.bf16.msra.mxu0 0
        %493 = vmatprep.subr.bf16.mxu0 0
        %494 = vmatpush1.bf16.msra.mxu0 0
        %495 = vmatprep.subr.bf16.mxu0 0
        %496 = vmatpush1.bf16.msra.mxu0 0
        %497 = vmatprep.subr.bf16.mxu0 0
        %498 = vmatpush1.bf16.msra.mxu0 0
        %499 = vmatprep.subr.bf16.mxu0 0
        %500 = vmatpush1.bf16.msra.mxu0 0
        %501 = vmatprep.subr.bf16.mxu0 0
        %502 = vmatpush1.bf16.msra.mxu0 0
        %503 = vmatprep.subr.bf16.mxu0 0
        %504 = vmatpush1.bf16.msra.mxu0 0
        %505 = vmatprep.subr.bf16.mxu0 0
        %506 = vmatpush1.bf16.msra.mxu0 0
        %507 = vmatprep.subr.bf16.mxu0 0
        %508 = vmatpush1.bf16.msra.mxu0 0
        %509 = vmatprep.subr.bf16.mxu0 0
        %510 = vmatpush1.bf16.msra.mxu0 0
        %511 = vmatprep.subr.bf16.mxu0 0
        %512 = vmatpush1.bf16.msra.mxu0 0
        %513 = vmatprep.mubr.bf16.mxu0 0
        %514 = vmatmul.mubr.bf16.gmra.mrb[0].mxu0 %v423
        %v515 = vpop.f32.mrb[0].mxu0
        %v516 = vadd.f32 0.0, %v515
        %v517 = vpop.f32.mrb[0].mxu0
        %v518 = vpop.f32.mrb[0].mxu0
        %v519 = vpop.f32.mrb[0].mxu0
        %520 = vdwg.mxu0
        %v521 = vxor.u32 %v460, 2147483648
        %v522 = vmul.f32 %v521, 1.442695
        %v523 = vpow.pop %v522
        %v524 = vadd.f32 %v523, 1.0
        %v525 = vrcp.pop %v524
        %v526 = vmul.f32 1.0, %v525
        %v527 = vmul.f32 %v460, %v526
        %v528 = vmul.f32 %v527, %v516
        %v529 = vld [vmem:[#allocation3] sm:$0xff]
        %v530 = vpack.c.bf16 %v528, %v528
        %v531 = vld [vmem:[%s361] sm:$0xf]
        %v532 = vld [vmem:[%s361 + $0x4] sm:$0xf]
        %v533 = vld [vmem:[%s361 + $0x8] sm:$0xf]
        %v534 = vld [vmem:[%s361 + $0xc] sm:$0xf]
        %v535 = vld [vmem:[%s361 + $0x10] sm:$0xf]
        %v536 = vld [vmem:[%s361 + $0x14] sm:$0xf]
        %v537 = vld [vmem:[%s361 + $0x18] sm:$0xf]
        %v538 = vld [vmem:[%s361 + $0x1c] sm:$0xf]
        %v539 = vld [vmem:[%s361 + $0x20] sm:$0xf]
        %v540 = vld [vmem:[%s361 + $0x24] sm:$0xf]
        %v541 = vld [vmem:[%s361 + $0x28] sm:$0xf]
        %v542 = vld [vmem:[%s361 + $0x2c] sm:$0xf]
        %v543 = vld [vmem:[%s361 + $0x30] sm:$0xf]
        %v544 = vld [vmem:[%s361 + $0x34] sm:$0xf]
        %v545 = vld [vmem:[%s361 + $0x38] sm:$0xf]
        %v546 = vld [vmem:[%s361 + $0x3c] sm:$0xf]
        %v563 = vunpack.c.l.b16 %v531
        %v564 = vunpack.c.l.b16 %v532
        %v565 = vunpack.c.l.b16 %v533
        %v566 = vunpack.c.l.b16 %v534
        %v567 = vunpack.c.l.b16 %v535
        %v568 = vunpack.c.l.b16 %v536
        %v569 = vunpack.c.l.b16 %v537
        %v570 = vunpack.c.l.b16 %v538
        %v571 = vunpack.c.l.b16 %v539
        %v572 = vunpack.c.l.b16 %v540
        %v573 = vunpack.c.l.b16 %v541
        %v574 = vunpack.c.l.b16 %v542
        %v575 = vunpack.c.l.b16 %v543
        %v576 = vunpack.c.l.b16 %v544
        %v577 = vunpack.c.l.b16 %v545
        %v578 = vunpack.c.l.b16 %v546
        %v579 = vpack.c.b16 %v564, %v563
        %v580 = vpack.c.b16 %v566, %v565
        %v581 = vpack.c.b16 %v568, %v567
        %v582 = vpack.c.b16 %v570, %v569
        %v583 = vpack.c.b16 %v572, %v571
        %v584 = vpack.c.b16 %v574, %v573
        %v585 = vpack.c.b16 %v576, %v575
        %v586 = vpack.c.b16 %v578, %v577
        %595 = vmatprep.subr.bf16.mxu0 0
        %596 = vmatpush1.bf16.msra.mxu0 %v579
        %597 = vmatprep.subr.bf16.mxu0 0
        %598 = vmatpush1.bf16.msra.mxu0 %v580
        %599 = vmatprep.subr.bf16.mxu0 0
        %600 = vmatpush1.bf16.msra.mxu0 %v581
        %601 = vmatprep.subr.bf16.mxu0 0
        %602 = vmatpush1.bf16.msra.mxu0 %v582
        %603 = vmatprep.subr.bf16.mxu0 0
        %604 = vmatpush1.bf16.msra.mxu0 %v583
        %605 = vmatprep.subr.bf16.mxu0 0
        %606 = vmatpush1.bf16.msra.mxu0 %v584
        %607 = vmatprep.subr.bf16.mxu0 0
        %608 = vmatpush1.bf16.msra.mxu0 %v585
        %609 = vmatprep.subr.bf16.mxu0 0
        %610 = vmatpush1.bf16.msra.mxu0 %v586
        %611 = vmatprep.subr.bf16.mxu0 0
        %612 = vmatpush1.bf16.msra.mxu0 0
        %613 = vmatprep.subr.bf16.mxu0 0
        %614 = vmatpush1.bf16.msra.mxu0 0
        %615 = vmatprep.subr.bf16.mxu0 0
        %616 = vmatpush1.bf16.msra.mxu0 0
        %617 = vmatprep.subr.bf16.mxu0 0
        %618 = vmatpush1.bf16.msra.mxu0 0
        %619 = vmatprep.subr.bf16.mxu0 0
        %620 = vmatpush1.bf16.msra.mxu0 0
        %621 = vmatprep.subr.bf16.mxu0 0
        %622 = vmatpush1.bf16.msra.mxu0 0
        %623 = vmatprep.subr.bf16.mxu0 0
        %624 = vmatpush1.bf16.msra.mxu0 0
        %625 = vmatprep.subr.bf16.mxu0 0
        %626 = vmatpush1.bf16.msra.mxu0 0
        %627 = vmatprep.mubr.bf16.mxu0 0
        %628 = vmatmul.mubr.bf16.gmra.mrb[0].mxu0 %v530
        %v629 = vpop.f32.mrb[0].mxu0
        %v630 = vadd.f32 0.0, %v629
        %v631 = vpop.f32.mrb[0].mxu0
        %v632 = vpop.f32.mrb[0].mxu0
        %v633 = vpop.f32.mrb[0].mxu0
        %634 = vdwg.mxu0
        %v635 = vadd.f32 %v529, %v630
        %636 = vst.msk [vmem:[#allocation3] sm:$0xff] %vm421, %v635
        // Predicated region
        $region49: #{score_lm_forward.17} parent=43 // pred_check
          %p637 = pneg %p364
        $region50: #{score_lm_forward.17} parent=43 // pred_check_branch
          %639 = sbr.rel (%p637) target = $region52
        $region51: #{score_lm_forward.17} parent=43 // pred_region
          %v640 = vld [vmem:[%s342] sm:$0xff]
          %v641 = vld [vmem:[#allocation3] sm:$0xff]
          %v642 = vadd.f32 %v640, %v641
          %643 = vst.msk [vmem:[%s335] sm:$0xff] %vm421, %v642
        $region52: #{score_lm_forward.17} parent=43 // pred_fallthru
          _
        %s644 = sand.u32 %s207, 1
        %s645 = scalar_lea.sflag [#allocation5], %s644
        %s646 = sand.u32 %s207, 1
        %s647 = smul.addr %s646, 8
        %s648 = scalar_lea.vmem [#allocation4], %s647
        // Predicated region
        $region53: #{score_lm_forward.17} parent=43 // pred_check
          %p649 = pneg %p217
        $region54: #{score_lm_forward.17} parent=43 // pred_check_branch
          %651 = sbr.rel (%p649) target = $region56
        $region55: #{score_lm_forward.17} parent=43 // pred_region
          %s653 = ssub.s32 128, 128
          %654 = vsyncadd %s645, %s653
          %s655 = sadd.s32 %s26, %s25
          %s656 = smul.addr %s655, 128
          %s657 = scalar_lea.hbm %s6, %s656
          %s659 = sshll.u32 %s648, 4
          %s660 = int_to_ptr.vmem [resolvable:$true] %s659
          %662 = dma.vmem_to_hbm [thread:$0]  %s660, 128, %s657, %s645
        $region56: #{score_lm_forward.17} parent=43 // pred_fallthru
          _
      $region44: #{score_lm_forward.17} parent=5 // pred_fallthru
        _
      %p663 = scmp.le.s32.totalorder 2, %s15
      // Predicated region
      $region57: #{score_lm_forward.17} parent=5 // pred_check
        %p664 = pneg %p663
      $region58: #{score_lm_forward.17} parent=5 // pred_check_branch
        %666 = sbr.rel (%p664) target = $region60
      $region59: #{score_lm_forward.17} parent=5 // pred_region
        %s667 = ssub.s32 %s15, 2
        // Predicated region
        $region61: #{score_lm_forward.17} parent=59 // pred_check
          %p668 = pneg %p223
        $region62: #{score_lm_forward.17} parent=59 // pred_check_branch
          %670 = sbr.rel (%p668) target = $region64
        $region63: #{score_lm_forward.17} parent=59 // pred_region
          %s671 = sand.u32 %s208, 1
          %s672 = scalar_lea.sflag [#allocation5], %s671
          %s673 = sand.u32 %s208, 1
          %s674 = smul.addr %s673, 8
          %s675 = scalar_lea.vmem [#allocation4], %s674
          %676 = dma.done %s672, 128
        $region64: #{score_lm_forward.17} parent=59 // pred_fallthru
          _
      $region60: #{score_lm_forward.17} parent=5 // pred_fallthru
        _
    $region6: #{score_lm_forward.17} parent=1 // loop_footer
      %s19 = sadd.s32 1, %s15
    $region7: #{score_lm_forward.17} parent=1 // loop_footer_branch
      %14 = sbr.rel target = $region3
    $region8: #{score_lm_forward.17} parent=1 // loop_exit
      _
    %677 = vsyncpa [#allocation5], 1
    %s678 = scalar_lea.sflag [#allocation5], 1
    %679 = vsyncpa %s678, 1

</llo_original>
